<compile_context>
chip_gen: v7x
topology: tpu7x:2x2x1
jax: 0.10.0
libtpu: 0.0.40
codegen_flags: <defaults>
</compile_context>

<pallas_src>
import functools

import jax
import jax.numpy as jnp
from jax import lax
from jax.experimental import pallas as pl
from jax.experimental.pallas import tpu as pltpu


# ----------------------------------------------------------------------------
# helpers
# ----------------------------------------------------------------------------
def _pick_hw_tile(hw, candidates=(8192, 4096, 2048, 1024, 512, 256, 128)):
    """Largest lane-aligned tile that divides HW (falls back to the full extent)."""
    for c in candidates:
        if hw % c == 0:
            return c
    return hw


def _padded_block_bytes(shape, dtype=jnp.float32):
    """VMEM footprint of one block after (8, 128) tiling of the minor dims."""
    s = [int(d) for d in shape]
    while len(s) < 2:
        s = [1] + s
    lanes = -(-s[-1] // 128) * 128
    sublanes = -(-s[-2] // 8) * 8
    outer = 1
    for d in s[:-2]:
        outer *= d
    return outer * sublanes * lanes * jnp.dtype(dtype).itemsize


def _vmem_limit(block_shapes, scratch_bytes=0, dtype=jnp.float32,
                slack=4 * 1024 * 1024):
    """Double-buffered pipelined blocks + scratch + slack headroom."""
    pipelined = sum(_padded_block_bytes(s, dtype) for s in block_shapes)
    return int(2 * pipelined + scratch_bytes + slack)


# ----------------------------------------------------------------------------
# Kernel 1: 1x1 convolution in channel-major layout (per-pixel matmul, lane = HW)
# ----------------------------------------------------------------------------
def _conv1x1_kernel(x_ref, w_ref, b_ref, o_ref, *, mxu_dtype):
    # x_ref: (1, Cin, tHW)   w_ref: (Cout, Cin)   b_ref: (Cout, 1)
    acc = jnp.dot(w_ref[...].astype(mxu_dtype), x_ref[0].astype(mxu_dtype),
                  preferred_element_type=jnp.float32)
    o_ref[0] = (acc + b_ref[...]).astype(o_ref.dtype)


def conv1x1_cm(x, w, b, *, mxu_dtype=jnp.float32):
    """(B, Cin, HW) x (Cout, Cin) -> (B, Cout, HW), channel-major."""
    bsz, cin, hw = x.shape
    cout = w.shape[0]
    t_hw = _pick_hw_tile(hw)
    grid = (bsz, hw // t_hw)

    blocks = [(1, cin, t_hw), (cout, cin), (cout, 1), (1, cout, t_hw)]
    cost = pl.CostEstimate(
        flops=int(2 * bsz * hw * cin * cout),
        transcendentals=0,
        bytes_accessed=int(4 * (bsz * hw * (cin + cout) + cin * cout + cout)))

    return pl.pallas_call(
        functools.partial(_conv1x1_kernel, mxu_dtype=mxu_dtype),
        out_shape=jax.ShapeDtypeStruct((bsz, cout, hw), x.dtype),
        grid_spec=pltpu.PrefetchScalarGridSpec(
            num_scalar_prefetch=0,
            grid=grid,
            in_specs=[
                pl.BlockSpec((1, cin, t_hw), lambda i, j: (i, 0, j)),
                pl.BlockSpec((cout, cin), lambda i, j: (0, 0)),
                pl.BlockSpec((cout, 1), lambda i, j: (0, 0)),
            ],
            out_specs=pl.BlockSpec((1, cout, t_hw), lambda i, j: (i, 0, j)),
        ),
        compiler_params=pltpu.CompilerParams(
            dimension_semantics=("parallel", "parallel"),
            vmem_limit_bytes=_vmem_limit(blocks)),
        cost_estimate=cost,
    )(x, w, b.reshape(cout, 1))


# ----------------------------------------------------------------------------
# Kernel 2: depthwise 3x3 conv (padding=1, stride=1, groups=C), channel-major.
#           Halo is built inside a VMEM scratch -> no HBM jnp.pad round trip.
# ----------------------------------------------------------------------------
def _dwconv3x3_kernel(x_ref, w_ref, b_ref, o_ref, xp_ref):
    # x_ref: (1, Cq, H, W)  w_ref: (3, 3, Cq, 1, 1)  b_ref: (Cq, 1, 1)
    # xp_ref: VMEM scratch (Cq, H+2, W+2) holding the zero-padded tile.
    cq, hh, ww = o_ref.shape[1], o_ref.shape[2], o_ref.shape[3]
    xp_ref[...] = jnp.zeros_like(xp_ref)
    xp_ref[:, 1:hh + 1, 1:ww + 1] = x_ref[0].astype(xp_ref.dtype)
    acc = jnp.zeros((cq, hh, ww), jnp.float32)
    for dy in range(3):
        for dx in range(3):
            acc = acc + xp_ref[:, dy:dy + hh, dx:dx + ww] * w_ref[dy, dx]
    o_ref[0] = (acc + b_ref[...]).astype(o_ref.dtype)


def dwconv3x3_cm(x, w, b):
    """Depthwise 3x3 conv on (B, Cq, H, W); w: (3, 3, Cq), b: (Cq,)."""
    bsz, cq, h, ww = x.shape
    # Tap weights shaped (3, 3, Cq, 1, 1) so they broadcast against (Cq, H, W)
    # without any in-kernel relayout (small VMEM padding cost, fine at these sizes).
    w5 = w.reshape(3, 3, cq, 1, 1)
    b3 = b.reshape(cq, 1, 1)
    scratch_bytes = _padded_block_bytes((cq, h + 2, ww + 2))
    blocks = [(1, cq, h, ww), (3, 3, cq, 1, 1), (cq, 1, 1), (1, cq, h, ww)]
    cost = pl.CostEstimate(
        flops=int(2 * 9 * bsz * cq * h * ww),
        transcendentals=0,
        bytes_accessed=int(4 * (2 * bsz * cq * h * ww + 10 * cq)))

    # TODO(synk): for large H*W, tile over rows with a 2-row halo instead of one
    # whole image per grid step (needed to stay under v7x's 64 MiB VMEM).
    return pl.pallas_call(
        _dwconv3x3_kernel,
        out_shape=jax.ShapeDtypeStruct((bsz, cq, h, ww), x.dtype),
        grid_spec=pltpu.PrefetchScalarGridSpec(
            num_scalar_prefetch=0,
            grid=(bsz,),
            in_specs=[
                pl.BlockSpec((1, cq, h, ww), lambda i: (i, 0, 0, 0)),
                pl.BlockSpec((3, 3, cq, 1, 1), lambda i: (0, 0, 0, 0, 0)),
                pl.BlockSpec((cq, 1, 1), lambda i: (0, 0, 0)),
            ],
            out_specs=pl.BlockSpec((1, cq, h, ww), lambda i: (i, 0, 0, 0)),
            scratch_shapes=[pltpu.VMEM((cq, h + 2, ww + 2), jnp.float32)],
        ),
        compiler_params=pltpu.CompilerParams(
            dimension_semantics=("parallel",),
            vmem_limit_bytes=_vmem_limit(blocks, scratch_bytes)),
        cost_estimate=cost,
    )(x, w5, b3)


# ----------------------------------------------------------------------------
# Kernel 3: MDTA attention core over all heads + fused project_out 1x1 conv.
#   L2-normalize q,k over HW, attn = softmax((q k^T)*temp), out = W_proj(attn v)+b
# ----------------------------------------------------------------------------
def _mdta_proj_kernel(temp_ref, qkv_ref, wp_ref, bp_ref, o_ref, acc_ref, *,
                      num_heads, mxu_dtype):
    # temp_ref: SMEM (num_heads,)   qkv_ref: (1, 3C, HW)
    # wp_ref: (C, C)   bp_ref: (C, 1)   o_ref: (1, C, HW)   acc_ref: VMEM (C, HW) f32
    c = o_ref.shape[1]
    ch = c // num_heads
    for hd in range(num_heads):  # static unroll over heads (heads folded per batch)
        q = qkv_ref[0, hd * ch:(hd + 1) * ch, :].astype(jnp.float32)
        k = qkv_ref[0, c + hd * ch:c + (hd + 1) * ch, :].astype(jnp.float32)
        v = qkv_ref[0, 2 * c + hd * ch:2 * c + (hd + 1) * ch, :]

        # F.normalize(dim=-1): x * rsqrt(max(sum(x^2), eps^2))  -- rsqrt on the EUP.
        eps2 = 1e-24
        qn = q * lax.rsqrt(jnp.maximum(jnp.sum(q * q, axis=-1, keepdims=True), eps2))
        kn = k * lax.rsqrt(jnp.maximum(jnp.sum(k * k, axis=-1, keepdims=True), eps2))

        # attn = qn @ kn^T without materializing the transpose: contract HW directly.
        attn = lax.dot_general(
            qn.astype(mxu_dtype), kn.astype(mxu_dtype),
            (((1,), (1,)), ((), ())), preferred_element_type=jnp.float32)
        attn = attn * temp_ref[hd]
        attn = attn - jnp.max(attn, axis=-1, keepdims=True)
        e = jnp.exp(attn)
        p = e * pl.reciprocal(jnp.sum(e, axis=-1, keepdims=True), approx=True)

        out_h = lax.dot_general(
            p.astype(mxu_dtype), v.astype(mxu_dtype),
            (((1,), (0,)), ((), ())), preferred_element_type=jnp.float32)
        acc_ref[hd * ch:(hd + 1) * ch, :] = out_h

    # Fused project_out (1x1 conv) -- attention result never leaves VMEM.
    proj = jnp.dot(wp_ref[...].astype(mxu_dtype), acc_ref[...].astype(mxu_dtype),
                   preferred_element_type=jnp.float32)
    o_ref[0] = (proj + bp_ref[...]).astype(o_ref.dtype)


def mdta_attn_proj(qkv, temperature, w_proj, b_proj, num_heads, *,
                   mxu_dtype=jnp.float32):
    """qkv: (B, 3C, HW), temperature: (nh,), w_proj: (C, C), b_proj: (C,) -> (B, C, HW)."""
    bsz, c3, hw = qkv.shape
    c = c3 // 3
    ch = c // num_heads
    scratch_bytes = _padded_block_bytes((c, hw))
    blocks = [(1, c3, hw), (c, c), (c, 1), (1, c, hw)]
    cost = pl.CostEstimate(
        flops=int(bsz * (num_heads * 4 * ch * ch * hw + 2 * c * c * hw + 8 * c * hw)),
        transcendentals=int(bsz * num_heads * (ch * ch + 3 * ch)),
        bytes_accessed=int(4 * (bsz * (c3 + c) * hw + c * c + c + num_heads)))

    # TODO(synk): for very large HW (e.g. 256x256 images) tile the HW axis with an
    # online accumulation of q.k^T / sum-of-squares instead of (3C, HW) per batch.
    return pl.pallas_call(
        functools.partial(_mdta_proj_kernel, num_heads=num_heads,
                          mxu_dtype=mxu_dtype),
        out_shape=jax.ShapeDtypeStruct((bsz, c, hw), qkv.dtype),
        grid_spec=pltpu.PrefetchScalarGridSpec(
            num_scalar_prefetch=0,
            grid=(bsz,),
            in_specs=[
                pl.BlockSpec(memory_space=pltpu.MemorySpace.SMEM),   # temperature
                pl.BlockSpec((1, c3, hw), lambda i: (i, 0, 0)),
                pl.BlockSpec((c, c), lambda i: (0, 0)),
                pl.BlockSpec((c, 1), lambda i: (0, 0)),
            ],
            out_specs=pl.BlockSpec((1, c, hw), lambda i: (i, 0, 0)),
            scratch_shapes=[pltpu.VMEM((c, hw), jnp.float32)],
        ),
        compiler_params=pltpu.CompilerParams(
            dimension_semantics=("parallel",),
            vmem_limit_bytes=_vmem_limit(blocks, scratch_bytes)),
        cost_estimate=cost,
    )(temperature, qkv, w_proj, b_proj.reshape(c, 1))


# ----------------------------------------------------------------------------
# Full forward pass: only free bitcast reshapes in the wrapper, zero transposes.
# ----------------------------------------------------------------------------
@functools.partial(jax.jit, static_argnames=("num_heads", "mxu_dtype"))
def attention_forward(x, params, num_heads, mxu_dtype=jnp.float32):
    # x: (B, C, H, W)  NCHW, like PyTorch.
    b, c, h, w = x.shape
    hw = h * w
    qkv = conv1x1_cm(x.reshape(b, c, hw), params["w_qkv"], params["b_qkv"],
                     mxu_dtype=mxu_dtype)                                # (B, 3C, HW)
    qkv = dwconv3x3_cm(qkv.reshape(b, 3 * c, h, w),
                       params["w_dw"], params["b_dw"])                   # (B, 3C, H, W)
    out = mdta_attn_proj(qkv.reshape(b, 3 * c, hw), params["temperature"],
                         params["w_proj"], params["b_proj"], num_heads,
                         mxu_dtype=mxu_dtype)                            # (B, C, HW)
    return out.reshape(b, c, h, w)


# ----------------------------------------------------------------------------
# Pure-JAX reference (for a correctness check)
# ----------------------------------------------------------------------------
def reference_forward(x, params, num_heads):
    b, c, h, w = x.shape
    ch = c // num_heads
    qkv = jnp.einsum("bchw,dc->bdhw", x, params["w_qkv"]) \
        + params["b_qkv"][None, :, None, None]
    qkv_p = jnp.pad(qkv, ((0, 0), (0, 0), (1, 1), (1, 1)))
    dw = jnp.zeros_like(qkv)
    for dy in range(3):
        for dx in range(3):
            dw = dw + qkv_p[:, :, dy:dy + h, dx:dx + w] * \
                params["w_dw"][dy, dx, :][None, :, None, None]
    dw = dw + params["b_dw"][None, :, None, None]
    q, k, v = jnp.split(dw, 3, axis=1)
    rr = lambda t: t.reshape(b, num_heads, ch, h * w)
    q, k, v = rr(q), rr(k), rr(v)
    qn = q / jnp.maximum(jnp.linalg.norm(q, axis=-1, keepdims=True), 1e-12)
    kn = k / jnp.maximum(jnp.linalg.norm(k, axis=-1, keepdims=True), 1e-12)
    attn = jnp.einsum("bncs,bnds->bncd", qn, kn) * \
        params["temperature"][None, :, None, None]
    attn = jax.nn.softmax(attn, axis=-1)
    out = jnp.einsum("bncd,bnds->bncs", attn, v).reshape(b, c, h, w)
    out = jnp.einsum("bchw,dc->bdhw", out, params["w_proj"]) \
        + params["b_proj"][None, :, None, None]
    return out


if __name__ == "__main__":
    B, dim, H, W = 2, 4, 16, 16
    num_heads = 2

    key = jax.random.PRNGKey(0)
    ks = jax.random.split(key, 7)
    params = {
        # qkv 1x1 conv: torch weight (3C, C, 1, 1) squeezed -> (3C, C)
        "w_qkv": 0.2 * jax.random.normal(ks[0], (3 * dim, dim), jnp.float32),
        "b_qkv": 0.1 * jax.random.normal(ks[1], (3 * dim,), jnp.float32),
        # depthwise 3x3: torch weight (3C, 1, 3, 3) stored as (ky, kx, 3C)
        "w_dw": 0.2 * jax.random.normal(ks[2], (3, 3, 3 * dim), jnp.float32),
        "b_dw": 0.1 * jax.random.normal(ks[3], (3 * dim,), jnp.float32),
        # project_out 1x1 conv: torch weight (C, C, 1, 1) squeezed -> (C, C)
        "w_proj": 0.2 * jax.random.normal(ks[4], (dim, dim), jnp.float32),
        "b_proj": 0.1 * jax.random.normal(ks[5], (dim,), jnp.float32),
        # nn.Parameter(torch.ones(num_heads, 1, 1)) -> flat (num_heads,)
        "temperature": jnp.ones((num_heads,), jnp.float32),
    }

    x = jax.random.normal(ks[6], (B, dim, H, W), jnp.float32)

    out = attention_forward(x, params, num_heads)
    out = jax.block_until_ready(out)

    ref = reference_forward(x, params, num_heads)
    max_err = float(jnp.max(jnp.abs(out - ref)))
    assert out.shape == (B, dim, H, W)
    assert max_err < 5e-2, f"mismatch vs reference: {max_err}"

    # Smoke-test the bf16 MXU path (v6e / v7x); element-wise math stays f32.
    out_bf16 = jax.block_until_ready(
        attention_forward(x, params, num_heads, mxu_dtype=jnp.bfloat16))
    assert out_bf16.shape == (B, dim, H, W)
    assert bool(jnp.all(jnp.isfinite(out_bf16)))

    print("KERNEL_OK")
</pallas_src>

<mosaic_0001>
module attributes {stable_mosaic.version = 11 : i64} {
  func.func @_conv1x1_kernel(%arg0: i32, %arg1: i32, %arg2: memref<1x4x256xf32, #tpu.memory_space<vmem>>, %arg3: memref<12x4xf32, #tpu.memory_space<vmem>>, %arg4: memref<12x1xf32, #tpu.memory_space<vmem>>, %arg5: memref<1x12x256xf32, #tpu.memory_space<vmem>>) attributes {dimension_semantics = [#tpu.dimension_semantics<parallel>, #tpu.dimension_semantics<parallel>], iteration_bounds = array<i64: 2, 1>, scalar_prefetch = 0 : i64, scratch_operands = 0 : i64, tpu.core_type = #tpu.core_type<tc>, window_params = [{transform_indices = @transform_0, window_bounds = array<i64: 1, 4, 256>}, {pipeline_mode = #tpu.pipeline_mode<synchronous>, transform_indices = @transform_1, window_bounds = array<i64: 12, 4>}, {pipeline_mode = #tpu.pipeline_mode<synchronous>, transform_indices = @transform_2, window_bounds = array<i64: 12, 1>}, {transform_indices = @transform_3, window_bounds = array<i64: 1, 12, 256>}]} {
    %c0 = arith.constant 0 : index
    %c0_0 = arith.constant 0 : index
    %0 = vector.load %arg3[%c0, %c0_0] : memref<12x4xf32, #tpu.memory_space<vmem>>, vector<12x4xf32>
    %c0_1 = arith.constant 0 : index
    %c0_2 = arith.constant 0 : index
    %c0_3 = arith.constant 0 : index
    %1 = vector.load %arg2[%c0_1, %c0_2, %c0_3] : memref<1x4x256xf32, #tpu.memory_space<vmem>>, vector<1x4x256xf32>
    %2 = vector.shape_cast %1 : vector<1x4x256xf32> to vector<4x256xf32>
    %cst = arith.constant dense<0.000000e+00> : vector<12x256xf32>
    %3 = tpu.matmul %0, %2, %cst {dimension_numbers = #tpu.dot_dimension_numbers<[1], [0], [0], [1], [0, 0, 1, 1], [], []>} : vector<12x4xf32>, vector<4x256xf32>, vector<12x256xf32> -> vector<12x256xf32>
    %c0_4 = arith.constant 0 : index
    %c0_5 = arith.constant 0 : index
    %4 = vector.load %arg4[%c0_4, %c0_5] : memref<12x1xf32, #tpu.memory_space<vmem>>, vector<12x1xf32>
    %5 = vector.broadcast %4 : vector<12x1xf32> to vector<12x256xf32>
    %6 = arith.addf %3, %5 : vector<12x256xf32>
    %c0_6 = arith.constant 0 : index
    %c0_7 = arith.constant 0 : index
    %c0_8 = arith.constant 0 : index
    %7 = vector.load %arg5[%c0_6, %c0_7, %c0_8] : memref<1x12x256xf32, #tpu.memory_space<vmem>>, vector<1x12x256xf32>
    %8 = vector.shape_cast %7 : vector<1x12x256xf32> to vector<12x256xf32>
    %9 = vector.shape_cast %6 : vector<12x256xf32> to vector<1x12x256xf32>
    tpu.vector_store %arg5[%c0_6, %c0_7, %c0_8], %9 {strides = array<i32>} : memref<1x12x256xf32, #tpu.memory_space<vmem>>, vector<1x12x256xf32>,
    return
  }
  func.func @transform_0(%arg0: i32, %arg1: i32) -> (i32, i32, i32) {
    %c0_i32 = arith.constant 0 : i32
    %c0_i32_0 = arith.constant 0 : i32
    return %arg0, %c0_i32, %arg1 : i32, i32, i32
  }
  func.func @transform_1(%arg0: i32, %arg1: i32) -> (i32, i32) {
    %c0_i32 = arith.constant 0 : i32
    %c0_i32_0 = arith.constant 0 : i32
    %c0_i32_1 = arith.constant 0 : i32
    return %c0_i32, %c0_i32_0 : i32, i32
  }
  func.func @transform_2(%arg0: i32, %arg1: i32) -> (i32, i32) {
    %c0_i32 = arith.constant 0 : i32
    %c0_i32_0 = arith.constant 0 : i32
    %c0_i32_1 = arith.constant 0 : i32
    return %c0_i32, %c0_i32_0 : i32, i32
  }
  func.func @transform_3(%arg0: i32, %arg1: i32) -> (i32, i32, i32) {
    %c0_i32 = arith.constant 0 : i32
    %c0_i32_0 = arith.constant 0 : i32
    return %arg0, %c0_i32, %arg1 : i32, i32, i32
  }
}

module attributes {stable_mosaic.version = 11 : i64} {
  func.func @_dwconv3x3_kernel(%arg0: i32, %arg1: memref<1x12x16x16xf32, #tpu.memory_space<vmem>>, %arg2: memref<3x3x12x1x1xf32, #tpu.memory_space<vmem>>, %arg3: memref<12x1x1xf32, #tpu.memory_space<vmem>>, %arg4: memref<1x12x16x16xf32, #tpu.memory_space<vmem>>, %arg5: memref<12x18x18xf32, #tpu.memory_space<vmem>>) attributes {dimension_semantics = [#tpu.dimension_semantics<parallel>], iteration_bounds = array<i64: 2>, scalar_prefetch = 0 : i64, scratch_operands = 1 : i64, tpu.core_type = #tpu.core_type<tc>, window_params = [{transform_indices = @transform_0, window_bounds = array<i64: 1, 12, 16, 16>}, {pipeline_mode = #tpu.pipeline_mode<synchronous>, transform_indices = @transform_1, window_bounds = array<i64: 3, 3, 12, 1, 1>}, {pipeline_mode = #tpu.pipeline_mode<synchronous>, transform_indices = @transform_2, window_bounds = array<i64: 12, 1, 1>}, {transform_indices = @transform_3, window_bounds = array<i64: 1, 12, 16, 16>}]} {
    %cst = arith.constant 0.000000e+00 : f32
    %0 = vector.broadcast %cst : f32 to vector<12x18x18xf32>
    %c0 = arith.constant 0 : index
    %c0_0 = arith.constant 0 : index
    %c0_1 = arith.constant 0 : index
    %1 = vector.load %arg5[%c0, %c0_0, %c0_1] : memref<12x18x18xf32, #tpu.memory_space<vmem>>, vector<12x18x18xf32>
    tpu.vector_store %arg5[%c0, %c0_0, %c0_1], %0 {strides = array<i32>} : memref<12x18x18xf32, #tpu.memory_space<vmem>>, vector<12x18x18xf32>,
    %c0_2 = arith.constant 0 : index
    %c0_3 = arith.constant 0 : index
    %c0_4 = arith.constant 0 : index
    %c0_5 = arith.constant 0 : index
    %2 = vector.load %arg1[%c0_2, %c0_3, %c0_4, %c0_5] : memref<1x12x16x16xf32, #tpu.memory_space<vmem>>, vector<1x12x16x16xf32>
    %3 = vector.shape_cast %2 : vector<1x12x16x16xf32> to vector<12x16x16xf32>
    %c0_6 = arith.constant 0 : index
    %c1 = arith.constant 1 : index
    %c1_7 = arith.constant 1 : index
    %4 = vector.load %arg5[%c0_6, %c1, %c1_7] : memref<12x18x18xf32, #tpu.memory_space<vmem>>, vector<12x16x16xf32>
    tpu.vector_store %arg5[%c0_6, %c1, %c1_7], %3 {strides = array<i32>} : memref<12x18x18xf32, #tpu.memory_space<vmem>>, vector<12x16x16xf32>,
    %cst_8 = arith.constant 0.000000e+00 : f32
    %5 = vector.broadcast %cst_8 : f32 to vector<12x16x16xf32>
    %c0_9 = arith.constant 0 : index
    %c0_10 = arith.constant 0 : index
    %c0_11 = arith.constant 0 : index
    %6 = vector.load %arg5[%c0_9, %c0_10, %c0_11] : memref<12x18x18xf32, #tpu.memory_space<vmem>>, vector<12x16x16xf32>
    %c0_12 = arith.constant 0 : index
    %c0_13 = arith.constant 0 : index
    %c0_14 = arith.constant 0 : index
    %c0_15 = arith.constant 0 : index
    %c0_16 = arith.constant 0 : index
    %7 = vector.load %arg2[%c0_12, %c0_13, %c0_14, %c0_15, %c0_16] : memref<3x3x12x1x1xf32, #tpu.memory_space<vmem>>, vector<1x1x12x1x1xf32>
    %8 = vector.shape_cast %7 : vector<1x1x12x1x1xf32> to vector<12x1x1xf32>
    %9 = vector.broadcast %8 : vector<12x1x1xf32> to vector<12x16x16xf32>
    %10 = arith.mulf %6, %9 : vector<12x16x16xf32>
    %11 = arith.addf %5, %10 : vector<12x16x16xf32>
    %c0_17 = arith.constant 0 : index
    %c0_18 = arith.constant 0 : index
    %c1_19 = arith.constant 1 : index
    %12 = vector.load %arg5[%c0_17, %c0_18, %c1_19] : memref<12x18x18xf32, #tpu.memory_space<vmem>>, vector<12x16x16xf32>
    %c0_20 = arith.constant 0 : index
    %c1_21 = arith.constant 1 : index
    %c0_22 = arith.constant 0 : index
    %c0_23 = arith.constant 0 : index
    %c0_24 = arith.constant 0 : index
    %13 = vector.load %arg2[%c0_20, %c1_21, %c0_22, %c0_23, %c0_24] : memref<3x3x12x1x1xf32, #tpu.memory_space<vmem>>, vector<1x1x12x1x1xf32>
    %14 = vector.shape_cast %13 : vector<1x1x12x1x1xf32> to vector<12x1x1xf32>
    %15 = vector.broadcast %14 : vector<12x1x1xf32> to vector<12x16x16xf32>
    %16 = arith.mulf %12, %15 : vector<12x16x16xf32>
    %17 = arith.addf %11, %16 : vector<12x16x16xf32>
    %c0_25 = arith.constant 0 : index
    %c0_26 = arith.constant 0 : index
    %c2 = arith.constant 2 : index
    %18 = vector.load %arg5[%c0_25, %c0_26, %c2] : memref<12x18x18xf32, #tpu.memory_space<vmem>>, vector<12x16x16xf32>
    %c0_27 = arith.constant 0 : index
    %c2_28 = arith.constant 2 : index
    %c0_29 = arith.constant 0 : index
    %c0_30 = arith.constant 0 : index
    %c0_31 = arith.constant 0 : index
    %19 = vector.load %arg2[%c0_27, %c2_28, %c0_29, %c0_30, %c0_31] : memref<3x3x12x1x1xf32, #tpu.memory_space<vmem>>, vector<1x1x12x1x1xf32>
    %20 = vector.shape_cast %19 : vector<1x1x12x1x1xf32> to vector<12x1x1xf32>
    %21 = vector.broadcast %20 : vector<12x1x1xf32> to vector<12x16x16xf32>
    %22 = arith.mulf %18, %21 : vector<12x16x16xf32>
    %23 = arith.addf %17, %22 : vector<12x16x16xf32>
    %c0_32 = arith.constant 0 : index
    %c1_33 = arith.constant 1 : index
    %c0_34 = arith.constant 0 : index
    %24 = vector.load %arg5[%c0_32, %c1_33, %c0_34] : memref<12x18x18xf32, #tpu.memory_space<vmem>>, vector<12x16x16xf32>
    %c1_35 = arith.constant 1 : index
    %c0_36 = arith.constant 0 : index
    %c0_37 = arith.constant 0 : index
    %c0_38 = arith.constant 0 : index
    %c0_39 = arith.constant 0 : index
    %25 = vector.load %arg2[%c1_35, %c0_36, %c0_37, %c0_38, %c0_39] : memref<3x3x12x1x1xf32, #tpu.memory_space<vmem>>, vector<1x1x12x1x1xf32>
    %26 = vector.shape_cast %25 : vector<1x1x12x1x1xf32> to vector<12x1x1xf32>
    %27 = vector.broadcast %26 : vector<12x1x1xf32> to vector<12x16x16xf32>
    %28 = arith.mulf %24, %27 : vector<12x16x16xf32>
    %29 = arith.addf %23, %28 : vector<12x16x16xf32>
    %c0_40 = arith.constant 0 : index
    %c1_41 = arith.constant 1 : index
    %c1_42 = arith.constant 1 : index
    %30 = vector.load %arg5[%c0_40, %c1_41, %c1_42] : memref<12x18x18xf32, #tpu.memory_space<vmem>>, vector<12x16x16xf32>
    %c1_43 = arith.constant 1 : index
    %c1_44 = arith.constant 1 : index
    %c0_45 = arith.constant 0 : index
    %c0_46 = arith.constant 0 : index
    %c0_47 = arith.constant 0 : index
    %31 = vector.load %arg2[%c1_43, %c1_44, %c0_45, %c0_46, %c0_47] : memref<3x3x12x1x1xf32, #tpu.memory_space<vmem>>, vector<1x1x12x1x1xf32>
    %32 = vector.shape_cast %31 : vector<1x1x12x1x1xf32> to vector<12x1x1xf32>
    %33 = vector.broadcast %32 : vector<12x1x1xf32> to vector<12x16x16xf32>
    %34 = arith.mulf %30, %33 : vector<12x16x16xf32>
    %35 = arith.addf %29, %34 : vector<12x16x16xf32>
    %c0_48 = arith.constant 0 : index
    %c1_49 = arith.constant 1 : index
    %c2_50 = arith.constant 2 : index
    %36 = vector.load %arg5[%c0_48, %c1_49, %c2_50] : memref<12x18x18xf32, #tpu.memory_space<vmem>>, vector<12x16x16xf32>
    %c1_51 = arith.constant 1 : index
    %c2_52 = arith.constant 2 : index
    %c0_53 = arith.constant 0 : index
    %c0_54 = arith.constant 0 : index
    %c0_55 = arith.constant 0 : index
    %37 = vector.load %arg2[%c1_51, %c2_52, %c0_53, %c0_54, %c0_55] : memref<3x3x12x1x1xf32, #tpu.memory_space<vmem>>, vector<1x1x12x1x1xf32>
    %38 = vector.shape_cast %37 : vector<1x1x12x1x1xf32> to vector<12x1x1xf32>
    %39 = vector.broadcast %38 : vector<12x1x1xf32> to vector<12x16x16xf32>
    %40 = arith.mulf %36, %39 : vector<12x16x16xf32>
    %41 = arith.addf %35, %40 : vector<12x16x16xf32>
    %c0_56 = arith.constant 0 : index
    %c2_57 = arith.constant 2 : index
    %c0_58 = arith.constant 0 : index
    %42 = vector.load %arg5[%c0_56, %c2_57, %c0_58] : memref<12x18x18xf32, #tpu.memory_space<vmem>>, vector<12x16x16xf32>
    %c2_59 = arith.constant 2 : index
    %c0_60 = arith.constant 0 : index
    %c0_61 = arith.constant 0 : index
    %c0_62 = arith.constant 0 : index
    %c0_63 = arith.constant 0 : index
    %43 = vector.load %arg2[%c2_59, %c0_60, %c0_61, %c0_62, %c0_63] : memref<3x3x12x1x1xf32, #tpu.memory_space<vmem>>, vector<1x1x12x1x1xf32>
    %44 = vector.shape_cast %43 : vector<1x1x12x1x1xf32> to vector<12x1x1xf32>
    %45 = vector.broadcast %44 : vector<12x1x1xf32> to vector<12x16x16xf32>
    %46 = arith.mulf %42, %45 : vector<12x16x16xf32>
    %47 = arith.addf %41, %46 : vector<12x16x16xf32>
    %c0_64 = arith.constant 0 : index
    %c2_65 = arith.constant 2 : index
    %c1_66 = arith.constant 1 : index
    %48 = vector.load %arg5[%c0_64, %c2_65, %c1_66] : memref<12x18x18xf32, #tpu.memory_space<vmem>>, vector<12x16x16xf32>
    %c2_67 = arith.constant 2 : index
    %c1_68 = arith.constant 1 : index
    %c0_69 = arith.constant 0 : index
    %c0_70 = arith.constant 0 : index
    %c0_71 = arith.constant 0 : index
    %49 = vector.load %arg2[%c2_67, %c1_68, %c0_69, %c0_70, %c0_71] : memref<3x3x12x1x1xf32, #tpu.memory_space<vmem>>, vector<1x1x12x1x1xf32>
    %50 = vector.shape_cast %49 : vector<1x1x12x1x1xf32> to vector<12x1x1xf32>
    %51 = vector.broadcast %50 : vector<12x1x1xf32> to vector<12x16x16xf32>
    %52 = arith.mulf %48, %51 : vector<12x16x16xf32>
    %53 = arith.addf %47, %52 : vector<12x16x16xf32>
    %c0_72 = arith.constant 0 : index
    %c2_73 = arith.constant 2 : index
    %c2_74 = arith.constant 2 : index
    %54 = vector.load %arg5[%c0_72, %c2_73, %c2_74] : memref<12x18x18xf32, #tpu.memory_space<vmem>>, vector<12x16x16xf32>
    %c2_75 = arith.constant 2 : index
    %c2_76 = arith.constant 2 : index
    %c0_77 = arith.constant 0 : index
    %c0_78 = arith.constant 0 : index
    %c0_79 = arith.constant 0 : index
    %55 = vector.load %arg2[%c2_75, %c2_76, %c0_77, %c0_78, %c0_79] : memref<3x3x12x1x1xf32, #tpu.memory_space<vmem>>, vector<1x1x12x1x1xf32>
    %56 = vector.shape_cast %55 : vector<1x1x12x1x1xf32> to vector<12x1x1xf32>
    %57 = vector.broadcast %56 : vector<12x1x1xf32> to vector<12x16x16xf32>
    %58 = arith.mulf %54, %57 : vector<12x16x16xf32>
    %59 = arith.addf %53, %58 : vector<12x16x16xf32>
    %c0_80 = arith.constant 0 : index
    %c0_81 = arith.constant 0 : index
    %c0_82 = arith.constant 0 : index
    %60 = vector.load %arg3[%c0_80, %c0_81, %c0_82] : memref<12x1x1xf32, #tpu.memory_space<vmem>>, vector<12x1x1xf32>
    %61 = vector.broadcast %60 : vector<12x1x1xf32> to vector<12x16x16xf32>
    %62 = arith.addf %59, %61 : vector<12x16x16xf32>
    %c0_83 = arith.constant 0 : index
    %c0_84 = arith.constant 0 : index
    %c0_85 = arith.constant 0 : index
    %c0_86 = arith.constant 0 : index
    %63 = vector.load %arg4[%c0_83, %c0_84, %c0_85, %c0_86] : memref<1x12x16x16xf32, #tpu.memory_space<vmem>>, vector<1x12x16x16xf32>
    %64 = vector.shape_cast %63 : vector<1x12x16x16xf32> to vector<12x16x16xf32>
    %65 = vector.shape_cast %62 : vector<12x16x16xf32> to vector<1x12x16x16xf32>
    tpu.vector_store %arg4[%c0_83, %c0_84, %c0_85, %c0_86], %65 {strides = array<i32>} : memref<1x12x16x16xf32, #tpu.memory_space<vmem>>, vector<1x12x16x16xf32>,
    return
  }
  func.func @transform_0(%arg0: i32) -> (i32, i32, i32, i32) {
    %c0_i32 = arith.constant 0 : i32
    %c0_i32_0 = arith.constant 0 : i32
    %c0_i32_1 = arith.constant 0 : i32
    %c0_i32_2 = arith.constant 0 : i32
    return %arg0, %c0_i32, %c0_i32_0, %c0_i32_1 : i32, i32, i32, i32
  }
  func.func @transform_1(%arg0: i32) -> (i32, i32, i32, i32, i32) {
    %c0_i32 = arith.constant 0 : i32
    %c0_i32_0 = arith.constant 0 : i32
    %c0_i32_1 = arith.constant 0 : i32
    %c0_i32_2 = arith.constant 0 : i32
    %c0_i32_3 = arith.constant 0 : i32
    %c0_i32_4 = arith.constant 0 : i32
    return %c0_i32, %c0_i32_0, %c0_i32_1, %c0_i32_2, %c0_i32_3 : i32, i32, i32, i32, i32
  }
  func.func @transform_2(%arg0: i32) -> (i32, i32, i32) {
    %c0_i32 = arith.constant 0 : i32
    %c0_i32_0 = arith.constant 0 : i32
    %c0_i32_1 = arith.constant 0 : i32
    %c0_i32_2 = arith.constant 0 : i32
    return %c0_i32, %c0_i32_0, %c0_i32_1 : i32, i32, i32
  }
  func.func @transform_3(%arg0: i32) -> (i32, i32, i32, i32) {
    %c0_i32 = arith.constant 0 : i32
    %c0_i32_0 = arith.constant 0 : i32
    %c0_i32_1 = arith.constant 0 : i32
    %c0_i32_2 = arith.constant 0 : i32
    return %arg0, %c0_i32, %c0_i32_0, %c0_i32_1 : i32, i32, i32, i32
  }
}

module attributes {stable_mosaic.version = 11 : i64} {
  func.func @_mdta_proj_kernel(%arg0: i32, %arg1: memref<2xf32, #tpu.memory_space<smem>>, %arg2: memref<1x12x256xf32, #tpu.memory_space<vmem>>, %arg3: memref<4x4xf32, #tpu.memory_space<vmem>>, %arg4: memref<4x1xf32, #tpu.memory_space<vmem>>, %arg5: memref<1x4x256xf32, #tpu.memory_space<vmem>>, %arg6: memref<4x256xf32, #tpu.memory_space<vmem>>) attributes {dimension_semantics = [#tpu.dimension_semantics<parallel>], iteration_bounds = array<i64: 2>, scalar_prefetch = 0 : i64, scratch_operands = 1 : i64, tpu.core_type = #tpu.core_type<tc>, window_params = [{transform_indices = @transform_0, window_bounds = array<i64: 2>}, {transform_indices = @transform_1, window_bounds = array<i64: 1, 12, 256>}, {pipeline_mode = #tpu.pipeline_mode<synchronous>, transform_indices = @transform_2, window_bounds = array<i64: 4, 4>}, {pipeline_mode = #tpu.pipeline_mode<synchronous>, transform_indices = @transform_3, window_bounds = array<i64: 4, 1>}, {transform_indices = @transform_4, window_bounds = array<i64: 1, 4, 256>}]} {
    %c0 = arith.constant 0 : index
    %c0_0 = arith.constant 0 : index
    %c0_1 = arith.constant 0 : index
    %0 = vector.load %arg2[%c0, %c0_0, %c0_1] : memref<1x12x256xf32, #tpu.memory_space<vmem>>, vector<1x2x256xf32>
    %1 = vector.shape_cast %0 : vector<1x2x256xf32> to vector<2x256xf32>
    %c0_2 = arith.constant 0 : index
    %c4 = arith.constant 4 : index
    %c0_3 = arith.constant 0 : index
    %2 = vector.load %arg2[%c0_2, %c4, %c0_3] : memref<1x12x256xf32, #tpu.memory_space<vmem>>, vector<1x2x256xf32>
    %3 = vector.shape_cast %2 : vector<1x2x256xf32> to vector<2x256xf32>
    %c0_4 = arith.constant 0 : index
    %c8 = arith.constant 8 : index
    %c0_5 = arith.constant 0 : index
    %4 = vector.load %arg2[%c0_4, %c8, %c0_5] : memref<1x12x256xf32, #tpu.memory_space<vmem>>, vector<1x2x256xf32>
    %5 = vector.shape_cast %4 : vector<1x2x256xf32> to vector<2x256xf32>
    %6 = arith.mulf %1, %1 : vector<2x256xf32>
    %cst = arith.constant dense<0.000000e+00> : vector<2xf32>
    %7 = vector.multi_reduction <add>, %6, %cst [1] : vector<2x256xf32> to vector<2xf32>
    %8 = vector.shape_cast %7 : vector<2xf32> to vector<2x1xf32>
    %cst_6 = arith.constant 1.000000e-24 : f32
    %9 = vector.broadcast %cst_6 : f32 to vector<2x1xf32>
    %10 = arith.maximumf %8, %9 : vector<2x1xf32>
    %11 = math.rsqrt %10 : vector<2x1xf32>
    %12 = vector.broadcast %11 : vector<2x1xf32> to vector<2x256xf32>
    %13 = arith.mulf %1, %12 : vector<2x256xf32>
    %14 = arith.mulf %3, %3 : vector<2x256xf32>
    %cst_7 = arith.constant dense<0.000000e+00> : vector<2xf32>
    %15 = vector.multi_reduction <add>, %14, %cst_7 [1] : vector<2x256xf32> to vector<2xf32>
    %16 = vector.shape_cast %15 : vector<2xf32> to vector<2x1xf32>
    %cst_8 = arith.constant 1.000000e-24 : f32
    %17 = vector.broadcast %cst_8 : f32 to vector<2x1xf32>
    %18 = arith.maximumf %16, %17 : vector<2x1xf32>
    %19 = math.rsqrt %18 : vector<2x1xf32>
    %20 = vector.broadcast %19 : vector<2x1xf32> to vector<2x256xf32>
    %21 = arith.mulf %3, %20 : vector<2x256xf32>
    %cst_9 = arith.constant dense<0.000000e+00> : vector<2x2xf32>
    %22 = tpu.matmul %13, %21, %cst_9 {dimension_numbers = #tpu.dot_dimension_numbers<[1], [1], [0], [0], [0, 0, 1, 0], [], []>} : vector<2x256xf32>, vector<2x256xf32>, vector<2x2xf32> -> vector<2x2xf32>
    %c0_10 = arith.constant 0 : index
    %23 = memref.load %arg1[%c0_10] : memref<2xf32, #tpu.memory_space<smem>>
    %24 = vector.broadcast %23 : f32 to vector<2x2xf32>
    %25 = arith.mulf %22, %24 : vector<2x2xf32>
    %cst_11 = arith.constant dense<0xFF800000> : vector<2xf32>
    %26 = vector.multi_reduction <maximumf>, %25, %cst_11 [1] : vector<2x2xf32> to vector<2xf32>
    %27 = vector.shape_cast %26 : vector<2xf32> to vector<2x1xf32>
    %28 = vector.broadcast %27 : vector<2x1xf32> to vector<2x2xf32>
    %29 = arith.subf %25, %28 : vector<2x2xf32>
    %30 = math.exp %29 : vector<2x2xf32>
    %cst_12 = arith.constant dense<0.000000e+00> : vector<2xf32>
    %31 = vector.multi_reduction <add>, %30, %cst_12 [1] : vector<2x2xf32> to vector<2xf32>
    %32 = vector.shape_cast %31 : vector<2xf32> to vector<2x1xf32>
    %33 = tpu.reciprocal %32 {approx = true} : vector<2x1xf32> -> vector<2x1xf32>
    %34 = vector.broadcast %33 : vector<2x1xf32> to vector<2x2xf32>
    %35 = arith.mulf %30, %34 : vector<2x2xf32>
    %cst_13 = arith.constant dense<0.000000e+00> : vector<2x256xf32>
    %36 = tpu.matmul %35, %5, %cst_13 {dimension_numbers = #tpu.dot_dimension_numbers<[1], [0], [0], [1], [0, 0, 1, 1], [], []>} : vector<2x2xf32>, vector<2x256xf32>, vector<2x256xf32> -> vector<2x256xf32>
    %c0_14 = arith.constant 0 : index
    %c0_15 = arith.constant 0 : index
    %37 = vector.load %arg6[%c0_14, %c0_15] : memref<4x256xf32, #tpu.memory_space<vmem>>, vector<2x256xf32>
    tpu.vector_store %arg6[%c0_14, %c0_15], %36 {strides = array<i32>} : memref<4x256xf32, #tpu.memory_space<vmem>>, vector<2x256xf32>,
    %c0_16 = arith.constant 0 : index
    %c2 = arith.constant 2 : index
    %c0_17 = arith.constant 0 : index
    %38 = vector.load %arg2[%c0_16, %c2, %c0_17] : memref<1x12x256xf32, #tpu.memory_space<vmem>>, vector<1x2x256xf32>
    %39 = vector.shape_cast %38 : vector<1x2x256xf32> to vector<2x256xf32>
    %c0_18 = arith.constant 0 : index
    %c6 = arith.constant 6 : index
    %c0_19 = arith.constant 0 : index
    %40 = vector.load %arg2[%c0_18, %c6, %c0_19] : memref<1x12x256xf32, #tpu.memory_space<vmem>>, vector<1x2x256xf32>
    %41 = vector.shape_cast %40 : vector<1x2x256xf32> to vector<2x256xf32>
    %c0_20 = arith.constant 0 : index
    %c10 = arith.constant 10 : index
    %c0_21 = arith.constant 0 : index
    %42 = vector.load %arg2[%c0_20, %c10, %c0_21] : memref<1x12x256xf32, #tpu.memory_space<vmem>>, vector<1x2x256xf32>
    %43 = vector.shape_cast %42 : vector<1x2x256xf32> to vector<2x256xf32>
    %44 = arith.mulf %39, %39 : vector<2x256xf32>
    %cst_22 = arith.constant dense<0.000000e+00> : vector<2xf32>
    %45 = vector.multi_reduction <add>, %44, %cst_22 [1] : vector<2x256xf32> to vector<2xf32>
    %46 = vector.shape_cast %45 : vector<2xf32> to vector<2x1xf32>
    %cst_23 = arith.constant 1.000000e-24 : f32
    %47 = vector.broadcast %cst_23 : f32 to vector<2x1xf32>
    %48 = arith.maximumf %46, %47 : vector<2x1xf32>
    %49 = math.rsqrt %48 : vector<2x1xf32>
    %50 = vector.broadcast %49 : vector<2x1xf32> to vector<2x256xf32>
    %51 = arith.mulf %39, %50 : vector<2x256xf32>
    %52 = arith.mulf %41, %41 : vector<2x256xf32>
    %cst_24 = arith.constant dense<0.000000e+00> : vector<2xf32>
    %53 = vector.multi_reduction <add>, %52, %cst_24 [1] : vector<2x256xf32> to vector<2xf32>
    %54 = vector.shape_cast %53 : vector<2xf32> to vector<2x1xf32>
    %cst_25 = arith.constant 1.000000e-24 : f32
    %55 = vector.broadcast %cst_25 : f32 to vector<2x1xf32>
    %56 = arith.maximumf %54, %55 : vector<2x1xf32>
    %57 = math.rsqrt %56 : vector<2x1xf32>
    %58 = vector.broadcast %57 : vector<2x1xf32> to vector<2x256xf32>
    %59 = arith.mulf %41, %58 : vector<2x256xf32>
    %cst_26 = arith.constant dense<0.000000e+00> : vector<2x2xf32>
    %60 = tpu.matmul %51, %59, %cst_26 {dimension_numbers = #tpu.dot_dimension_numbers<[1], [1], [0], [0], [0, 0, 1, 0], [], []>} : vector<2x256xf32>, vector<2x256xf32>, vector<2x2xf32> -> vector<2x2xf32>
    %c1 = arith.constant 1 : index
    %61 = memref.load %arg1[%c1] : memref<2xf32, #tpu.memory_space<smem>>
    %62 = vector.broadcast %61 : f32 to vector<2x2xf32>
    %63 = arith.mulf %60, %62 : vector<2x2xf32>
    %cst_27 = arith.constant dense<0xFF800000> : vector<2xf32>
    %64 = vector.multi_reduction <maximumf>, %63, %cst_27 [1] : vector<2x2xf32> to vector<2xf32>
    %65 = vector.shape_cast %64 : vector<2xf32> to vector<2x1xf32>
    %66 = vector.broadcast %65 : vector<2x1xf32> to vector<2x2xf32>
    %67 = arith.subf %63, %66 : vector<2x2xf32>
    %68 = math.exp %67 : vector<2x2xf32>
    %cst_28 = arith.constant dense<0.000000e+00> : vector<2xf32>
    %69 = vector.multi_reduction <add>, %68, %cst_28 [1] : vector<2x2xf32> to vector<2xf32>
    %70 = vector.shape_cast %69 : vector<2xf32> to vector<2x1xf32>
    %71 = tpu.reciprocal %70 {approx = true} : vector<2x1xf32> -> vector<2x1xf32>
    %72 = vector.broadcast %71 : vector<2x1xf32> to vector<2x2xf32>
    %73 = arith.mulf %68, %72 : vector<2x2xf32>
    %cst_29 = arith.constant dense<0.000000e+00> : vector<2x256xf32>
    %74 = tpu.matmul %73, %43, %cst_29 {dimension_numbers = #tpu.dot_dimension_numbers<[1], [0], [0], [1], [0, 0, 1, 1], [], []>} : vector<2x2xf32>, vector<2x256xf32>, vector<2x256xf32> -> vector<2x256xf32>
    %c2_30 = arith.constant 2 : index
    %c0_31 = arith.constant 0 : index
    %75 = vector.load %arg6[%c2_30, %c0_31] : memref<4x256xf32, #tpu.memory_space<vmem>>, vector<2x256xf32>
    tpu.vector_store %arg6[%c2_30, %c0_31], %74 {strides = array<i32>} : memref<4x256xf32, #tpu.memory_space<vmem>>, vector<2x256xf32>,
    %c0_32 = arith.constant 0 : index
    %c0_33 = arith.constant 0 : index
    %76 = vector.load %arg3[%c0_32, %c0_33] : memref<4x4xf32, #tpu.memory_space<vmem>>, vector<4x4xf32>
    %c0_34 = arith.constant 0 : index
    %c0_35 = arith.constant 0 : index
    %77 = vector.load %arg6[%c0_34, %c0_35] : memref<4x256xf32, #tpu.memory_space<vmem>>, vector<4x256xf32>
    %cst_36 = arith.constant dense<0.000000e+00> : vector<4x256xf32>
    %78 = tpu.matmul %76, %77, %cst_36 {dimension_numbers = #tpu.dot_dimension_numbers<[1], [0], [0], [1], [0, 0, 1, 1], [], []>} : vector<4x4xf32>, vector<4x256xf32>, vector<4x256xf32> -> vector<4x256xf32>
    %c0_37 = arith.constant 0 : index
    %c0_38 = arith.constant 0 : index
    %79 = vector.load %arg4[%c0_37, %c0_38] : memref<4x1xf32, #tpu.memory_space<vmem>>, vector<4x1xf32>
    %80 = vector.broadcast %79 : vector<4x1xf32> to vector<4x256xf32>
    %81 = arith.addf %78, %80 : vector<4x256xf32>
    %c0_39 = arith.constant 0 : index
    %c0_40 = arith.constant 0 : index
    %c0_41 = arith.constant 0 : index
    %82 = vector.load %arg5[%c0_39, %c0_40, %c0_41] : memref<1x4x256xf32, #tpu.memory_space<vmem>>, vector<1x4x256xf32>
    %83 = vector.shape_cast %82 : vector<1x4x256xf32> to vector<4x256xf32>
    %84 = vector.shape_cast %81 : vector<4x256xf32> to vector<1x4x256xf32>
    tpu.vector_store %arg5[%c0_39, %c0_40, %c0_41], %84 {strides = array<i32>} : memref<1x4x256xf32, #tpu.memory_space<vmem>>, vector<1x4x256xf32>,
    return
  }
  func.func @transform_0(%arg0: i32) -> i32 {
    %c0_i32 = arith.constant 0 : i32
    %c0_i32_0 = arith.constant 0 : i32
    return %c0_i32 : i32
  }
  func.func @transform_1(%arg0: i32) -> (i32, i32, i32) {
    %c0_i32 = arith.constant 0 : i32
    %c0_i32_0 = arith.constant 0 : i32
    %c0_i32_1 = arith.constant 0 : i32
    return %arg0, %c0_i32, %c0_i32_0 : i32, i32, i32
  }
  func.func @transform_2(%arg0: i32) -> (i32, i32) {
    %c0_i32 = arith.constant 0 : i32
    %c0_i32_0 = arith.constant 0 : i32
    %c0_i32_1 = arith.constant 0 : i32
    return %c0_i32, %c0_i32_0 : i32, i32
  }
  func.func @transform_3(%arg0: i32) -> (i32, i32) {
    %c0_i32 = arith.constant 0 : i32
    %c0_i32_0 = arith.constant 0 : i32
    %c0_i32_1 = arith.constant 0 : i32
    return %c0_i32, %c0_i32_0 : i32, i32
  }
  func.func @transform_4(%arg0: i32) -> (i32, i32, i32) {
    %c0_i32 = arith.constant 0 : i32
    %c0_i32_0 = arith.constant 0 : i32
    %c0_i32_1 = arith.constant 0 : i32
    return %arg0, %c0_i32, %c0_i32_0 : i32, i32, i32
  }
}

</mosaic_0001>

<llo_original>
// kernel: attention_forward.3
$region0: #{attention_forward.3}
  #allocation0 [shape = 'u32[]', space=smem, size = 0x4, offset = 0x4, fixed_abs, tag = 'smem constant byte address 0x4 - core index']
  #allocation1 [shape = 'u32[144,128]{1,0:T(1,128)}', space=vmem, size = 0x12000, scoped, tag = 'internal scratch']
  %s0 = inlined_call_operand.vmem [shape: f32[2,4,256], index: 0, kind: input, shape index: {}]
  %s1 = inlined_call_operand.vmem [shape: f32[12,4], index: 1, kind: input, shape index: {}]
  %s2 = inlined_call_operand.vmem [shape: f32[12,1], index: 2, kind: input, shape index: {}]
  %s3 = inlined_call_operand.vmem [shape: f32[2,12,256], index: 3, kind: output, shape index: {}]
  %s4 = sld [smem:[#allocation0]]
  $region45: #{attention_forward.3} parent=0
    _
  %s6 = ssub.s32 1, %s4
  %s7 = scalar_select 0, %s6, %s4
  loop: start=0, step=1, limit=4
  $region2: #{attention_forward.3} parent=0 // loop_pre_header
    _
  $region3: #{attention_forward.3} parent=0 // loop_header
    %s9 = sphi 0, %s13
    %p10 = scmp.ge.s32.totalorder %s9, 4
    %s16 = sphi 0, %s28
    %s17 = sphi 0, %s24
    %s18 = sphi 0, %s16
    %s19 = sphi 0, %s17
    %s20 = sphi 0, %s18
    %s21 = sphi 0, %s19
    %s33 = sphi 0, %s35
    %s36 = sphi 0, %s33
    %s37 = sphi 0, %s36
    %s53 = sphi 0, %s37
    %s57 = sphi 0, %s57
    %s59 = sphi 0, %s57
    %s60 = sphi 0, %s59
    %s74 = sphi 0, %s60
    %s78 = sphi 0, %s78
    %s80 = sphi 0, %s78
    %s81 = sphi 0, %s80
    %s95 = sphi 0, %s81
    %s103 = sphi 0, %s105
    %s106 = sphi 0, %s103
    %s107 = sphi 0, %s106
    %s123 = sphi 0, %s107
  $region4: #{attention_forward.3} parent=0 // loop_header_branch
    %12 = sbr.rel (%p10) target = $region8
  $region5: #{attention_forward.3} parent=0 // loop_body
    %s14 = ssub.s32 %s9, 1
    %s15 = ssub.s32 %s9, 2
    %s22 = sadd.s32 1, %s17
    %p23 = scmp.ge.s32.totalorder %s22, 1
    %s24 = scalar_select %p23, 0, %s22
    %s25 = sadd.s32 1, %s16
    %s26 = scalar_select %p23, %s25, %s16
    %p27 = scmp.ge.s32.totalorder %s26, 2
    %s28 = scalar_select %p27, 0, %s26
    %s29 = ssub.s32 %s16, %s28
    %s30 = ssub.s32 %s17, %s24
    %s31 = sor.u32 %s29, %s30
    %p32 = scmp.eq.s32.totalorder %s31, 0
    %s34 = sadd.s32 %s33, 1
    %s35 = scalar_select %p32, %s33, %s34
    %p38 = pneg %p32
    %p39 = scmp.eq.s32.totalorder %s9, 1
    %p40 = por %p38, %p39
    %p41 = scmp.ne.s32.totalorder %s33, %s36
    %p42 = scmp.eq.s32.totalorder %s9, 0
    %p43 = por %p41, %p42
    %p44 = scmp.ne.s32.totalorder %s33, %s36
    %p45 = scmp.eq.s32.totalorder %s14, 1
    %p46 = por %p44, %p45
    %p47 = scmp.ne.s32.totalorder %s36, %s37
    %p48 = scmp.eq.s32.totalorder %s14, 0
    %p49 = por %p47, %p48
    %p50 = scmp.ne.s32.totalorder %s36, %s37
    %p51 = scmp.eq.s32.totalorder %s15, 1
    %p52 = por %p50, %p51
    %p54 = scmp.ne.s32.totalorder %s37, %s53
    %p55 = scmp.eq.s32.totalorder %s15, 0
    %p56 = por %p54, %p55
    %s58 = sadd.s32 %s57, 1
    %p61 = scmp.eq.s32.totalorder %s9, 1
    %p62 = scmp.ne.s32.totalorder %s57, %s59
    %p63 = scmp.eq.s32.totalorder %s9, 0
    %p64 = por %p62, %p63
    %p65 = scmp.ne.s32.totalorder %s57, %s59
    %p66 = scmp.eq.s32.totalorder %s14, 1
    %p67 = por %p65, %p66
    %p68 = scmp.ne.s32.totalorder %s59, %s60
    %p69 = scmp.eq.s32.totalorder %s14, 0
    %p70 = por %p68, %p69
    %p71 = scmp.ne.s32.totalorder %s59, %s60
    %p72 = scmp.eq.s32.totalorder %s15, 1
    %p73 = por %p71, %p72
    %p75 = scmp.ne.s32.totalorder %s60, %s74
    %p76 = scmp.eq.s32.totalorder %s15, 0
    %p77 = por %p75, %p76
    %s79 = sadd.s32 %s78, 1
    %p82 = scmp.eq.s32.totalorder %s9, 1
    %p83 = scmp.ne.s32.totalorder %s78, %s80
    %p84 = scmp.eq.s32.totalorder %s9, 0
    %p85 = por %p83, %p84
    %p86 = scmp.ne.s32.totalorder %s78, %s80
    %p87 = scmp.eq.s32.totalorder %s14, 1
    %p88 = por %p86, %p87
    %p89 = scmp.ne.s32.totalorder %s80, %s81
    %p90 = scmp.eq.s32.totalorder %s14, 0
    %p91 = por %p89, %p90
    %p92 = scmp.ne.s32.totalorder %s80, %s81
    %p93 = scmp.eq.s32.totalorder %s15, 1
    %p94 = por %p92, %p93
    %p96 = scmp.ne.s32.totalorder %s81, %s95
    %p97 = scmp.eq.s32.totalorder %s15, 0
    %p98 = por %p96, %p97
    %s99 = ssub.s32 %s16, %s28
    %s100 = ssub.s32 %s17, %s24
    %s101 = sor.u32 %s99, %s100
    %p102 = scmp.eq.s32.totalorder %s101, 0
    %s104 = sadd.s32 %s103, 1
    %s105 = scalar_select %p102, %s103, %s104
    %p108 = pneg %p102
    %p109 = scmp.eq.s32.totalorder %s9, 1
    %p110 = por %p108, %p109
    %p111 = scmp.ne.s32.totalorder %s103, %s106
    %p112 = scmp.eq.s32.totalorder %s9, 0
    %p113 = por %p111, %p112
    %p114 = scmp.ne.s32.totalorder %s103, %s106
    %p115 = scmp.eq.s32.totalorder %s14, 1
    %p116 = por %p114, %p115
    %p117 = scmp.ne.s32.totalorder %s106, %s107
    %p118 = scmp.eq.s32.totalorder %s14, 0
    %p119 = por %p117, %p118
    %p120 = scmp.ne.s32.totalorder %s106, %s107
    %p121 = scmp.eq.s32.totalorder %s15, 1
    %p122 = por %p120, %p121
    %p124 = scmp.ne.s32.totalorder %s107, %s123
    %p125 = scmp.eq.s32.totalorder %s15, 0
    %p126 = por %p124, %p125
    %p127 = scmp.le.s32.totalorder 1, %s9
    %p128 = scmp.lt.s32.totalorder %s9, 3
    %p129 = pnand %p127, %p128
    %p130 = pneg %p129
    // Predicated region
    $region9: #{attention_forward.3} parent=5 // pred_check
      _
    $region10: #{attention_forward.3} parent=5 // pred_check_branch
      %132 = sbr.rel (%p129) target = $region12
    $region11: #{attention_forward.3} parent=5 // pred_region
      %s133 = ssub.s32 %s9, 1
      // Predicated region
      $region13: #{attention_forward.3} parent=11 // pred_check
        %p134 = pneg %p70
      $region14: #{attention_forward.3} parent=11 // pred_check_branch
        %136 = sbr.rel (%p134) target = $region16
      $region15: #{attention_forward.3} parent=11 // pred_region
        _
      $region16: #{attention_forward.3} parent=11 // pred_fallthru
        _
      // Predicated region
      $region17: #{attention_forward.3} parent=11 // pred_check
        %p137 = pneg %p91
      $region18: #{attention_forward.3} parent=11 // pred_check_branch
        %139 = sbr.rel (%p137) target = $region20
      $region19: #{attention_forward.3} parent=11 // pred_region
        _
      $region20: #{attention_forward.3} parent=11 // pred_fallthru
        _
    $region12: #{attention_forward.3} parent=5 // pred_fallthru
      _
    %p140 = scmp.lt.s32.totalorder %s9, 2
    // Predicated region
    $region21: #{attention_forward.3} parent=5 // pred_check
      %p141 = pneg %p140
    $region22: #{attention_forward.3} parent=5 // pred_check_branch
      %143 = sbr.rel (%p141) target = $region24
    $region23: #{attention_forward.3} parent=5 // pred_region
      // Predicated region
      $region25: #{attention_forward.3} parent=23 // pred_check
        %p144 = pneg %p43
      $region26: #{attention_forward.3} parent=23 // pred_check_branch
        %146 = sbr.rel (%p144) target = $region28
      $region27: #{attention_forward.3} parent=23 // pred_region
        %s147 = smul.u32 2, %s17
        %p148 = scmp.lt.s32.totalorder %s16, 1
        %s149 = scalar_select %p148, %s16, 1
        %p150 = scmp.lt.s32.totalorder %s147, 1
        %s151 = scalar_select %p150, %s147, 1
        %s152 = smul.addr %s149, 2
        %s153 = sadd.s32 %s151, %s152
        %s154 = smul.addr %s153, 4
        %s155 = scalar_lea.vmem %s0, %s154
        %s156 = smul.u32 2, %s17
      $region28: #{attention_forward.3} parent=23 // pred_fallthru
        _
    $region24: #{attention_forward.3} parent=5 // pred_fallthru
      _
    %p157 = scmp.le.s32.totalorder 1, %s9
    %p158 = scmp.lt.s32.totalorder %s9, 3
    %p159 = pnand %p157, %p158
    %p160 = pneg %p159
    // Predicated region
    $region29: #{attention_forward.3} parent=5 // pred_check
      _
    $region30: #{attention_forward.3} parent=5 // pred_check_branch
      %162 = sbr.rel (%p159) target = $region32
    $region31: #{attention_forward.3} parent=5 // pred_region
      %s163 = ssub.s32 %s9, 1
      %s164 = smul.u32 2, %s19
      %p165 = scmp.lt.s32.totalorder %s18, 1
      %s166 = scalar_select %p165, %s18, 1
      %p167 = scmp.lt.s32.totalorder %s164, 1
      %s168 = scalar_select %p167, %s164, 1
      %s169 = smul.addr %s166, 2
      %s170 = sadd.s32 %s168, %s169
      %s171 = smul.addr %s170, 4
      %s172 = scalar_lea.vmem %s0, %s171
      %p173 = pneg %p49
      %p174 = pneg %p46
      %p175 = pneg %p70
      %p176 = pneg %p67
      %p177 = pneg %p91
      %p178 = pneg %p88
      %p179 = pneg %p119
      %p180 = pneg %p116
      %s181 = smul.u32 2, %s19
      %p182 = scmp.lt.s32.totalorder %s18, 1
      %s183 = scalar_select %p182, %s18, 1
      %p184 = scmp.lt.s32.totalorder %s181, 1
      %s185 = scalar_select %p184, %s181, 1
      %s186 = smul.addr %s183, 4
      %s187 = sadd.s32 %s185, %s186
      %s188 = smul.addr %s187, 8
      %s189 = scalar_lea.vmem %s3, %s188
      %s190 = smul.u32 2, %s19
      %p191 = scmp.lt.s32.totalorder %s18, 1
      %s192 = scalar_select %p191, %s18, 1
      %p193 = scmp.lt.s32.totalorder %s190, 1
      %s194 = scalar_select %p193, %s190, 1
      %s195 = smul.addr %s192, 2
      %s196 = sadd.s32 %s194, %s195
      %s197 = smul.addr %s196, 4
      %s198 = scalar_lea.vmem %s0, %s197
      %s199 = smul.u32 2, %s19
      %s200 = smul.u32 2, %s19
      %p201 = scmp.lt.s32.totalorder %s18, 1
      %s202 = scalar_select %p201, %s18, 1
      %p203 = scmp.lt.s32.totalorder %s200, 1
      %s204 = scalar_select %p203, %s200, 1
      %s205 = smul.addr %s202, 4
      %s206 = sadd.s32 %s204, %s205
      %s207 = smul.addr %s206, 8
      %s208 = scalar_lea.vmem %s3, %s207
      %s209 = smul.u32 2, %s19
      %v210 = vld [vmem:[%s1] sm:$0xff]
      %v211 = vld [vmem:[%s1 + $0x8] sm:$0xf]
      %v212 = vld [vmem:[%s198] sm:$0xff]
      %v213 = vld [vmem:[%s2] sm:$0xff]
      %v214 = vld [vmem:[%s2 + $0x8] sm:$0xf]
      %216 = vset.pattern.permute.xlu0 0
      %217 = vperm.xlu0 %216, %v213
      %v218 = vpop.permute.xlu0 %217
      %221 = vset.pattern.permute.xlu0 0
      %222 = vperm.xlu0 %221, %v214
      %v223 = vpop.permute.xlu0 %222
      %v226 = vcombine.high %v212, %v212
      %vm227 = vcmask 31744
      %v229 = vsel %vm227, %v210, 0
      %v232 = vsel %vm227, %v211, 0
      %vm234 = vcmask 1043456
      %v235 = vsel %vm234, %v212, 0
      %v237 = vsel %vm234, %v226, 0
      %239 = vmatprep.subr.mxu0 %v237
      %240 = vmatpush1.msra.mxu0 %v235
      %241 = vmatprep.subr.mxu0 0.0
      %242 = vmatpush1.msra.mxu0 0.0
      %243 = vmatprep.subr.mxu0 0.0
      %244 = vmatpush1.msra.mxu0 0.0
      %245 = vmatprep.subr.mxu0 0.0
      %246 = vmatpush1.msra.mxu0 0.0
      %247 = vmatprep.subr.mxu0 0.0
      %248 = vmatpush1.msra.mxu0 0.0
      %249 = vmatprep.subr.mxu0 0.0
      %250 = vmatpush1.msra.mxu0 0.0
      %251 = vmatprep.subr.mxu0 0.0
      %252 = vmatpush1.msra.mxu0 0.0
      %253 = vmatprep.subr.mxu0 0.0
      %254 = vmatpush1.msra.mxu0 0.0
      %255 = vmatprep.subr.mxu0 0.0
      %256 = vmatpush1.msra.mxu0 0.0
      %257 = vmatprep.subr.mxu0 0.0
      %258 = vmatpush1.msra.mxu0 0.0
      %259 = vmatprep.subr.mxu0 0.0
      %260 = vmatpush1.msra.mxu0 0.0
      %261 = vmatprep.subr.mxu0 0.0
      %262 = vmatpush1.msra.mxu0 0.0
      %263 = vmatprep.subr.mxu0 0.0
      %264 = vmatpush1.msra.mxu0 0.0
      %265 = vmatprep.subr.mxu0 0.0
      %266 = vmatpush1.msra.mxu0 0.0
      %267 = vmatprep.subr.mxu0 0.0
      %268 = vmatpush1.msra.mxu0 0.0
      %269 = vmatprep.subr.mxu0 0.0
      %270 = vmatpush1.msra.mxu0 0.0
      %271 = vmatprep.subr.mxu0 0.0
      %272 = vmatpush1.msra.mxu0 0.0
      %273 = vmatprep.subr.mxu0 0.0
      %274 = vmatpush1.msra.mxu0 0.0
      %275 = vmatprep.subr.mxu0 0.0
      %276 = vmatpush1.msra.mxu0 0.0
      %277 = vmatprep.subr.mxu0 0.0
      %278 = vmatpush1.msra.mxu0 0.0
      %279 = vmatprep.subr.mxu0 0.0
      %280 = vmatpush1.msra.mxu0 0.0
      %281 = vmatprep.subr.mxu0 0.0
      %282 = vmatpush1.msra.mxu0 0.0
      %283 = vmatprep.subr.mxu0 0.0
      %284 = vmatpush1.msra.mxu0 0.0
      %285 = vmatprep.subr.mxu0 0.0
      %286 = vmatpush1.msra.mxu0 0.0
      %287 = vmatprep.subr.mxu0 0.0
      %288 = vmatpush1.msra.mxu0 0.0
      %289 = vmatprep.subr.mxu0 0.0
      %290 = vmatpush1.msra.mxu0 0.0
      %291 = vmatprep.subr.mxu0 0.0
      %292 = vmatpush1.msra.mxu0 0.0
      %293 = vmatprep.subr.mxu0 0.0
      %294 = vmatpush1.msra.mxu0 0.0
      %295 = vmatprep.subr.mxu0 0.0
      %296 = vmatpush1.msra.mxu0 0.0
      %297 = vmatprep.subr.mxu0 0.0
      %298 = vmatpush1.msra.mxu0 0.0
      %299 = vmatprep.subr.mxu0 0.0
      %300 = vmatpush1.msra.mxu0 0.0
      %301 = vmatprep.subr.mxu0 0.0
      %302 = vmatpush1.msra.mxu0 0.0
      %303 = vmatprep.mubr.f32.mxu0 0.0
      %304 = vmatmul.mubr.f32.gmra.mrb[0].mxu0 %v229
      %v305 = vpop.f32.mrb[0].mxu0
      %v306 = vadd.f32 %v218, %v305
      %v307 = vpop.f32.mrb[0].mxu0
      %v308 = vadd.f32 %v218, %v307
      %309 = vmatprep.mubr.f32.mxu0 0.0
      %310 = vmatmul.mubr.f32.gmra.mrb[0].mxu0 %v232
      %v311 = vpop.f32.mrb[0].mxu0
      %v312 = vadd.f32 %v223, %v311
      %v313 = vpop.f32.mrb[0].mxu0
      %v314 = vadd.f32 %v223, %v313
      %315 = vdwg.mxu0
      %316 = vst [vmem:[%s208] sm:$0xff] %v306
      %317 = vst [vmem:[%s208 + $0x8] sm:$0xff] %v308
      %318 = vst [vmem:[%s208 + $0x10] sm:$0xf] %v312
      %319 = vst [vmem:[%s208 + $0x18] sm:$0xf] %v314
      %s320 = smul.u32 2, %s19
      %p321 = scmp.lt.s32.totalorder %s18, 1
      %s322 = scalar_select %p321, %s18, 1
      %p323 = scmp.lt.s32.totalorder %s320, 1
      %s324 = scalar_select %p323, %s320, 1
      %s325 = smul.addr %s322, 4
      %s326 = sadd.s32 %s324, %s325
      %s327 = smul.addr %s326, 8
      %s328 = scalar_lea.vmem %s3, %s327
      // Predicated region
      $region33: #{attention_forward.3} parent=31 // pred_check
        %p329 = pneg %p116
      $region34: #{attention_forward.3} parent=31 // pred_check_branch
        %331 = sbr.rel (%p329) target = $region36
      $region35: #{attention_forward.3} parent=31 // pred_region
        %s332 = smul.u32 2, %s19
      $region36: #{attention_forward.3} parent=31 // pred_fallthru
        _
    $region32: #{attention_forward.3} parent=5 // pred_fallthru
      _
    %p333 = scmp.le.s32.totalorder 2, %s9
    // Predicated region
    $region37: #{attention_forward.3} parent=5 // pred_check
      %p334 = pneg %p333
    $region38: #{attention_forward.3} parent=5 // pred_check_branch
      %336 = sbr.rel (%p334) target = $region40
    $region39: #{attention_forward.3} parent=5 // pred_region
      %s337 = ssub.s32 %s9, 2
      // Predicated region
      $region41: #{attention_forward.3} parent=39 // pred_check
        %p338 = pneg %p122
      $region42: #{attention_forward.3} parent=39 // pred_check_branch
        %340 = sbr.rel (%p338) target = $region44
      $region43: #{attention_forward.3} parent=39 // pred_region
        %s341 = smul.u32 2, %s21
        %p342 = scmp.lt.s32.totalorder %s20, 1
        %s343 = scalar_select %p342, %s20, 1
        %p344 = scmp.lt.s32.totalorder %s341, 1
        %s345 = scalar_select %p344, %s341, 1
        %s346 = smul.addr %s343, 4
        %s347 = sadd.s32 %s345, %s346
        %s348 = smul.addr %s347, 8
        %s349 = scalar_lea.vmem %s3, %s348
      $region44: #{attention_forward.3} parent=39 // pred_fallthru
        _
    $region40: #{attention_forward.3} parent=5 // pred_fallthru
      _
  $region6: #{attention_forward.3} parent=0 // loop_footer
    %s13 = sadd.s32 1, %s9
  $region7: #{attention_forward.3} parent=0 // loop_footer_branch
    %8 = sbr.rel target = $region3
  $region8: #{attention_forward.3} parent=0 // loop_exit
    _

// kernel: attention_forward.5
$region0: #{attention_forward.5}
  #allocation0 [shape = 'u32[]', space=smem, size = 0x4, offset = 0x4, fixed_abs, tag = 'smem constant byte address 0x4 - core index']
  #allocation1 [shape = 'u32[144,128]{1,0:T(1,128)}', space=vmem, size = 0x12000, scoped, tag = 'internal scratch']
  #allocation2 [shape = 'f32[4,256]{1,0:T(4,128)}', space=vmem, size = 0x1000, scoped, tag = 'scratch operand']
  %s0 = inlined_call_operand.vmem [shape: f32[2], index: 0, kind: input, shape index: {}]
  %s1 = inlined_call_operand.vmem [shape: f32[2,12,256], index: 1, kind: input, shape index: {}]
  %s2 = inlined_call_operand.vmem [shape: f32[4,4], index: 2, kind: input, shape index: {}]
  %s3 = inlined_call_operand.vmem [shape: f32[4,1], index: 3, kind: input, shape index: {}]
  %s4 = inlined_call_operand.vmem [shape: f32[2,4,256], index: 4, kind: output, shape index: {}]
  %s5 = sld [smem:[#allocation0]]
  $region53: #{attention_forward.5} parent=0
    _
  %s7 = ssub.s32 1, %s5
  %s8 = scalar_select 0, %s7, %s5
  $region1: #{attention_forward.5} parent=0
    #allocation3 [shape = 'u8[512]{0}', space=smem, size = 0x200, scoped, tag = 'input window, operand 0, single buffered']
    #allocation4 [shape = 's32[2]{0}', space=sflag, size = 0x8, scoped, tag = 'scoped memory for attention_forward.5']
    %9 = vsyncpa [#allocation4], 0
    loop: start=0, step=1, limit=4
    $region2: #{attention_forward.5} parent=1 // loop_pre_header
      _
    $region3: #{attention_forward.5} parent=1 // loop_header
      %s11 = sphi 0, %s15
      %p12 = scmp.ge.s32.totalorder %s11, 4
      %s19 = sphi 0, %s19
      %s21 = sphi 0, %s19
      %s22 = sphi 0, %s21
      %s36 = sphi 0, %s22
      %s42 = sphi 0, %s44
      %s45 = sphi 0, %s42
      %s46 = sphi 0, %s45
      %s62 = sphi 0, %s46
      %s66 = sphi 0, %s66
      %s68 = sphi 0, %s66
      %s69 = sphi 0, %s68
      %s83 = sphi 0, %s69
      %s87 = sphi 0, %s87
      %s89 = sphi 0, %s87
      %s90 = sphi 0, %s89
      %s104 = sphi 0, %s90
      %s110 = sphi 0, %s112
      %s113 = sphi 0, %s110
      %s114 = sphi 0, %s113
      %s130 = sphi 0, %s114
    $region4: #{attention_forward.5} parent=1 // loop_header_branch
      %14 = sbr.rel (%p12) target = $region8
    $region5: #{attention_forward.5} parent=1 // loop_body
      %s16 = ssub.s32 %s11, 1
      %s17 = ssub.s32 %s11, 2
      %s18 = sadd.s32 %s11, 1
      %s20 = sadd.s32 %s19, 1
      %p23 = scmp.eq.s32.totalorder %s11, 1
      %p24 = scmp.ne.s32.totalorder %s19, %s21
      %p25 = scmp.eq.s32.totalorder %s11, 0
      %p26 = por %p24, %p25
      %p27 = scmp.ne.s32.totalorder %s19, %s21
      %p28 = scmp.eq.s32.totalorder %s16, 1
      %p29 = por %p27, %p28
      %p30 = scmp.ne.s32.totalorder %s21, %s22
      %p31 = scmp.eq.s32.totalorder %s16, 0
      %p32 = por %p30, %p31
      %p33 = scmp.ne.s32.totalorder %s21, %s22
      %p34 = scmp.eq.s32.totalorder %s17, 1
      %p35 = por %p33, %p34
      %p37 = scmp.ne.s32.totalorder %s22, %s36
      %p38 = scmp.eq.s32.totalorder %s17, 0
      %p39 = por %p37, %p38
      %s40 = ssub.s32 %s11, %s18
      %p41 = scmp.eq.s32.totalorder %s40, 0
      %s43 = sadd.s32 %s42, 1
      %s44 = scalar_select %p41, %s42, %s43
      %p47 = pneg %p41
      %p48 = scmp.eq.s32.totalorder %s11, 1
      %p49 = por %p47, %p48
      %p50 = scmp.ne.s32.totalorder %s42, %s45
      %p51 = scmp.eq.s32.totalorder %s11, 0
      %p52 = por %p50, %p51
      %p53 = scmp.ne.s32.totalorder %s42, %s45
      %p54 = scmp.eq.s32.totalorder %s16, 1
      %p55 = por %p53, %p54
      %p56 = scmp.ne.s32.totalorder %s45, %s46
      %p57 = scmp.eq.s32.totalorder %s16, 0
      %p58 = por %p56, %p57
      %p59 = scmp.ne.s32.totalorder %s45, %s46
      %p60 = scmp.eq.s32.totalorder %s17, 1
      %p61 = por %p59, %p60
      %p63 = scmp.ne.s32.totalorder %s46, %s62
      %p64 = scmp.eq.s32.totalorder %s17, 0
      %p65 = por %p63, %p64
      %s67 = sadd.s32 %s66, 1
      %p70 = scmp.eq.s32.totalorder %s11, 1
      %p71 = scmp.ne.s32.totalorder %s66, %s68
      %p72 = scmp.eq.s32.totalorder %s11, 0
      %p73 = por %p71, %p72
      %p74 = scmp.ne.s32.totalorder %s66, %s68
      %p75 = scmp.eq.s32.totalorder %s16, 1
      %p76 = por %p74, %p75
      %p77 = scmp.ne.s32.totalorder %s68, %s69
      %p78 = scmp.eq.s32.totalorder %s16, 0
      %p79 = por %p77, %p78
      %p80 = scmp.ne.s32.totalorder %s68, %s69
      %p81 = scmp.eq.s32.totalorder %s17, 1
      %p82 = por %p80, %p81
      %p84 = scmp.ne.s32.totalorder %s69, %s83
      %p85 = scmp.eq.s32.totalorder %s17, 0
      %p86 = por %p84, %p85
      %s88 = sadd.s32 %s87, 1
      %p91 = scmp.eq.s32.totalorder %s11, 1
      %p92 = scmp.ne.s32.totalorder %s87, %s89
      %p93 = scmp.eq.s32.totalorder %s11, 0
      %p94 = por %p92, %p93
      %p95 = scmp.ne.s32.totalorder %s87, %s89
      %p96 = scmp.eq.s32.totalorder %s16, 1
      %p97 = por %p95, %p96
      %p98 = scmp.ne.s32.totalorder %s89, %s90
      %p99 = scmp.eq.s32.totalorder %s16, 0
      %p100 = por %p98, %p99
      %p101 = scmp.ne.s32.totalorder %s89, %s90
      %p102 = scmp.eq.s32.totalorder %s17, 1
      %p103 = por %p101, %p102
      %p105 = scmp.ne.s32.totalorder %s90, %s104
      %p106 = scmp.eq.s32.totalorder %s17, 0
      %p107 = por %p105, %p106
      %s108 = ssub.s32 %s11, %s18
      %p109 = scmp.eq.s32.totalorder %s108, 0
      %s111 = sadd.s32 %s110, 1
      %s112 = scalar_select %p109, %s110, %s111
      %p115 = pneg %p109
      %p116 = scmp.eq.s32.totalorder %s11, 1
      %p117 = por %p115, %p116
      %p118 = scmp.ne.s32.totalorder %s110, %s113
      %p119 = scmp.eq.s32.totalorder %s11, 0
      %p120 = por %p118, %p119
      %p121 = scmp.ne.s32.totalorder %s110, %s113
      %p122 = scmp.eq.s32.totalorder %s16, 1
      %p123 = por %p121, %p122
      %p124 = scmp.ne.s32.totalorder %s113, %s114
      %p125 = scmp.eq.s32.totalorder %s16, 0
      %p126 = por %p124, %p125
      %p127 = scmp.ne.s32.totalorder %s113, %s114
      %p128 = scmp.eq.s32.totalorder %s17, 1
      %p129 = por %p127, %p128
      %p131 = scmp.ne.s32.totalorder %s114, %s130
      %p132 = scmp.eq.s32.totalorder %s17, 0
      %p133 = por %p131, %p132
      %p134 = scmp.le.s32.totalorder 1, %s11
      %p135 = scmp.lt.s32.totalorder %s11, 3
      %p136 = pnand %p134, %p135
      %p137 = pneg %p136
      // Predicated region
      $region9: #{attention_forward.5} parent=5 // pred_check
        _
      $region10: #{attention_forward.5} parent=5 // pred_check_branch
        %139 = sbr.rel (%p136) target = $region12
      $region11: #{attention_forward.5} parent=5 // pred_region
        %s140 = ssub.s32 %s11, 1
        // Predicated region
        $region13: #{attention_forward.5} parent=11 // pred_check
          %p141 = pneg %p32
        $region14: #{attention_forward.5} parent=11 // pred_check_branch
          %143 = sbr.rel (%p141) target = $region16
        $region15: #{attention_forward.5} parent=11 // pred_region
          %s145 = ssub.s32 16, 16
          %146 = vsyncadd [#allocation4], %s145
          %s148 = sshll.u32 %s0, 4
          %s149 = int_to_ptr.vmem [resolvable:$true] %s148
          %151 = dma.vmem_to_smem %s149, 16, [#allocation3], [#allocation4]
        $region16: #{attention_forward.5} parent=11 // pred_fallthru
          _
        // Predicated region
        $region17: #{attention_forward.5} parent=11 // pred_check
          %p152 = pneg %p79
        $region18: #{attention_forward.5} parent=11 // pred_check_branch
          %154 = sbr.rel (%p152) target = $region20
        $region19: #{attention_forward.5} parent=11 // pred_region
          _
        $region20: #{attention_forward.5} parent=11 // pred_fallthru
          _
        // Predicated region
        $region21: #{attention_forward.5} parent=11 // pred_check
          %p155 = pneg %p100
        $region22: #{attention_forward.5} parent=11 // pred_check_branch
          %157 = sbr.rel (%p155) target = $region24
        $region23: #{attention_forward.5} parent=11 // pred_region
          _
        $region24: #{attention_forward.5} parent=11 // pred_fallthru
          _
      $region12: #{attention_forward.5} parent=5 // pred_fallthru
        _
      %p158 = scmp.lt.s32.totalorder %s11, 2
      // Predicated region
      $region25: #{attention_forward.5} parent=5 // pred_check
        %p159 = pneg %p158
      $region26: #{attention_forward.5} parent=5 // pred_check_branch
        %161 = sbr.rel (%p159) target = $region28
      $region27: #{attention_forward.5} parent=5 // pred_region
        // Predicated region
        $region29: #{attention_forward.5} parent=27 // pred_check
          %p162 = pneg %p52
        $region30: #{attention_forward.5} parent=27 // pred_check_branch
          %164 = sbr.rel (%p162) target = $region32
        $region31: #{attention_forward.5} parent=27 // pred_region
          %p165 = scmp.lt.s32.totalorder %s11, 1
          %s166 = scalar_select %p165, %s11, 1
          %s167 = smul.addr %s166, 4
          %s168 = smul.addr %s167, 8
          %s169 = scalar_lea.vmem %s1, %s168
        $region32: #{attention_forward.5} parent=27 // pred_fallthru
          _
      $region28: #{attention_forward.5} parent=5 // pred_fallthru
        _
      %p170 = scmp.le.s32.totalorder 1, %s11
      %p171 = scmp.lt.s32.totalorder %s11, 3
      %p172 = pnand %p170, %p171
      %p173 = pneg %p172
      // Predicated region
      $region33: #{attention_forward.5} parent=5 // pred_check
        _
      $region34: #{attention_forward.5} parent=5 // pred_check_branch
        %175 = sbr.rel (%p172) target = $region36
      $region35: #{attention_forward.5} parent=5 // pred_region
        %s176 = ssub.s32 %s11, 1
        // Predicated region
        $region37: #{attention_forward.5} parent=35 // pred_check
          %p177 = pneg %p32
        $region38: #{attention_forward.5} parent=35 // pred_check_branch
          %179 = sbr.rel (%p177) target = $region40
        $region39: #{attention_forward.5} parent=35 // pred_region
          %180 = dma.done [#allocation4], 16
        $region40: #{attention_forward.5} parent=35 // pred_fallthru
          _
        %181 = sfence
        %p182 = pneg %p32
        %p183 = pneg %p29
        %p184 = scmp.lt.s32.totalorder %s16, 1
        %s185 = scalar_select %p184, %s16, 1
        %s186 = smul.addr %s185, 4
        %s187 = smul.addr %s186, 8
        %s188 = scalar_lea.vmem %s1, %s187
        %p189 = pneg %p58
        %p190 = pneg %p55
        %p191 = pneg %p79
        %p192 = pneg %p76
        %p193 = pneg %p100
        %p194 = pneg %p97
        %p195 = pneg %p126
        %p196 = pneg %p123
        %p197 = scmp.lt.s32.totalorder %s16, 1
        %s198 = scalar_select %p197, %s16, 1
        %s199 = smul.addr %s198, 2
        %s200 = smul.addr %s199, 4
        %s201 = scalar_lea.vmem %s4, %s200
        %p202 = scmp.lt.s32.totalorder %s16, 1
        %s203 = scalar_select %p202, %s16, 1
        %s204 = smul.addr %s203, 4
        %s205 = smul.addr %s204, 8
        %s206 = scalar_lea.vmem %s1, %s205
        %p207 = scmp.lt.s32.totalorder %s16, 1
        %s208 = scalar_select %p207, %s16, 1
        %s209 = smul.addr %s208, 2
        %s210 = smul.addr %s209, 4
        %s211 = scalar_lea.vmem %s4, %s210
        %v212 = vld [vmem:[%s206] sm:$0x3]
        %v213 = vld [vmem:[%s206 + $0x8] sm:$0x3]
        %v214 = vld [vmem:[%s206] sm:$0x30]
        %v215 = vld [vmem:[%s206 + $0x8] sm:$0x30]
        %v216 = vld [vmem:[%s206 + $0x10] sm:$0x3]
        %v217 = vld [vmem:[%s206 + $0x18] sm:$0x3]
        %v218 = vmul.f32 %v212, %v212
        %v219 = vmul.f32 %v213, %v213
        %vm220 = vcmask 1041408
        %v221 = vsel %vm220, %v218, 0.0
        %v222 = vsel %vm220, %v219, 0.0
        %v223 = vadd.f32 %v221, %v222
        %224 = vadd.xlane.f32.xlu0 %v223
        %v225 = vpop.xlane.xlu0 %224
        %v226 = vmax.f32 %v225, 1e-24
        %v227 = vrsqrt.pop %v226
        %v228 = vmul.f32 %v212, %v227
        %v229 = vmul.f32 %v213, %v227
        %v230 = vmul.f32 %v214, %v214
        %v231 = vmul.f32 %v215, %v215
        %vm232 = vcmask 1045508
        %v233 = vsel %vm232, %v230, 0.0
        %v234 = vsel %vm232, %v231, 0.0
        %v235 = vadd.f32 %v233, %v234
        %236 = vadd.xlane.f32.xlu0 %v235
        %v237 = vpop.xlane.xlu0 %236
        %v238 = vmax.f32 %v237, 1e-24
        %v239 = vrsqrt.pop %v238
        %v240 = vmul.f32 %v214, %v239
        %v241 = vmul.f32 %v215, %v239
        %v244 = vrot.slane %v240, 4
        %v245 = vrot.slane %v241, 4
        %248 = vmatprep.subr.mxu0 %v245
        %249 = vmatpush1.xpose.msra.mxu0 %v244
        %250 = vmatprep.subr.mxu0 0.0
        %251 = vmatpush1.xpose.msra.mxu0 0.0
        %252 = vmatprep.subr.mxu0 0.0
        %253 = vmatpush1.xpose.msra.mxu0 0.0
        %254 = vmatprep.subr.mxu0 0.0
        %255 = vmatpush1.xpose.msra.mxu0 0.0
        %256 = vmatprep.subr.mxu0 0.0
        %257 = vmatpush1.xpose.msra.mxu0 0.0
        %258 = vmatprep.subr.mxu0 0.0
        %259 = vmatpush1.xpose.msra.mxu0 0.0
        %260 = vmatprep.subr.mxu0 0.0
        %261 = vmatpush1.xpose.msra.mxu0 0.0
        %262 = vmatprep.subr.mxu0 0.0
        %263 = vmatpush1.xpose.msra.mxu0 0.0
        %264 = vmatprep.subr.mxu0 0.0
        %265 = vmatpush1.xpose.msra.mxu0 0.0
        %266 = vmatprep.subr.mxu0 0.0
        %267 = vmatpush1.xpose.msra.mxu0 0.0
        %268 = vmatprep.subr.mxu0 0.0
        %269 = vmatpush1.xpose.msra.mxu0 0.0
        %270 = vmatprep.subr.mxu0 0.0
        %271 = vmatpush1.xpose.msra.mxu0 0.0
        %272 = vmatprep.subr.mxu0 0.0
        %273 = vmatpush1.xpose.msra.mxu0 0.0
        %274 = vmatprep.subr.mxu0 0.0
        %275 = vmatpush1.xpose.msra.mxu0 0.0
        %276 = vmatprep.subr.mxu0 0.0
        %277 = vmatpush1.xpose.msra.mxu0 0.0
        %278 = vmatprep.subr.mxu0 0.0
        %279 = vmatpush1.xpose.msra.mxu0 0.0
        %280 = vmatprep.subr.mxu0 0.0
        %281 = vmatpush1.xpose.msra.mxu0 0.0
        %282 = vmatprep.subr.mxu0 0.0
        %283 = vmatpush1.xpose.msra.mxu0 0.0
        %284 = vmatprep.subr.mxu0 0.0
        %285 = vmatpush1.xpose.msra.mxu0 0.0
        %286 = vmatprep.subr.mxu0 0.0
        %287 = vmatpush1.xpose.msra.mxu0 0.0
        %288 = vmatprep.subr.mxu0 0.0
        %289 = vmatpush1.xpose.msra.mxu0 0.0
        %290 = vmatprep.subr.mxu0 0.0
        %291 = vmatpush1.xpose.msra.mxu0 0.0
        %292 = vmatprep.subr.mxu0 0.0
        %293 = vmatpush1.xpose.msra.mxu0 0.0
        %294 = vmatprep.subr.mxu0 0.0
        %295 = vmatpush1.xpose.msra.mxu0 0.0
        %296 = vmatprep.subr.mxu0 0.0
        %297 = vmatpush1.xpose.msra.mxu0 0.0
        %298 = vmatprep.subr.mxu0 0.0
        %299 = vmatpush1.xpose.msra.mxu0 0.0
        %300 = vmatprep.subr.mxu0 0.0
        %301 = vmatpush1.xpose.msra.mxu0 0.0
        %302 = vmatprep.subr.mxu0 0.0
        %303 = vmatpush1.xpose.msra.mxu0 0.0
        %304 = vmatprep.subr.mxu0 0.0
        %305 = vmatpush1.xpose.msra.mxu0 0.0
        %306 = vmatprep.subr.mxu0 0.0
        %307 = vmatpush1.xpose.msra.mxu0 0.0
        %308 = vmatprep.subr.mxu0 0.0
        %309 = vmatpush1.xpose.msra.mxu0 0.0
        %310 = vmatprep.subr.mxu0 0.0
        %311 = vmatpush1.xpose.msra.mxu0 0.0
        %312 = vmatprep.mubr.f32.mxu0 %v229
        %313 = vmatmul.mubr.f32.gmra.mrb[0].mxu0 %v228
        %v314 = vpop.f32.mrb[0].mxu0
        %v315 = vadd.f32 0.0, %v314
        %v316 = vpop.f32.mrb[0].mxu0
        %317 = vdwg.mxu0
        %s318 = sld [smem:[#allocation3]]
        %v319 = vstv %s318
        %v320 = vmul.f32 %v315, %v319
        %vm321 = vcmask 9216
        %v322 = vsel %vm321, %v320, -inf
        %323 = vmax.xlane.f32.xlu0 %v322
        %v324 = vpop.xlane.xlu0 %323
        %v325 = vsub.f32 %v320, %v324
        %v326 = vmul.f32 %v325, 1.442695
        %v327 = vpow.pop %v326
        %v328 = vsel %vm321, %v327, 0.0
        %329 = vadd.xlane.f32.xlu0 %v328
        %v330 = vpop.xlane.xlu0 %329
        %v331 = vrcp.pop %v330
        %v332 = vmul.f32 %v327, %v331
        %vm333 = vcmask 15360
        %v335 = vsel %vm333, %v332, 0
        %v338 = vsel %vm220, %v216, 0
        %v341 = vsel %vm220, %v217, 0
        %343 = vmatprep.subr.mxu0 %v341
        %344 = vmatpush1.msra.mxu0 %v338
        %345 = vmatprep.subr.mxu0 0.0
        %346 = vmatpush1.msra.mxu0 0.0
        %347 = vmatprep.subr.mxu0 0.0
        %348 = vmatpush1.msra.mxu0 0.0
        %349 = vmatprep.subr.mxu0 0.0
        %350 = vmatpush1.msra.mxu0 0.0
        %351 = vmatprep.subr.mxu0 0.0
        %352 = vmatpush1.msra.mxu0 0.0
        %353 = vmatprep.subr.mxu0 0.0
        %354 = vmatpush1.msra.mxu0 0.0
        %355 = vmatprep.subr.mxu0 0.0
        %356 = vmatpush1.msra.mxu0 0.0
        %357 = vmatprep.subr.mxu0 0.0
        %358 = vmatpush1.msra.mxu0 0.0
        %359 = vmatprep.subr.mxu0 0.0
        %360 = vmatpush1.msra.mxu0 0.0
        %361 = vmatprep.subr.mxu0 0.0
        %362 = vmatpush1.msra.mxu0 0.0
        %363 = vmatprep.subr.mxu0 0.0
        %364 = vmatpush1.msra.mxu0 0.0
        %365 = vmatprep.subr.mxu0 0.0
        %366 = vmatpush1.msra.mxu0 0.0
        %367 = vmatprep.subr.mxu0 0.0
        %368 = vmatpush1.msra.mxu0 0.0
        %369 = vmatprep.subr.mxu0 0.0
        %370 = vmatpush1.msra.mxu0 0.0
        %371 = vmatprep.subr.mxu0 0.0
        %372 = vmatpush1.msra.mxu0 0.0
        %373 = vmatprep.subr.mxu0 0.0
        %374 = vmatpush1.msra.mxu0 0.0
        %375 = vmatprep.subr.mxu0 0.0
        %376 = vmatpush1.msra.mxu0 0.0
        %377 = vmatprep.subr.mxu0 0.0
        %378 = vmatpush1.msra.mxu0 0.0
        %379 = vmatprep.subr.mxu0 0.0
        %380 = vmatpush1.msra.mxu0 0.0
        %381 = vmatprep.subr.mxu0 0.0
        %382 = vmatpush1.msra.mxu0 0.0
        %383 = vmatprep.subr.mxu0 0.0
        %384 = vmatpush1.msra.mxu0 0.0
        %385 = vmatprep.subr.mxu0 0.0
        %386 = vmatpush1.msra.mxu0 0.0
        %387 = vmatprep.subr.mxu0 0.0
        %388 = vmatpush1.msra.mxu0 0.0
        %389 = vmatprep.subr.mxu0 0.0
        %390 = vmatpush1.msra.mxu0 0.0
        %391 = vmatprep.subr.mxu0 0.0
        %392 = vmatpush1.msra.mxu0 0.0
        %393 = vmatprep.subr.mxu0 0.0
        %394 = vmatpush1.msra.mxu0 0.0
        %395 = vmatprep.subr.mxu0 0.0
        %396 = vmatpush1.msra.mxu0 0.0
        %397 = vmatprep.subr.mxu0 0.0
        %398 = vmatpush1.msra.mxu0 0.0
        %399 = vmatprep.subr.mxu0 0.0
        %400 = vmatpush1.msra.mxu0 0.0
        %401 = vmatprep.subr.mxu0 0.0
        %402 = vmatpush1.msra.mxu0 0.0
        %403 = vmatprep.subr.mxu0 0.0
        %404 = vmatpush1.msra.mxu0 0.0
        %405 = vmatprep.subr.mxu0 0.0
        %406 = vmatpush1.msra.mxu0 0.0
        %407 = vmatprep.mubr.f32.mxu0 0.0
        %408 = vmatmul.mubr.f32.gmra.mrb[0].mxu0 %v335
        %v409 = vpop.f32.mrb[0].mxu0
        %v410 = vadd.f32 0.0, %v409
        %v411 = vpop.f32.mrb[0].mxu0
        %v412 = vadd.f32 0.0, %v411
        %413 = vdwg.mxu0
        %v416 = vcombine.low %v410, %v412
        %418 = vst [vmem:[#allocation2] sm:$0x33] %v416
        %v419 = vld [vmem:[%s206] sm:$0xc]
        %v420 = vld [vmem:[%s206 + $0x8] sm:$0xc]
        %v421 = vld [vmem:[%s206] sm:$0xc0]
        %v422 = vld [vmem:[%s206 + $0x8] sm:$0xc0]
        %v423 = vld [vmem:[%s206 + $0x10] sm:$0xc]
        %v424 = vld [vmem:[%s206 + $0x18] sm:$0xc]
        %v425 = vmul.f32 %v419, %v419
        %v426 = vmul.f32 %v420, %v420
        %vm427 = vcmask 1043458
        %v428 = vsel %vm427, %v425, 0.0
        %v429 = vsel %vm427, %v426, 0.0
        %v430 = vadd.f32 %v428, %v429
        %431 = vadd.xlane.f32.xlu0 %v430
        %v432 = vpop.xlane.xlu0 %431
        %v433 = vmax.f32 %v432, 1e-24
        %v434 = vrsqrt.pop %v433
        %v435 = vmul.f32 %v419, %v434
        %v436 = vmul.f32 %v420, %v434
        %v437 = vmul.f32 %v421, %v421
        %v438 = vmul.f32 %v422, %v422
        %vm439 = vcmask 1047558
        %v440 = vsel %vm439, %v437, 0.0
        %v441 = vsel %vm439, %v438, 0.0
        %v442 = vadd.f32 %v440, %v441
        %443 = vadd.xlane.f32.xlu0 %v442
        %v444 = vpop.xlane.xlu0 %443
        %v445 = vmax.f32 %v444, 1e-24
        %v446 = vrsqrt.pop %v445
        %v447 = vmul.f32 %v421, %v446
        %v448 = vmul.f32 %v422, %v446
        %v451 = vrot.slane %v435, 2
        %v452 = vrot.slane %v436, 2
        %v457 = vrot.slane %v447, 6
        %v458 = vrot.slane %v448, 6
        %461 = vmatprep.subr.mxu0 %v458
        %462 = vmatpush1.xpose.msra.mxu0 %v457
        %463 = vmatprep.subr.mxu0 0.0
        %464 = vmatpush1.xpose.msra.mxu0 0.0
        %465 = vmatprep.subr.mxu0 0.0
        %466 = vmatpush1.xpose.msra.mxu0 0.0
        %467 = vmatprep.subr.mxu0 0.0
        %468 = vmatpush1.xpose.msra.mxu0 0.0
        %469 = vmatprep.subr.mxu0 0.0
        %470 = vmatpush1.xpose.msra.mxu0 0.0
        %471 = vmatprep.subr.mxu0 0.0
        %472 = vmatpush1.xpose.msra.mxu0 0.0
        %473 = vmatprep.subr.mxu0 0.0
        %474 = vmatpush1.xpose.msra.mxu0 0.0
        %475 = vmatprep.subr.mxu0 0.0
        %476 = vmatpush1.xpose.msra.mxu0 0.0
        %477 = vmatprep.subr.mxu0 0.0
        %478 = vmatpush1.xpose.msra.mxu0 0.0
        %479 = vmatprep.subr.mxu0 0.0
        %480 = vmatpush1.xpose.msra.mxu0 0.0
        %481 = vmatprep.subr.mxu0 0.0
        %482 = vmatpush1.xpose.msra.mxu0 0.0
        %483 = vmatprep.subr.mxu0 0.0
        %484 = vmatpush1.xpose.msra.mxu0 0.0
        %485 = vmatprep.subr.mxu0 0.0
        %486 = vmatpush1.xpose.msra.mxu0 0.0
        %487 = vmatprep.subr.mxu0 0.0
        %488 = vmatpush1.xpose.msra.mxu0 0.0
        %489 = vmatprep.subr.mxu0 0.0
        %490 = vmatpush1.xpose.msra.mxu0 0.0
        %491 = vmatprep.subr.mxu0 0.0
        %492 = vmatpush1.xpose.msra.mxu0 0.0
        %493 = vmatprep.subr.mxu0 0.0
        %494 = vmatpush1.xpose.msra.mxu0 0.0
        %495 = vmatprep.subr.mxu0 0.0
        %496 = vmatpush1.xpose.msra.mxu0 0.0
        %497 = vmatprep.subr.mxu0 0.0
        %498 = vmatpush1.xpose.msra.mxu0 0.0
        %499 = vmatprep.subr.mxu0 0.0
        %500 = vmatpush1.xpose.msra.mxu0 0.0
        %501 = vmatprep.subr.mxu0 0.0
        %502 = vmatpush1.xpose.msra.mxu0 0.0
        %503 = vmatprep.subr.mxu0 0.0
        %504 = vmatpush1.xpose.msra.mxu0 0.0
        %505 = vmatprep.subr.mxu0 0.0
        %506 = vmatpush1.xpose.msra.mxu0 0.0
        %507 = vmatprep.subr.mxu0 0.0
        %508 = vmatpush1.xpose.msra.mxu0 0.0
        %509 = vmatprep.subr.mxu0 0.0
        %510 = vmatpush1.xpose.msra.mxu0 0.0
        %511 = vmatprep.subr.mxu0 0.0
        %512 = vmatpush1.xpose.msra.mxu0 0.0
        %513 = vmatprep.subr.mxu0 0.0
        %514 = vmatpush1.xpose.msra.mxu0 0.0
        %515 = vmatprep.subr.mxu0 0.0
        %516 = vmatpush1.xpose.msra.mxu0 0.0
        %517 = vmatprep.subr.mxu0 0.0
        %518 = vmatpush1.xpose.msra.mxu0 0.0
        %519 = vmatprep.subr.mxu0 0.0
        %520 = vmatpush1.xpose.msra.mxu0 0.0
        %521 = vmatprep.subr.mxu0 0.0
        %522 = vmatpush1.xpose.msra.mxu0 0.0
        %523 = vmatprep.subr.mxu0 0.0
        %524 = vmatpush1.xpose.msra.mxu0 0.0
        %525 = vmatprep.mubr.f32.mxu0 %v452
        %526 = vmatmul.mubr.f32.gmra.mrb[0].mxu0 %v451
        %v527 = vpop.f32.mrb[0].mxu0
        %v528 = vadd.f32 0.0, %v527
        %v529 = vpop.f32.mrb[0].mxu0
        %530 = vdwg.mxu0
        %s531 = sld [smem:[#allocation3 + $0x1]]
        %v532 = vstv %s531
        %v533 = vmul.f32 %v528, %v532
        %v534 = vsel %vm321, %v533, -inf
        %535 = vmax.xlane.f32.xlu0 %v534
        %v536 = vpop.xlane.xlu0 %535
        %v537 = vsub.f32 %v533, %v536
        %v538 = vmul.f32 %v537, 1.442695
        %v539 = vpow.pop %v538
        %v540 = vsel %vm321, %v539, 0.0
        %541 = vadd.xlane.f32.xlu0 %v540
        %v542 = vpop.xlane.xlu0 %541
        %v543 = vrcp.pop %v542
        %v544 = vmul.f32 %v539, %v543
        %v547 = vrot.slane %v423, 2
        %v548 = vrot.slane %v424, 2
        %v550 = vsel %vm333, %v544, 0
        %v552 = vsel %vm220, %v547, 0
        %v554 = vsel %vm220, %v548, 0
        %556 = vmatprep.subr.mxu0 %v554
        %557 = vmatpush1.msra.mxu0 %v552
        %558 = vmatprep.subr.mxu0 0.0
        %559 = vmatpush1.msra.mxu0 0.0
        %560 = vmatprep.subr.mxu0 0.0
        %561 = vmatpush1.msra.mxu0 0.0
        %562 = vmatprep.subr.mxu0 0.0
        %563 = vmatpush1.msra.mxu0 0.0
        %564 = vmatprep.subr.mxu0 0.0
        %565 = vmatpush1.msra.mxu0 0.0
        %566 = vmatprep.subr.mxu0 0.0
        %567 = vmatpush1.msra.mxu0 0.0
        %568 = vmatprep.subr.mxu0 0.0
        %569 = vmatpush1.msra.mxu0 0.0
        %570 = vmatprep.subr.mxu0 0.0
        %571 = vmatpush1.msra.mxu0 0.0
        %572 = vmatprep.subr.mxu0 0.0
        %573 = vmatpush1.msra.mxu0 0.0
        %574 = vmatprep.subr.mxu0 0.0
        %575 = vmatpush1.msra.mxu0 0.0
        %576 = vmatprep.subr.mxu0 0.0
        %577 = vmatpush1.msra.mxu0 0.0
        %578 = vmatprep.subr.mxu0 0.0
        %579 = vmatpush1.msra.mxu0 0.0
        %580 = vmatprep.subr.mxu0 0.0
        %581 = vmatpush1.msra.mxu0 0.0
        %582 = vmatprep.subr.mxu0 0.0
        %583 = vmatpush1.msra.mxu0 0.0
        %584 = vmatprep.subr.mxu0 0.0
        %585 = vmatpush1.msra.mxu0 0.0
        %586 = vmatprep.subr.mxu0 0.0
        %587 = vmatpush1.msra.mxu0 0.0
        %588 = vmatprep.subr.mxu0 0.0
        %589 = vmatpush1.msra.mxu0 0.0
        %590 = vmatprep.subr.mxu0 0.0
        %591 = vmatpush1.msra.mxu0 0.0
        %592 = vmatprep.subr.mxu0 0.0
        %593 = vmatpush1.msra.mxu0 0.0
        %594 = vmatprep.subr.mxu0 0.0
        %595 = vmatpush1.msra.mxu0 0.0
        %596 = vmatprep.subr.mxu0 0.0
        %597 = vmatpush1.msra.mxu0 0.0
        %598 = vmatprep.subr.mxu0 0.0
        %599 = vmatpush1.msra.mxu0 0.0
        %600 = vmatprep.subr.mxu0 0.0
        %601 = vmatpush1.msra.mxu0 0.0
        %602 = vmatprep.subr.mxu0 0.0
        %603 = vmatpush1.msra.mxu0 0.0
        %604 = vmatprep.subr.mxu0 0.0
        %605 = vmatpush1.msra.mxu0 0.0
        %606 = vmatprep.subr.mxu0 0.0
        %607 = vmatpush1.msra.mxu0 0.0
        %608 = vmatprep.subr.mxu0 0.0
        %609 = vmatpush1.msra.mxu0 0.0
        %610 = vmatprep.subr.mxu0 0.0
        %611 = vmatpush1.msra.mxu0 0.0
        %612 = vmatprep.subr.mxu0 0.0
        %613 = vmatpush1.msra.mxu0 0.0
        %614 = vmatprep.subr.mxu0 0.0
        %615 = vmatpush1.msra.mxu0 0.0
        %616 = vmatprep.subr.mxu0 0.0
        %617 = vmatpush1.msra.mxu0 0.0
        %618 = vmatprep.subr.mxu0 0.0
        %619 = vmatpush1.msra.mxu0 0.0
        %620 = vmatprep.mubr.f32.mxu0 0.0
        %621 = vmatmul.mubr.f32.gmra.mrb[0].mxu0 %v550
        %v622 = vpop.f32.mrb[0].mxu0
        %v623 = vadd.f32 0.0, %v622
        %v624 = vpop.f32.mrb[0].mxu0
        %v625 = vadd.f32 0.0, %v624
        %626 = vdwg.mxu0
        %v629 = vcombine.low %v623, %v625
        %v630 = vrot.slane %v629, 6
        %632 = vst [vmem:[#allocation2] sm:$0xcc] %v630
        %v633 = vld [vmem:[%s2] sm:$0xf]
        %v634 = vld [vmem:[#allocation2] sm:$0xff]
        %v635 = vld [vmem:[%s3] sm:$0xf]
        %637 = vset.pattern.permute.xlu0 0
        %638 = vperm.xlu0 %637, %v635
        %v639 = vpop.permute.xlu0 %638
        %v642 = vcombine.high %v634, %v634
        %vm643 = vcmask 31744
        %v645 = vsel %vm643, %v633, 0
        %vm647 = vcmask 1043456
        %v648 = vsel %vm647, %v634, 0
        %v650 = vsel %vm647, %v642, 0
        %652 = vmatprep.subr.mxu0 %v650
        %653 = vmatpush1.msra.mxu0 %v648
        %654 = vmatprep.subr.mxu0 0.0
        %655 = vmatpush1.msra.mxu0 0.0
        %656 = vmatprep.subr.mxu0 0.0
        %657 = vmatpush1.msra.mxu0 0.0
        %658 = vmatprep.subr.mxu0 0.0
        %659 = vmatpush1.msra.mxu0 0.0
        %660 = vmatprep.subr.mxu0 0.0
        %661 = vmatpush1.msra.mxu0 0.0
        %662 = vmatprep.subr.mxu0 0.0
        %663 = vmatpush1.msra.mxu0 0.0
        %664 = vmatprep.subr.mxu0 0.0
        %665 = vmatpush1.msra.mxu0 0.0
        %666 = vmatprep.subr.mxu0 0.0
        %667 = vmatpush1.msra.mxu0 0.0
        %668 = vmatprep.subr.mxu0 0.0
        %669 = vmatpush1.msra.mxu0 0.0
        %670 = vmatprep.subr.mxu0 0.0
        %671 = vmatpush1.msra.mxu0 0.0
        %672 = vmatprep.subr.mxu0 0.0
        %673 = vmatpush1.msra.mxu0 0.0
        %674 = vmatprep.subr.mxu0 0.0
        %675 = vmatpush1.msra.mxu0 0.0
        %676 = vmatprep.subr.mxu0 0.0
        %677 = vmatpush1.msra.mxu0 0.0
        %678 = vmatprep.subr.mxu0 0.0
        %679 = vmatpush1.msra.mxu0 0.0
        %680 = vmatprep.subr.mxu0 0.0
        %681 = vmatpush1.msra.mxu0 0.0
        %682 = vmatprep.subr.mxu0 0.0
        %683 = vmatpush1.msra.mxu0 0.0
        %684 = vmatprep.subr.mxu0 0.0
        %685 = vmatpush1.msra.mxu0 0.0
        %686 = vmatprep.subr.mxu0 0.0
        %687 = vmatpush1.msra.mxu0 0.0
        %688 = vmatprep.subr.mxu0 0.0
        %689 = vmatpush1.msra.mxu0 0.0
        %690 = vmatprep.subr.mxu0 0.0
        %691 = vmatpush1.msra.mxu0 0.0
        %692 = vmatprep.subr.mxu0 0.0
        %693 = vmatpush1.msra.mxu0 0.0
        %694 = vmatprep.subr.mxu0 0.0
        %695 = vmatpush1.msra.mxu0 0.0
        %696 = vmatprep.subr.mxu0 0.0
        %697 = vmatpush1.msra.mxu0 0.0
        %698 = vmatprep.subr.mxu0 0.0
        %699 = vmatpush1.msra.mxu0 0.0
        %700 = vmatprep.subr.mxu0 0.0
        %701 = vmatpush1.msra.mxu0 0.0
        %702 = vmatprep.subr.mxu0 0.0
        %703 = vmatpush1.msra.mxu0 0.0
        %704 = vmatprep.subr.mxu0 0.0
        %705 = vmatpush1.msra.mxu0 0.0
        %706 = vmatprep.subr.mxu0 0.0
        %707 = vmatpush1.msra.mxu0 0.0
        %708 = vmatprep.subr.mxu0 0.0
        %709 = vmatpush1.msra.mxu0 0.0
        %710 = vmatprep.subr.mxu0 0.0
        %711 = vmatpush1.msra.mxu0 0.0
        %712 = vmatprep.subr.mxu0 0.0
        %713 = vmatpush1.msra.mxu0 0.0
        %714 = vmatprep.subr.mxu0 0.0
        %715 = vmatpush1.msra.mxu0 0.0
        %716 = vmatprep.mubr.f32.mxu0 0.0
        %717 = vmatmul.mubr.f32.gmra.mrb[0].mxu0 %v645
        %v718 = vpop.f32.mrb[0].mxu0
        %v719 = vadd.f32 %v639, %v718
        %v720 = vpop.f32.mrb[0].mxu0
        %v721 = vadd.f32 %v639, %v720
        %722 = vdwg.mxu0
        %v725 = vcombine.low %v719, %v721
        %727 = vst [vmem:[%s211] sm:$0xff] %v725
        %p728 = scmp.lt.s32.totalorder %s16, 1
        %s729 = scalar_select %p728, %s16, 1
        %s730 = smul.addr %s729, 2
        %s731 = smul.addr %s730, 4
        %s732 = scalar_lea.vmem %s4, %s731
        // Predicated region
        $region41: #{attention_forward.5} parent=35 // pred_check
          %p733 = pneg %p123
        $region42: #{attention_forward.5} parent=35 // pred_check_branch
          %735 = sbr.rel (%p733) target = $region44
        $region43: #{attention_forward.5} parent=35 // pred_region
          _
        $region44: #{attention_forward.5} parent=35 // pred_fallthru
          _
      $region36: #{attention_forward.5} parent=5 // pred_fallthru
        _
      %p736 = scmp.le.s32.totalorder 2, %s11
      // Predicated region
      $region45: #{attention_forward.5} parent=5 // pred_check
        %p737 = pneg %p736
      $region46: #{attention_forward.5} parent=5 // pred_check_branch
        %739 = sbr.rel (%p737) target = $region48
      $region47: #{attention_forward.5} parent=5 // pred_region
        %s740 = ssub.s32 %s11, 2
        // Predicated region
        $region49: #{attention_forward.5} parent=47 // pred_check
          %p741 = pneg %p129
        $region50: #{attention_forward.5} parent=47 // pred_check_branch
          %743 = sbr.rel (%p741) target = $region52
        $region51: #{attention_forward.5} parent=47 // pred_region
          %p744 = scmp.lt.s32.totalorder %s17, 1
          %s745 = scalar_select %p744, %s17, 1
          %s746 = smul.addr %s745, 2
          %s747 = smul.addr %s746, 4
          %s748 = scalar_lea.vmem %s4, %s747
        $region52: #{attention_forward.5} parent=47 // pred_fallthru
          _
      $region48: #{attention_forward.5} parent=5 // pred_fallthru
        _
    $region6: #{attention_forward.5} parent=1 // loop_footer
      %s15 = sadd.s32 1, %s11
    $region7: #{attention_forward.5} parent=1 // loop_footer_branch
      %10 = sbr.rel target = $region3
    $region8: #{attention_forward.5} parent=1 // loop_exit
      _
    %749 = vsyncpa [#allocation4], 1
    %s750 = scalar_lea.sflag [#allocation4], 1
    %751 = vsyncpa %s750, 1

// kernel: attention_forward.4
$region0: #{attention_forward.4}
  #allocation0 [shape = 'u32[]', space=smem, size = 0x4, offset = 0x4, fixed_abs, tag = 'smem constant byte address 0x4 - core index']
  #allocation1 [shape = 'u32[144,128]{1,0:T(1,128)}', space=vmem, size = 0x12000, scoped, tag = 'internal scratch']
  #allocation2 [shape = 'f32[12,18,18]{2,1,0:T(8,128)}', space=vmem, size = 0x24000, scoped, tag = 'scratch operand']
  %s0 = inlined_call_operand.vmem [shape: f32[2,12,16,16], index: 0, kind: input, shape index: {}]
  %s1 = inlined_call_operand.vmem [shape: f32[3,3,12,1,1], index: 1, kind: input, shape index: {}]
  %s2 = inlined_call_operand.vmem [shape: f32[12,1,1], index: 2, kind: input, shape index: {}]
  %s3 = inlined_call_operand.vmem [shape: f32[2,12,16,16], index: 3, kind: output, shape index: {}]
  %s4 = sld [smem:[#allocation0]]
  $region45: #{attention_forward.4} parent=0
    _
  %s6 = ssub.s32 1, %s4
  %s7 = scalar_select 0, %s6, %s4
  loop: start=0, step=1, limit=4
  $region2: #{attention_forward.4} parent=0 // loop_pre_header
    _
  $region3: #{attention_forward.4} parent=0 // loop_header
    %s9 = sphi 0, %s13
    %p10 = scmp.ge.s32.totalorder %s9, 4
    %s19 = sphi 0, %s21
    %s22 = sphi 0, %s19
    %s23 = sphi 0, %s22
    %s39 = sphi 0, %s23
    %s43 = sphi 0, %s43
    %s45 = sphi 0, %s43
    %s46 = sphi 0, %s45
    %s60 = sphi 0, %s46
    %s64 = sphi 0, %s64
    %s66 = sphi 0, %s64
    %s67 = sphi 0, %s66
    %s81 = sphi 0, %s67
    %s87 = sphi 0, %s89
    %s90 = sphi 0, %s87
    %s91 = sphi 0, %s90
    %s107 = sphi 0, %s91
  $region4: #{attention_forward.4} parent=0 // loop_header_branch
    %12 = sbr.rel (%p10) target = $region8
  $region5: #{attention_forward.4} parent=0 // loop_body
    %s14 = ssub.s32 %s9, 1
    %s15 = ssub.s32 %s9, 2
    %s16 = sadd.s32 %s9, 1
    %s17 = ssub.s32 %s9, %s16
    %p18 = scmp.eq.s32.totalorder %s17, 0
    %s20 = sadd.s32 %s19, 1
    %s21 = scalar_select %p18, %s19, %s20
    %p24 = pneg %p18
    %p25 = scmp.eq.s32.totalorder %s9, 1
    %p26 = por %p24, %p25
    %p27 = scmp.ne.s32.totalorder %s19, %s22
    %p28 = scmp.eq.s32.totalorder %s9, 0
    %p29 = por %p27, %p28
    %p30 = scmp.ne.s32.totalorder %s19, %s22
    %p31 = scmp.eq.s32.totalorder %s14, 1
    %p32 = por %p30, %p31
    %p33 = scmp.ne.s32.totalorder %s22, %s23
    %p34 = scmp.eq.s32.totalorder %s14, 0
    %p35 = por %p33, %p34
    %p36 = scmp.ne.s32.totalorder %s22, %s23
    %p37 = scmp.eq.s32.totalorder %s15, 1
    %p38 = por %p36, %p37
    %p40 = scmp.ne.s32.totalorder %s23, %s39
    %p41 = scmp.eq.s32.totalorder %s15, 0
    %p42 = por %p40, %p41
    %s44 = sadd.s32 %s43, 1
    %p47 = scmp.eq.s32.totalorder %s9, 1
    %p48 = scmp.ne.s32.totalorder %s43, %s45
    %p49 = scmp.eq.s32.totalorder %s9, 0
    %p50 = por %p48, %p49
    %p51 = scmp.ne.s32.totalorder %s43, %s45
    %p52 = scmp.eq.s32.totalorder %s14, 1
    %p53 = por %p51, %p52
    %p54 = scmp.ne.s32.totalorder %s45, %s46
    %p55 = scmp.eq.s32.totalorder %s14, 0
    %p56 = por %p54, %p55
    %p57 = scmp.ne.s32.totalorder %s45, %s46
    %p58 = scmp.eq.s32.totalorder %s15, 1
    %p59 = por %p57, %p58
    %p61 = scmp.ne.s32.totalorder %s46, %s60
    %p62 = scmp.eq.s32.totalorder %s15, 0
    %p63 = por %p61, %p62
    %s65 = sadd.s32 %s64, 1
    %p68 = scmp.eq.s32.totalorder %s9, 1
    %p69 = scmp.ne.s32.totalorder %s64, %s66
    %p70 = scmp.eq.s32.totalorder %s9, 0
    %p71 = por %p69, %p70
    %p72 = scmp.ne.s32.totalorder %s64, %s66
    %p73 = scmp.eq.s32.totalorder %s14, 1
    %p74 = por %p72, %p73
    %p75 = scmp.ne.s32.totalorder %s66, %s67
    %p76 = scmp.eq.s32.totalorder %s14, 0
    %p77 = por %p75, %p76
    %p78 = scmp.ne.s32.totalorder %s66, %s67
    %p79 = scmp.eq.s32.totalorder %s15, 1
    %p80 = por %p78, %p79
    %p82 = scmp.ne.s32.totalorder %s67, %s81
    %p83 = scmp.eq.s32.totalorder %s15, 0
    %p84 = por %p82, %p83
    %s85 = ssub.s32 %s9, %s16
    %p86 = scmp.eq.s32.totalorder %s85, 0
    %s88 = sadd.s32 %s87, 1
    %s89 = scalar_select %p86, %s87, %s88
    %p92 = pneg %p86
    %p93 = scmp.eq.s32.totalorder %s9, 1
    %p94 = por %p92, %p93
    %p95 = scmp.ne.s32.totalorder %s87, %s90
    %p96 = scmp.eq.s32.totalorder %s9, 0
    %p97 = por %p95, %p96
    %p98 = scmp.ne.s32.totalorder %s87, %s90
    %p99 = scmp.eq.s32.totalorder %s14, 1
    %p100 = por %p98, %p99
    %p101 = scmp.ne.s32.totalorder %s90, %s91
    %p102 = scmp.eq.s32.totalorder %s14, 0
    %p103 = por %p101, %p102
    %p104 = scmp.ne.s32.totalorder %s90, %s91
    %p105 = scmp.eq.s32.totalorder %s15, 1
    %p106 = por %p104, %p105
    %p108 = scmp.ne.s32.totalorder %s91, %s107
    %p109 = scmp.eq.s32.totalorder %s15, 0
    %p110 = por %p108, %p109
    %p111 = scmp.le.s32.totalorder 1, %s9
    %p112 = scmp.lt.s32.totalorder %s9, 3
    %p113 = pnand %p111, %p112
    %p114 = pneg %p113
    // Predicated region
    $region9: #{attention_forward.4} parent=5 // pred_check
      _
    $region10: #{attention_forward.4} parent=5 // pred_check_branch
      %116 = sbr.rel (%p113) target = $region12
    $region11: #{attention_forward.4} parent=5 // pred_region
      %s117 = ssub.s32 %s9, 1
      // Predicated region
      $region13: #{attention_forward.4} parent=11 // pred_check
        %p118 = pneg %p56
      $region14: #{attention_forward.4} parent=11 // pred_check_branch
        %120 = sbr.rel (%p118) target = $region16
      $region15: #{attention_forward.4} parent=11 // pred_region
        _
      $region16: #{attention_forward.4} parent=11 // pred_fallthru
        _
      // Predicated region
      $region17: #{attention_forward.4} parent=11 // pred_check
        %p121 = pneg %p77
      $region18: #{attention_forward.4} parent=11 // pred_check_branch
        %123 = sbr.rel (%p121) target = $region20
      $region19: #{attention_forward.4} parent=11 // pred_region
        _
      $region20: #{attention_forward.4} parent=11 // pred_fallthru
        _
    $region12: #{attention_forward.4} parent=5 // pred_fallthru
      _
    %p124 = scmp.lt.s32.totalorder %s9, 2
    // Predicated region
    $region21: #{attention_forward.4} parent=5 // pred_check
      %p125 = pneg %p124
    $region22: #{attention_forward.4} parent=5 // pred_check_branch
      %127 = sbr.rel (%p125) target = $region24
    $region23: #{attention_forward.4} parent=5 // pred_region
      // Predicated region
      $region25: #{attention_forward.4} parent=23 // pred_check
        %p128 = pneg %p29
      $region26: #{attention_forward.4} parent=23 // pred_check_branch
        %130 = sbr.rel (%p128) target = $region28
      $region27: #{attention_forward.4} parent=23 // pred_region
        %p131 = scmp.lt.s32.totalorder %s9, 1
        %s132 = scalar_select %p131, %s9, 1
        %s133 = smul.addr %s132, 24
        %s134 = smul.addr %s133, 8
        %s135 = scalar_lea.vmem %s0, %s134
      $region28: #{attention_forward.4} parent=23 // pred_fallthru
        _
    $region24: #{attention_forward.4} parent=5 // pred_fallthru
      _
    %p136 = scmp.le.s32.totalorder 1, %s9
    %p137 = scmp.lt.s32.totalorder %s9, 3
    %p138 = pnand %p136, %p137
    %p139 = pneg %p138
    // Predicated region
    $region29: #{attention_forward.4} parent=5 // pred_check
      _
    $region30: #{attention_forward.4} parent=5 // pred_check_branch
      %141 = sbr.rel (%p138) target = $region32
    $region31: #{attention_forward.4} parent=5 // pred_region
      %s142 = ssub.s32 %s9, 1
      %p143 = scmp.lt.s32.totalorder %s14, 1
      %s144 = scalar_select %p143, %s14, 1
      %s145 = smul.addr %s144, 24
      %s146 = smul.addr %s145, 8
      %s147 = scalar_lea.vmem %s0, %s146
      %p148 = pneg %p35
      %p149 = pneg %p32
      %p150 = pneg %p56
      %p151 = pneg %p53
      %p152 = pneg %p77
      %p153 = pneg %p74
      %p154 = pneg %p103
      %p155 = pneg %p100
      %p156 = scmp.lt.s32.totalorder %s14, 1
      %s157 = scalar_select %p156, %s14, 1
      %s158 = smul.addr %s157, 24
      %s159 = smul.addr %s158, 8
      %s160 = scalar_lea.vmem %s3, %s159
      %p161 = scmp.lt.s32.totalorder %s14, 1
      %s162 = scalar_select %p161, %s14, 1
      %s163 = smul.addr %s162, 24
      %s164 = smul.addr %s163, 8
      %s165 = scalar_lea.vmem %s0, %s164
      %p166 = scmp.lt.s32.totalorder %s14, 1
      %s167 = scalar_select %p166, %s14, 1
      %s168 = smul.addr %s167, 24
      %s169 = smul.addr %s168, 8
      %s170 = scalar_lea.vmem %s3, %s169
      %vm171 = vcmask 146432
      %172 = vst.msk [vmem:[#allocation2] sm:$0xff] %vm171, 0.0
      %173 = vst.msk [vmem:[#allocation2 + $0x8] sm:$0xff] %vm171, 0.0
      %vm174 = vcmask 140288
      %175 = vst.msk [vmem:[#allocation2 + $0x10] sm:$0x3] %vm174, 0.0
      %176 = vst.msk [vmem:[#allocation2 + $0x18] sm:$0xff] %vm171, 0.0
      %177 = vst.msk [vmem:[#allocation2 + $0x20] sm:$0xff] %vm171, 0.0
      %178 = vst.msk [vmem:[#allocation2 + $0x28] sm:$0x3] %vm174, 0.0
      %179 = vst.msk [vmem:[#allocation2 + $0x30] sm:$0xff] %vm171, 0.0
      %180 = vst.msk [vmem:[#allocation2 + $0x38] sm:$0xff] %vm171, 0.0
      %181 = vst.msk [vmem:[#allocation2 + $0x40] sm:$0x3] %vm174, 0.0
      %182 = vst.msk [vmem:[#allocation2 + $0x48] sm:$0xff] %vm171, 0.0
      %183 = vst.msk [vmem:[#allocation2 + $0x50] sm:$0xff] %vm171, 0.0
      %184 = vst.msk [vmem:[#allocation2 + $0x58] sm:$0x3] %vm174, 0.0
      %185 = vst.msk [vmem:[#allocation2 + $0x60] sm:$0xff] %vm171, 0.0
      %186 = vst.msk [vmem:[#allocation2 + $0x68] sm:$0xff] %vm171, 0.0
      %187 = vst.msk [vmem:[#allocation2 + $0x70] sm:$0x3] %vm174, 0.0
      %188 = vst.msk [vmem:[#allocation2 + $0x78] sm:$0xff] %vm171, 0.0
      %189 = vst.msk [vmem:[#allocation2 + $0x80] sm:$0xff] %vm171, 0.0
      %190 = vst.msk [vmem:[#allocation2 + $0x88] sm:$0x3] %vm174, 0.0
      %191 = vst.msk [vmem:[#allocation2 + $0x90] sm:$0xff] %vm171, 0.0
      %192 = vst.msk [vmem:[#allocation2 + $0x98] sm:$0xff] %vm171, 0.0
      %193 = vst.msk [vmem:[#allocation2 + $0xa0] sm:$0x3] %vm174, 0.0
      %194 = vst.msk [vmem:[#allocation2 + $0xa8] sm:$0xff] %vm171, 0.0
      %195 = vst.msk [vmem:[#allocation2 + $0xb0] sm:$0xff] %vm171, 0.0
      %196 = vst.msk [vmem:[#allocation2 + $0xb8] sm:$0x3] %vm174, 0.0
      %197 = vst.msk [vmem:[#allocation2 + $0xc0] sm:$0xff] %vm171, 0.0
      %198 = vst.msk [vmem:[#allocation2 + $0xc8] sm:$0xff] %vm171, 0.0
      %199 = vst.msk [vmem:[#allocation2 + $0xd0] sm:$0x3] %vm174, 0.0
      %200 = vst.msk [vmem:[#allocation2 + $0xd8] sm:$0xff] %vm171, 0.0
      %201 = vst.msk [vmem:[#allocation2 + $0xe0] sm:$0xff] %vm171, 0.0
      %202 = vst.msk [vmem:[#allocation2 + $0xe8] sm:$0x3] %vm174, 0.0
      %203 = vst.msk [vmem:[#allocation2 + $0xf0] sm:$0xff] %vm171, 0.0
      %204 = vst.msk [vmem:[#allocation2 + $0xf8] sm:$0xff] %vm171, 0.0
      %205 = vst.msk [vmem:[#allocation2 + $0x100] sm:$0x3] %vm174, 0.0
      %206 = vst.msk [vmem:[#allocation2 + $0x108] sm:$0xff] %vm171, 0.0
      %207 = vst.msk [vmem:[#allocation2 + $0x110] sm:$0xff] %vm171, 0.0
      %208 = vst.msk [vmem:[#allocation2 + $0x118] sm:$0x3] %vm174, 0.0
      %v209 = vld [vmem:[%s165] sm:$0xff]
      %v210 = vld [vmem:[%s165 + $0x8] sm:$0xff]
      %v211 = vld [vmem:[%s165 + $0x10] sm:$0xff]
      %v212 = vld [vmem:[%s165 + $0x18] sm:$0xff]
      %v213 = vld [vmem:[%s165 + $0x20] sm:$0xff]
      %v214 = vld [vmem:[%s165 + $0x28] sm:$0xff]
      %v215 = vld [vmem:[%s165 + $0x30] sm:$0xff]
      %v216 = vld [vmem:[%s165 + $0x38] sm:$0xff]
      %v217 = vld [vmem:[%s165 + $0x40] sm:$0xff]
      %v218 = vld [vmem:[%s165 + $0x48] sm:$0xff]
      %v219 = vld [vmem:[%s165 + $0x50] sm:$0xff]
      %v220 = vld [vmem:[%s165 + $0x58] sm:$0xff]
      %v221 = vld [vmem:[%s165 + $0x60] sm:$0xff]
      %v222 = vld [vmem:[%s165 + $0x68] sm:$0xff]
      %v223 = vld [vmem:[%s165 + $0x70] sm:$0xff]
      %v224 = vld [vmem:[%s165 + $0x78] sm:$0xff]
      %v225 = vld [vmem:[%s165 + $0x80] sm:$0xff]
      %v226 = vld [vmem:[%s165 + $0x88] sm:$0xff]
      %v227 = vld [vmem:[%s165 + $0x90] sm:$0xff]
      %v228 = vld [vmem:[%s165 + $0x98] sm:$0xff]
      %v229 = vld [vmem:[%s165 + $0xa0] sm:$0xff]
      %v230 = vld [vmem:[%s165 + $0xa8] sm:$0xff]
      %v231 = vld [vmem:[%s165 + $0xb0] sm:$0xff]
      %v232 = vld [vmem:[%s165 + $0xb8] sm:$0xff]
      %257 = vrot.lane.b32.xlu0 %v209, 1
      %v258 = vpop.permute.xlu0 %257
      %259 = vrot.lane.b32.xlu0 %v210, 1
      %v260 = vpop.permute.xlu0 %259
      %261 = vrot.lane.b32.xlu0 %v211, 1
      %v262 = vpop.permute.xlu0 %261
      %263 = vrot.lane.b32.xlu0 %v212, 1
      %v264 = vpop.permute.xlu0 %263
      %265 = vrot.lane.b32.xlu0 %v213, 1
      %v266 = vpop.permute.xlu0 %265
      %267 = vrot.lane.b32.xlu0 %v214, 1
      %v268 = vpop.permute.xlu0 %267
      %269 = vrot.lane.b32.xlu0 %v215, 1
      %v270 = vpop.permute.xlu0 %269
      %271 = vrot.lane.b32.xlu0 %v216, 1
      %v272 = vpop.permute.xlu0 %271
      %273 = vrot.lane.b32.xlu0 %v217, 1
      %v274 = vpop.permute.xlu0 %273
      %275 = vrot.lane.b32.xlu0 %v218, 1
      %v276 = vpop.permute.xlu0 %275
      %277 = vrot.lane.b32.xlu0 %v219, 1
      %v278 = vpop.permute.xlu0 %277
      %279 = vrot.lane.b32.xlu0 %v220, 1
      %v280 = vpop.permute.xlu0 %279
      %281 = vrot.lane.b32.xlu0 %v221, 1
      %v282 = vpop.permute.xlu0 %281
      %283 = vrot.lane.b32.xlu0 %v222, 1
      %v284 = vpop.permute.xlu0 %283
      %285 = vrot.lane.b32.xlu0 %v223, 1
      %v286 = vpop.permute.xlu0 %285
      %287 = vrot.lane.b32.xlu0 %v224, 1
      %v288 = vpop.permute.xlu0 %287
      %289 = vrot.lane.b32.xlu0 %v225, 1
      %v290 = vpop.permute.xlu0 %289
      %291 = vrot.lane.b32.xlu0 %v226, 1
      %v292 = vpop.permute.xlu0 %291
      %293 = vrot.lane.b32.xlu0 %v227, 1
      %v294 = vpop.permute.xlu0 %293
      %295 = vrot.lane.b32.xlu0 %v228, 1
      %v296 = vpop.permute.xlu0 %295
      %297 = vrot.lane.b32.xlu0 %v229, 1
      %v298 = vpop.permute.xlu0 %297
      %299 = vrot.lane.b32.xlu0 %v230, 1
      %v300 = vpop.permute.xlu0 %299
      %301 = vrot.lane.b32.xlu0 %v231, 1
      %v302 = vpop.permute.xlu0 %301
      %303 = vrot.lane.b32.xlu0 %v232, 1
      %v304 = vpop.permute.xlu0 %303
      %vm329 = vcmask 138248
      %330 = vst.msk [vmem:[#allocation2 + $0x1] sm:$0xff] %vm329, %v258
      %331 = vst.msk [vmem:[#allocation2 + $0x9] sm:$0xff] %vm329, %v260
      %332 = vst.msk [vmem:[#allocation2 + $0x19] sm:$0xff] %vm329, %v262
      %333 = vst.msk [vmem:[#allocation2 + $0x21] sm:$0xff] %vm329, %v264
      %334 = vst.msk [vmem:[#allocation2 + $0x31] sm:$0xff] %vm329, %v266
      %335 = vst.msk [vmem:[#allocation2 + $0x39] sm:$0xff] %vm329, %v268
      %336 = vst.msk [vmem:[#allocation2 + $0x49] sm:$0xff] %vm329, %v270
      %337 = vst.msk [vmem:[#allocation2 + $0x51] sm:$0xff] %vm329, %v272
      %338 = vst.msk [vmem:[#allocation2 + $0x61] sm:$0xff] %vm329, %v274
      %339 = vst.msk [vmem:[#allocation2 + $0x69] sm:$0xff] %vm329, %v276
      %340 = vst.msk [vmem:[#allocation2 + $0x79] sm:$0xff] %vm329, %v278
      %341 = vst.msk [vmem:[#allocation2 + $0x81] sm:$0xff] %vm329, %v280
      %342 = vst.msk [vmem:[#allocation2 + $0x91] sm:$0xff] %vm329, %v282
      %343 = vst.msk [vmem:[#allocation2 + $0x99] sm:$0xff] %vm329, %v284
      %344 = vst.msk [vmem:[#allocation2 + $0xa9] sm:$0xff] %vm329, %v286
      %345 = vst.msk [vmem:[#allocation2 + $0xb1] sm:$0xff] %vm329, %v288
      %346 = vst.msk [vmem:[#allocation2 + $0xc1] sm:$0xff] %vm329, %v290
      %347 = vst.msk [vmem:[#allocation2 + $0xc9] sm:$0xff] %vm329, %v292
      %348 = vst.msk [vmem:[#allocation2 + $0xd9] sm:$0xff] %vm329, %v294
      %349 = vst.msk [vmem:[#allocation2 + $0xe1] sm:$0xff] %vm329, %v296
      %350 = vst.msk [vmem:[#allocation2 + $0xf1] sm:$0xff] %vm329, %v298
      %351 = vst.msk [vmem:[#allocation2 + $0xf9] sm:$0xff] %vm329, %v300
      %352 = vst.msk [vmem:[#allocation2 + $0x109] sm:$0xff] %vm329, %v302
      %353 = vst.msk [vmem:[#allocation2 + $0x111] sm:$0xff] %vm329, %v304
      %v354 = vld [vmem:[#allocation2] sm:$0xff]
      %v355 = vld [vmem:[#allocation2 + $0x8] sm:$0xff]
      %v356 = vld [vmem:[#allocation2 + $0x18] sm:$0xff]
      %v357 = vld [vmem:[#allocation2 + $0x20] sm:$0xff]
      %v358 = vld [vmem:[#allocation2 + $0x30] sm:$0xff]
      %v359 = vld [vmem:[#allocation2 + $0x38] sm:$0xff]
      %v360 = vld [vmem:[#allocation2 + $0x48] sm:$0xff]
      %v361 = vld [vmem:[#allocation2 + $0x50] sm:$0xff]
      %v362 = vld [vmem:[#allocation2 + $0x60] sm:$0xff]
      %v363 = vld [vmem:[#allocation2 + $0x68] sm:$0xff]
      %v364 = vld [vmem:[#allocation2 + $0x78] sm:$0xff]
      %v365 = vld [vmem:[#allocation2 + $0x80] sm:$0xff]
      %v366 = vld [vmem:[#allocation2 + $0x90] sm:$0xff]
      %v367 = vld [vmem:[#allocation2 + $0x98] sm:$0xff]
      %v368 = vld [vmem:[#allocation2 + $0xa8] sm:$0xff]
      %v369 = vld [vmem:[#allocation2 + $0xb0] sm:$0xff]
      %v370 = vld [vmem:[#allocation2 + $0xc0] sm:$0xff]
      %v371 = vld [vmem:[#allocation2 + $0xc8] sm:$0xff]
      %v372 = vld [vmem:[#allocation2 + $0xd8] sm:$0xff]
      %v373 = vld [vmem:[#allocation2 + $0xe0] sm:$0xff]
      %v374 = vld [vmem:[#allocation2 + $0xf0] sm:$0xff]
      %v375 = vld [vmem:[#allocation2 + $0xf8] sm:$0xff]
      %v376 = vld [vmem:[#allocation2 + $0x108] sm:$0xff]
      %v377 = vld [vmem:[#allocation2 + $0x110] sm:$0xff]
      %v378 = vld [vmem:[%s1] sm:$0x1]
      %v379 = vld [vmem:[%s1 + $0x1] sm:$0x1]
      %v380 = vld [vmem:[%s1 + $0x2] sm:$0x1]
      %v381 = vld [vmem:[%s1 + $0x3] sm:$0x1]
      %v382 = vld [vmem:[%s1 + $0x4] sm:$0x1]
      %v383 = vld [vmem:[%s1 + $0x5] sm:$0x1]
      %v384 = vld [vmem:[%s1 + $0x6] sm:$0x1]
      %v385 = vld [vmem:[%s1 + $0x7] sm:$0x1]
      %v386 = vld [vmem:[%s1 + $0x8] sm:$0x1]
      %v387 = vld [vmem:[%s1 + $0x9] sm:$0x1]
      %v388 = vld [vmem:[%s1 + $0xa] sm:$0x1]
      %v389 = vld [vmem:[%s1 + $0xb] sm:$0x1]
      %v402 = vlaneseq
      %v403 = vshrl.u32 %v402, 7
      %v404 = vsub.s32 0, %v403
      %v405 = vrot.slane %v378, %v404
      %v406 = vlaneseq
      %v407 = vshrl.u32 %v406, 7
      %v408 = vsub.s32 0, %v407
      %v409 = vrot.slane %v379, %v408
      %v410 = vlaneseq
      %v411 = vshrl.u32 %v410, 7
      %v412 = vsub.s32 0, %v411
      %v413 = vrot.slane %v380, %v412
      %v414 = vlaneseq
      %v415 = vshrl.u32 %v414, 7
      %v416 = vsub.s32 0, %v415
      %v417 = vrot.slane %v381, %v416
      %v418 = vlaneseq
      %v419 = vshrl.u32 %v418, 7
      %v420 = vsub.s32 0, %v419
      %v421 = vrot.slane %v382, %v420
      %v422 = vlaneseq
      %v423 = vshrl.u32 %v422, 7
      %v424 = vsub.s32 0, %v423
      %v425 = vrot.slane %v383, %v424
      %v426 = vlaneseq
      %v427 = vshrl.u32 %v426, 7
      %v428 = vsub.s32 0, %v427
      %v429 = vrot.slane %v384, %v428
      %v430 = vlaneseq
      %v431 = vshrl.u32 %v430, 7
      %v432 = vsub.s32 0, %v431
      %v433 = vrot.slane %v385, %v432
      %v434 = vlaneseq
      %v435 = vshrl.u32 %v434, 7
      %v436 = vsub.s32 0, %v435
      %v437 = vrot.slane %v386, %v436
      %v438 = vlaneseq
      %v439 = vshrl.u32 %v438, 7
      %v440 = vsub.s32 0, %v439
      %v441 = vrot.slane %v387, %v440
      %v442 = vlaneseq
      %v443 = vshrl.u32 %v442, 7
      %v444 = vsub.s32 0, %v443
      %v445 = vrot.slane %v388, %v444
      %v446 = vlaneseq
      %v447 = vshrl.u32 %v446, 7
      %v448 = vsub.s32 0, %v447
      %v449 = vrot.slane %v389, %v448
      %450 = vset.pattern.permute.xlu0 0
      %451 = vperm.xlu0 %450, %v405
      %v452 = vpop.permute.xlu0 %451
      %454 = vset.pattern.permute.xlu0 0
      %455 = vperm.xlu0 %454, %v409
      %v456 = vpop.permute.xlu0 %455
      %458 = vset.pattern.permute.xlu0 0
      %459 = vperm.xlu0 %458, %v413
      %v460 = vpop.permute.xlu0 %459
      %462 = vset.pattern.permute.xlu0 0
      %463 = vperm.xlu0 %462, %v417
      %v464 = vpop.permute.xlu0 %463
      %466 = vset.pattern.permute.xlu0 0
      %467 = vperm.xlu0 %466, %v421
      %v468 = vpop.permute.xlu0 %467
      %470 = vset.pattern.permute.xlu0 0
      %471 = vperm.xlu0 %470, %v425
      %v472 = vpop.permute.xlu0 %471
      %474 = vset.pattern.permute.xlu0 0
      %475 = vperm.xlu0 %474, %v429
      %v476 = vpop.permute.xlu0 %475
      %478 = vset.pattern.permute.xlu0 0
      %479 = vperm.xlu0 %478, %v433
      %v480 = vpop.permute.xlu0 %479
      %482 = vset.pattern.permute.xlu0 0
      %483 = vperm.xlu0 %482, %v437
      %v484 = vpop.permute.xlu0 %483
      %486 = vset.pattern.permute.xlu0 0
      %487 = vperm.xlu0 %486, %v441
      %v488 = vpop.permute.xlu0 %487
      %490 = vset.pattern.permute.xlu0 0
      %491 = vperm.xlu0 %490, %v445
      %v492 = vpop.permute.xlu0 %491
      %494 = vset.pattern.permute.xlu0 0
      %495 = vperm.xlu0 %494, %v449
      %v496 = vpop.permute.xlu0 %495
      %v498 = vmul.f32 %v354, %v452
      %v499 = vmul.f32 %v355, %v452
      %v500 = vmul.f32 %v356, %v456
      %v501 = vmul.f32 %v357, %v456
      %v502 = vmul.f32 %v358, %v460
      %v503 = vmul.f32 %v359, %v460
      %v504 = vmul.f32 %v360, %v464
      %v505 = vmul.f32 %v361, %v464
      %v506 = vmul.f32 %v362, %v468
      %v507 = vmul.f32 %v363, %v468
      %v508 = vmul.f32 %v364, %v472
      %v509 = vmul.f32 %v365, %v472
      %v510 = vmul.f32 %v366, %v476
      %v511 = vmul.f32 %v367, %v476
      %v512 = vmul.f32 %v368, %v480
      %v513 = vmul.f32 %v369, %v480
      %v514 = vmul.f32 %v370, %v484
      %v515 = vmul.f32 %v371, %v484
      %v516 = vmul.f32 %v372, %v488
      %v517 = vmul.f32 %v373, %v488
      %v518 = vmul.f32 %v374, %v492
      %v519 = vmul.f32 %v375, %v492
      %v520 = vmul.f32 %v376, %v496
      %v521 = vmul.f32 %v377, %v496
      %v522 = vadd.f32 %v498, 0.0
      %v523 = vadd.f32 %v499, 0.0
      %v524 = vadd.f32 %v500, 0.0
      %v525 = vadd.f32 %v501, 0.0
      %v526 = vadd.f32 %v502, 0.0
      %v527 = vadd.f32 %v503, 0.0
      %v528 = vadd.f32 %v504, 0.0
      %v529 = vadd.f32 %v505, 0.0
      %v530 = vadd.f32 %v506, 0.0
      %v531 = vadd.f32 %v507, 0.0
      %v532 = vadd.f32 %v508, 0.0
      %v533 = vadd.f32 %v509, 0.0
      %v534 = vadd.f32 %v510, 0.0
      %v535 = vadd.f32 %v511, 0.0
      %v536 = vadd.f32 %v512, 0.0
      %v537 = vadd.f32 %v513, 0.0
      %v538 = vadd.f32 %v514, 0.0
      %v539 = vadd.f32 %v515, 0.0
      %v540 = vadd.f32 %v516, 0.0
      %v541 = vadd.f32 %v517, 0.0
      %v542 = vadd.f32 %v518, 0.0
      %v543 = vadd.f32 %v519, 0.0
      %v544 = vadd.f32 %v520, 0.0
      %v545 = vadd.f32 %v521, 0.0
      %s546 = scalar_lea.vmem %s1, 12
      %v547 = vld [vmem:[%s546] sm:$0x1]
      %v548 = vld [vmem:[%s546 + $0x1] sm:$0x1]
      %v549 = vld [vmem:[%s546 + $0x2] sm:$0x1]
      %v550 = vld [vmem:[%s546 + $0x3] sm:$0x1]
      %v551 = vld [vmem:[%s546 + $0x4] sm:$0x1]
      %v552 = vld [vmem:[%s546 + $0x5] sm:$0x1]
      %v553 = vld [vmem:[%s546 + $0x6] sm:$0x1]
      %v554 = vld [vmem:[%s546 + $0x7] sm:$0x1]
      %v555 = vld [vmem:[%s546 + $0x8] sm:$0x1]
      %v556 = vld [vmem:[%s546 + $0x9] sm:$0x1]
      %v557 = vld [vmem:[%s546 + $0xa] sm:$0x1]
      %v558 = vld [vmem:[%s546 + $0xb] sm:$0x1]
      %v571 = vlaneseq
      %v572 = vshrl.u32 %v571, 7
      %v573 = vsub.s32 0, %v572
      %v574 = vrot.slane %v547, %v573
      %v575 = vlaneseq
      %v576 = vshrl.u32 %v575, 7
      %v577 = vsub.s32 0, %v576
      %v578 = vrot.slane %v548, %v577
      %v579 = vlaneseq
      %v580 = vshrl.u32 %v579, 7
      %v581 = vsub.s32 0, %v580
      %v582 = vrot.slane %v549, %v581
      %v583 = vlaneseq
      %v584 = vshrl.u32 %v583, 7
      %v585 = vsub.s32 0, %v584
      %v586 = vrot.slane %v550, %v585
      %v587 = vlaneseq
      %v588 = vshrl.u32 %v587, 7
      %v589 = vsub.s32 0, %v588
      %v590 = vrot.slane %v551, %v589
      %v591 = vlaneseq
      %v592 = vshrl.u32 %v591, 7
      %v593 = vsub.s32 0, %v592
      %v594 = vrot.slane %v552, %v593
      %v595 = vlaneseq
      %v596 = vshrl.u32 %v595, 7
      %v597 = vsub.s32 0, %v596
      %v598 = vrot.slane %v553, %v597
      %v599 = vlaneseq
      %v600 = vshrl.u32 %v599, 7
      %v601 = vsub.s32 0, %v600
      %v602 = vrot.slane %v554, %v601
      %v603 = vlaneseq
      %v604 = vshrl.u32 %v603, 7
      %v605 = vsub.s32 0, %v604
      %v606 = vrot.slane %v555, %v605
      %v607 = vlaneseq
      %v608 = vshrl.u32 %v607, 7
      %v609 = vsub.s32 0, %v608
      %v610 = vrot.slane %v556, %v609
      %v611 = vlaneseq
      %v612 = vshrl.u32 %v611, 7
      %v613 = vsub.s32 0, %v612
      %v614 = vrot.slane %v557, %v613
      %v615 = vlaneseq
      %v616 = vshrl.u32 %v615, 7
      %v617 = vsub.s32 0, %v616
      %v618 = vrot.slane %v558, %v617
      %619 = vset.pattern.permute.xlu0 0
      %620 = vperm.xlu0 %619, %v574
      %v621 = vpop.permute.xlu0 %620
      %623 = vset.pattern.permute.xlu0 0
      %624 = vperm.xlu0 %623, %v578
      %v625 = vpop.permute.xlu0 %624
      %627 = vset.pattern.permute.xlu0 0
      %628 = vperm.xlu0 %627, %v582
      %v629 = vpop.permute.xlu0 %628
      %631 = vset.pattern.permute.xlu0 0
      %632 = vperm.xlu0 %631, %v586
      %v633 = vpop.permute.xlu0 %632
      %635 = vset.pattern.permute.xlu0 0
      %636 = vperm.xlu0 %635, %v590
      %v637 = vpop.permute.xlu0 %636
      %639 = vset.pattern.permute.xlu0 0
      %640 = vperm.xlu0 %639, %v594
      %v641 = vpop.permute.xlu0 %640
      %643 = vset.pattern.permute.xlu0 0
      %644 = vperm.xlu0 %643, %v598
      %v645 = vpop.permute.xlu0 %644
      %647 = vset.pattern.permute.xlu0 0
      %648 = vperm.xlu0 %647, %v602
      %v649 = vpop.permute.xlu0 %648
      %651 = vset.pattern.permute.xlu0 0
      %652 = vperm.xlu0 %651, %v606
      %v653 = vpop.permute.xlu0 %652
      %655 = vset.pattern.permute.xlu0 0
      %656 = vperm.xlu0 %655, %v610
      %v657 = vpop.permute.xlu0 %656
      %659 = vset.pattern.permute.xlu0 0
      %660 = vperm.xlu0 %659, %v614
      %v661 = vpop.permute.xlu0 %660
      %663 = vset.pattern.permute.xlu0 0
      %664 = vperm.xlu0 %663, %v618
      %v665 = vpop.permute.xlu0 %664
      %v667 = vmul.f32 %v354, %v621
      %v668 = vmul.f32 %v355, %v621
      %v669 = vmul.f32 %v356, %v625
      %v670 = vmul.f32 %v357, %v625
      %v671 = vmul.f32 %v358, %v629
      %v672 = vmul.f32 %v359, %v629
      %v673 = vmul.f32 %v360, %v633
      %v674 = vmul.f32 %v361, %v633
      %v675 = vmul.f32 %v362, %v637
      %v676 = vmul.f32 %v363, %v637
      %v677 = vmul.f32 %v364, %v641
      %v678 = vmul.f32 %v365, %v641
      %v679 = vmul.f32 %v366, %v645
      %v680 = vmul.f32 %v367, %v645
      %v681 = vmul.f32 %v368, %v649
      %v682 = vmul.f32 %v369, %v649
      %v683 = vmul.f32 %v370, %v653
      %v684 = vmul.f32 %v371, %v653
      %v685 = vmul.f32 %v372, %v657
      %v686 = vmul.f32 %v373, %v657
      %v687 = vmul.f32 %v374, %v661
      %v688 = vmul.f32 %v375, %v661
      %v689 = vmul.f32 %v376, %v665
      %v690 = vmul.f32 %v377, %v665
      %715 = vrot.lane.b32.xlu0 %v667, 127
      %v716 = vpop.permute.xlu0 %715
      %717 = vrot.lane.b32.xlu0 %v668, 127
      %v718 = vpop.permute.xlu0 %717
      %719 = vrot.lane.b32.xlu0 %v669, 127
      %v720 = vpop.permute.xlu0 %719
      %721 = vrot.lane.b32.xlu0 %v670, 127
      %v722 = vpop.permute.xlu0 %721
      %723 = vrot.lane.b32.xlu0 %v671, 127
      %v724 = vpop.permute.xlu0 %723
      %725 = vrot.lane.b32.xlu0 %v672, 127
      %v726 = vpop.permute.xlu0 %725
      %727 = vrot.lane.b32.xlu0 %v673, 127
      %v728 = vpop.permute.xlu0 %727
      %729 = vrot.lane.b32.xlu0 %v674, 127
      %v730 = vpop.permute.xlu0 %729
      %731 = vrot.lane.b32.xlu0 %v675, 127
      %v732 = vpop.permute.xlu0 %731
      %733 = vrot.lane.b32.xlu0 %v676, 127
      %v734 = vpop.permute.xlu0 %733
      %735 = vrot.lane.b32.xlu0 %v677, 127
      %v736 = vpop.permute.xlu0 %735
      %737 = vrot.lane.b32.xlu0 %v678, 127
      %v738 = vpop.permute.xlu0 %737
      %739 = vrot.lane.b32.xlu0 %v679, 127
      %v740 = vpop.permute.xlu0 %739
      %741 = vrot.lane.b32.xlu0 %v680, 127
      %v742 = vpop.permute.xlu0 %741
      %743 = vrot.lane.b32.xlu0 %v681, 127
      %v744 = vpop.permute.xlu0 %743
      %745 = vrot.lane.b32.xlu0 %v682, 127
      %v746 = vpop.permute.xlu0 %745
      %747 = vrot.lane.b32.xlu0 %v683, 127
      %v748 = vpop.permute.xlu0 %747
      %749 = vrot.lane.b32.xlu0 %v684, 127
      %v750 = vpop.permute.xlu0 %749
      %751 = vrot.lane.b32.xlu0 %v685, 127
      %v752 = vpop.permute.xlu0 %751
      %753 = vrot.lane.b32.xlu0 %v686, 127
      %v754 = vpop.permute.xlu0 %753
      %755 = vrot.lane.b32.xlu0 %v687, 127
      %v756 = vpop.permute.xlu0 %755
      %757 = vrot.lane.b32.xlu0 %v688, 127
      %v758 = vpop.permute.xlu0 %757
      %759 = vrot.lane.b32.xlu0 %v689, 127
      %v760 = vpop.permute.xlu0 %759
      %761 = vrot.lane.b32.xlu0 %v690, 127
      %v762 = vpop.permute.xlu0 %761
      %v787 = vadd.f32 %v522, %v716
      %v788 = vadd.f32 %v523, %v718
      %v789 = vadd.f32 %v524, %v720
      %v790 = vadd.f32 %v525, %v722
      %v791 = vadd.f32 %v526, %v724
      %v792 = vadd.f32 %v527, %v726
      %v793 = vadd.f32 %v528, %v728
      %v794 = vadd.f32 %v529, %v730
      %v795 = vadd.f32 %v530, %v732
      %v796 = vadd.f32 %v531, %v734
      %v797 = vadd.f32 %v532, %v736
      %v798 = vadd.f32 %v533, %v738
      %v799 = vadd.f32 %v534, %v740
      %v800 = vadd.f32 %v535, %v742
      %v801 = vadd.f32 %v536, %v744
      %v802 = vadd.f32 %v537, %v746
      %v803 = vadd.f32 %v538, %v748
      %v804 = vadd.f32 %v539, %v750
      %v805 = vadd.f32 %v540, %v752
      %v806 = vadd.f32 %v541, %v754
      %v807 = vadd.f32 %v542, %v756
      %v808 = vadd.f32 %v543, %v758
      %v809 = vadd.f32 %v544, %v760
      %v810 = vadd.f32 %v545, %v762
      %s811 = scalar_lea.vmem %s1, 24
      %v812 = vld [vmem:[%s811] sm:$0x1]
      %v813 = vld [vmem:[%s811 + $0x1] sm:$0x1]
      %v814 = vld [vmem:[%s811 + $0x2] sm:$0x1]
      %v815 = vld [vmem:[%s811 + $0x3] sm:$0x1]
      %v816 = vld [vmem:[%s811 + $0x4] sm:$0x1]
      %v817 = vld [vmem:[%s811 + $0x5] sm:$0x1]
      %v818 = vld [vmem:[%s811 + $0x6] sm:$0x1]
      %v819 = vld [vmem:[%s811 + $0x7] sm:$0x1]
      %v820 = vld [vmem:[%s811 + $0x8] sm:$0x1]
      %v821 = vld [vmem:[%s811 + $0x9] sm:$0x1]
      %v822 = vld [vmem:[%s811 + $0xa] sm:$0x1]
      %v823 = vld [vmem:[%s811 + $0xb] sm:$0x1]
      %v836 = vlaneseq
      %v837 = vshrl.u32 %v836, 7
      %v838 = vsub.s32 0, %v837
      %v839 = vrot.slane %v812, %v838
      %v840 = vlaneseq
      %v841 = vshrl.u32 %v840, 7
      %v842 = vsub.s32 0, %v841
      %v843 = vrot.slane %v813, %v842
      %v844 = vlaneseq
      %v845 = vshrl.u32 %v844, 7
      %v846 = vsub.s32 0, %v845
      %v847 = vrot.slane %v814, %v846
      %v848 = vlaneseq
      %v849 = vshrl.u32 %v848, 7
      %v850 = vsub.s32 0, %v849
      %v851 = vrot.slane %v815, %v850
      %v852 = vlaneseq
      %v853 = vshrl.u32 %v852, 7
      %v854 = vsub.s32 0, %v853
      %v855 = vrot.slane %v816, %v854
      %v856 = vlaneseq
      %v857 = vshrl.u32 %v856, 7
      %v858 = vsub.s32 0, %v857
      %v859 = vrot.slane %v817, %v858
      %v860 = vlaneseq
      %v861 = vshrl.u32 %v860, 7
      %v862 = vsub.s32 0, %v861
      %v863 = vrot.slane %v818, %v862
      %v864 = vlaneseq
      %v865 = vshrl.u32 %v864, 7
      %v866 = vsub.s32 0, %v865
      %v867 = vrot.slane %v819, %v866
      %v868 = vlaneseq
      %v869 = vshrl.u32 %v868, 7
      %v870 = vsub.s32 0, %v869
      %v871 = vrot.slane %v820, %v870
      %v872 = vlaneseq
      %v873 = vshrl.u32 %v872, 7
      %v874 = vsub.s32 0, %v873
      %v875 = vrot.slane %v821, %v874
      %v876 = vlaneseq
      %v877 = vshrl.u32 %v876, 7
      %v878 = vsub.s32 0, %v877
      %v879 = vrot.slane %v822, %v878
      %v880 = vlaneseq
      %v881 = vshrl.u32 %v880, 7
      %v882 = vsub.s32 0, %v881
      %v883 = vrot.slane %v823, %v882
      %884 = vset.pattern.permute.xlu0 0
      %885 = vperm.xlu0 %884, %v839
      %v886 = vpop.permute.xlu0 %885
      %888 = vset.pattern.permute.xlu0 0
      %889 = vperm.xlu0 %888, %v843
      %v890 = vpop.permute.xlu0 %889
      %892 = vset.pattern.permute.xlu0 0
      %893 = vperm.xlu0 %892, %v847
      %v894 = vpop.permute.xlu0 %893
      %896 = vset.pattern.permute.xlu0 0
      %897 = vperm.xlu0 %896, %v851
      %v898 = vpop.permute.xlu0 %897
      %900 = vset.pattern.permute.xlu0 0
      %901 = vperm.xlu0 %900, %v855
      %v902 = vpop.permute.xlu0 %901
      %904 = vset.pattern.permute.xlu0 0
      %905 = vperm.xlu0 %904, %v859
      %v906 = vpop.permute.xlu0 %905
      %908 = vset.pattern.permute.xlu0 0
      %909 = vperm.xlu0 %908, %v863
      %v910 = vpop.permute.xlu0 %909
      %912 = vset.pattern.permute.xlu0 0
      %913 = vperm.xlu0 %912, %v867
      %v914 = vpop.permute.xlu0 %913
      %916 = vset.pattern.permute.xlu0 0
      %917 = vperm.xlu0 %916, %v871
      %v918 = vpop.permute.xlu0 %917
      %920 = vset.pattern.permute.xlu0 0
      %921 = vperm.xlu0 %920, %v875
      %v922 = vpop.permute.xlu0 %921
      %924 = vset.pattern.permute.xlu0 0
      %925 = vperm.xlu0 %924, %v879
      %v926 = vpop.permute.xlu0 %925
      %928 = vset.pattern.permute.xlu0 0
      %929 = vperm.xlu0 %928, %v883
      %v930 = vpop.permute.xlu0 %929
      %v932 = vmul.f32 %v354, %v886
      %v933 = vmul.f32 %v355, %v886
      %v934 = vmul.f32 %v356, %v890
      %v935 = vmul.f32 %v357, %v890
      %v936 = vmul.f32 %v358, %v894
      %v937 = vmul.f32 %v359, %v894
      %v938 = vmul.f32 %v360, %v898
      %v939 = vmul.f32 %v361, %v898
      %v940 = vmul.f32 %v362, %v902
      %v941 = vmul.f32 %v363, %v902
      %v942 = vmul.f32 %v364, %v906
      %v943 = vmul.f32 %v365, %v906
      %v944 = vmul.f32 %v366, %v910
      %v945 = vmul.f32 %v367, %v910
      %v946 = vmul.f32 %v368, %v914
      %v947 = vmul.f32 %v369, %v914
      %v948 = vmul.f32 %v370, %v918
      %v949 = vmul.f32 %v371, %v918
      %v950 = vmul.f32 %v372, %v922
      %v951 = vmul.f32 %v373, %v922
      %v952 = vmul.f32 %v374, %v926
      %v953 = vmul.f32 %v375, %v926
      %v954 = vmul.f32 %v376, %v930
      %v955 = vmul.f32 %v377, %v930
      %980 = vrot.lane.b32.xlu0 %v932, 126
      %v981 = vpop.permute.xlu0 %980
      %982 = vrot.lane.b32.xlu0 %v933, 126
      %v983 = vpop.permute.xlu0 %982
      %984 = vrot.lane.b32.xlu0 %v934, 126
      %v985 = vpop.permute.xlu0 %984
      %986 = vrot.lane.b32.xlu0 %v935, 126
      %v987 = vpop.permute.xlu0 %986
      %988 = vrot.lane.b32.xlu0 %v936, 126
      %v989 = vpop.permute.xlu0 %988
      %990 = vrot.lane.b32.xlu0 %v937, 126
      %v991 = vpop.permute.xlu0 %990
      %992 = vrot.lane.b32.xlu0 %v938, 126
      %v993 = vpop.permute.xlu0 %992
      %994 = vrot.lane.b32.xlu0 %v939, 126
      %v995 = vpop.permute.xlu0 %994
      %996 = vrot.lane.b32.xlu0 %v940, 126
      %v997 = vpop.permute.xlu0 %996
      %998 = vrot.lane.b32.xlu0 %v941, 126
      %v999 = vpop.permute.xlu0 %998
      %1000 = vrot.lane.b32.xlu0 %v942, 126
      %v1001 = vpop.permute.xlu0 %1000
      %1002 = vrot.lane.b32.xlu0 %v943, 126
      %v1003 = vpop.permute.xlu0 %1002
      %1004 = vrot.lane.b32.xlu0 %v944, 126
      %v1005 = vpop.permute.xlu0 %1004
      %1006 = vrot.lane.b32.xlu0 %v945, 126
      %v1007 = vpop.permute.xlu0 %1006
      %1008 = vrot.lane.b32.xlu0 %v946, 126
      %v1009 = vpop.permute.xlu0 %1008
      %1010 = vrot.lane.b32.xlu0 %v947, 126
      %v1011 = vpop.permute.xlu0 %1010
      %1012 = vrot.lane.b32.xlu0 %v948, 126
      %v1013 = vpop.permute.xlu0 %1012
      %1014 = vrot.lane.b32.xlu0 %v949, 126
      %v1015 = vpop.permute.xlu0 %1014
      %1016 = vrot.lane.b32.xlu0 %v950, 126
      %v1017 = vpop.permute.xlu0 %1016
      %1018 = vrot.lane.b32.xlu0 %v951, 126
      %v1019 = vpop.permute.xlu0 %1018
      %1020 = vrot.lane.b32.xlu0 %v952, 126
      %v1021 = vpop.permute.xlu0 %1020
      %1022 = vrot.lane.b32.xlu0 %v953, 126
      %v1023 = vpop.permute.xlu0 %1022
      %1024 = vrot.lane.b32.xlu0 %v954, 126
      %v1025 = vpop.permute.xlu0 %1024
      %1026 = vrot.lane.b32.xlu0 %v955, 126
      %v1027 = vpop.permute.xlu0 %1026
      %v1052 = vadd.f32 %v787, %v981
      %v1053 = vadd.f32 %v788, %v983
      %v1054 = vadd.f32 %v789, %v985
      %v1055 = vadd.f32 %v790, %v987
      %v1056 = vadd.f32 %v791, %v989
      %v1057 = vadd.f32 %v792, %v991
      %v1058 = vadd.f32 %v793, %v993
      %v1059 = vadd.f32 %v794, %v995
      %v1060 = vadd.f32 %v795, %v997
      %v1061 = vadd.f32 %v796, %v999
      %v1062 = vadd.f32 %v797, %v1001
      %v1063 = vadd.f32 %v798, %v1003
      %v1064 = vadd.f32 %v799, %v1005
      %v1065 = vadd.f32 %v800, %v1007
      %v1066 = vadd.f32 %v801, %v1009
      %v1067 = vadd.f32 %v802, %v1011
      %v1068 = vadd.f32 %v803, %v1013
      %v1069 = vadd.f32 %v804, %v1015
      %v1070 = vadd.f32 %v805, %v1017
      %v1071 = vadd.f32 %v806, %v1019
      %v1072 = vadd.f32 %v807, %v1021
      %v1073 = vadd.f32 %v808, %v1023
      %v1074 = vadd.f32 %v809, %v1025
      %v1075 = vadd.f32 %v810, %v1027
      %v1076 = vld [vmem:[#allocation2 + $0x1] sm:$0xff]
      %v1077 = vld [vmem:[#allocation2 + $0x9] sm:$0xff]
      %v1078 = vld [vmem:[#allocation2 + $0x19] sm:$0xff]
      %v1079 = vld [vmem:[#allocation2 + $0x21] sm:$0xff]
      %v1080 = vld [vmem:[#allocation2 + $0x31] sm:$0xff]
      %v1081 = vld [vmem:[#allocation2 + $0x39] sm:$0xff]
      %v1082 = vld [vmem:[#allocation2 + $0x49] sm:$0xff]
      %v1083 = vld [vmem:[#allocation2 + $0x51] sm:$0xff]
      %v1084 = vld [vmem:[#allocation2 + $0x61] sm:$0xff]
      %v1085 = vld [vmem:[#allocation2 + $0x69] sm:$0xff]
      %v1086 = vld [vmem:[#allocation2 + $0x79] sm:$0xff]
      %v1087 = vld [vmem:[#allocation2 + $0x81] sm:$0xff]
      %v1088 = vld [vmem:[#allocation2 + $0x91] sm:$0xff]
      %v1089 = vld [vmem:[#allocation2 + $0x99] sm:$0xff]
      %v1090 = vld [vmem:[#allocation2 + $0xa9] sm:$0xff]
      %v1091 = vld [vmem:[#allocation2 + $0xb1] sm:$0xff]
      %v1092 = vld [vmem:[#allocation2 + $0xc1] sm:$0xff]
      %v1093 = vld [vmem:[#allocation2 + $0xc9] sm:$0xff]
      %v1094 = vld [vmem:[#allocation2 + $0xd9] sm:$0xff]
      %v1095 = vld [vmem:[#allocation2 + $0xe1] sm:$0xff]
      %v1096 = vld [vmem:[#allocation2 + $0xf1] sm:$0xff]
      %v1097 = vld [vmem:[#allocation2 + $0xf9] sm:$0xff]
      %v1098 = vld [vmem:[#allocation2 + $0x109] sm:$0xff]
      %v1099 = vld [vmem:[#allocation2 + $0x111] sm:$0xff]
      %s1100 = scalar_lea.vmem %s1, 36
      %v1101 = vld [vmem:[%s1100] sm:$0x1]
      %v1102 = vld [vmem:[%s1100 + $0x1] sm:$0x1]
      %v1103 = vld [vmem:[%s1100 + $0x2] sm:$0x1]
      %v1104 = vld [vmem:[%s1100 + $0x3] sm:$0x1]
      %v1105 = vld [vmem:[%s1100 + $0x4] sm:$0x1]
      %v1106 = vld [vmem:[%s1100 + $0x5] sm:$0x1]
      %v1107 = vld [vmem:[%s1100 + $0x6] sm:$0x1]
      %v1108 = vld [vmem:[%s1100 + $0x7] sm:$0x1]
      %v1109 = vld [vmem:[%s1100 + $0x8] sm:$0x1]
      %v1110 = vld [vmem:[%s1100 + $0x9] sm:$0x1]
      %v1111 = vld [vmem:[%s1100 + $0xa] sm:$0x1]
      %v1112 = vld [vmem:[%s1100 + $0xb] sm:$0x1]
      %v1125 = vlaneseq
      %v1126 = vshrl.u32 %v1125, 7
      %v1127 = vsub.s32 0, %v1126
      %v1128 = vrot.slane %v1101, %v1127
      %v1129 = vlaneseq
      %v1130 = vshrl.u32 %v1129, 7
      %v1131 = vsub.s32 0, %v1130
      %v1132 = vrot.slane %v1102, %v1131
      %v1133 = vlaneseq
      %v1134 = vshrl.u32 %v1133, 7
      %v1135 = vsub.s32 0, %v1134
      %v1136 = vrot.slane %v1103, %v1135
      %v1137 = vlaneseq
      %v1138 = vshrl.u32 %v1137, 7
      %v1139 = vsub.s32 0, %v1138
      %v1140 = vrot.slane %v1104, %v1139
      %v1141 = vlaneseq
      %v1142 = vshrl.u32 %v1141, 7
      %v1143 = vsub.s32 0, %v1142
      %v1144 = vrot.slane %v1105, %v1143
      %v1145 = vlaneseq
      %v1146 = vshrl.u32 %v1145, 7
      %v1147 = vsub.s32 0, %v1146
      %v1148 = vrot.slane %v1106, %v1147
      %v1149 = vlaneseq
      %v1150 = vshrl.u32 %v1149, 7
      %v1151 = vsub.s32 0, %v1150
      %v1152 = vrot.slane %v1107, %v1151
      %v1153 = vlaneseq
      %v1154 = vshrl.u32 %v1153, 7
      %v1155 = vsub.s32 0, %v1154
      %v1156 = vrot.slane %v1108, %v1155
      %v1157 = vlaneseq
      %v1158 = vshrl.u32 %v1157, 7
      %v1159 = vsub.s32 0, %v1158
      %v1160 = vrot.slane %v1109, %v1159
      %v1161 = vlaneseq
      %v1162 = vshrl.u32 %v1161, 7
      %v1163 = vsub.s32 0, %v1162
      %v1164 = vrot.slane %v1110, %v1163
      %v1165 = vlaneseq
      %v1166 = vshrl.u32 %v1165, 7
      %v1167 = vsub.s32 0, %v1166
      %v1168 = vrot.slane %v1111, %v1167
      %v1169 = vlaneseq
      %v1170 = vshrl.u32 %v1169, 7
      %v1171 = vsub.s32 0, %v1170
      %v1172 = vrot.slane %v1112, %v1171
      %1173 = vset.pattern.permute.xlu0 0
      %1174 = vperm.xlu0 %1173, %v1128
      %v1175 = vpop.permute.xlu0 %1174
      %1177 = vset.pattern.permute.xlu0 0
      %1178 = vperm.xlu0 %1177, %v1132
      %v1179 = vpop.permute.xlu0 %1178
      %1181 = vset.pattern.permute.xlu0 0
      %1182 = vperm.xlu0 %1181, %v1136
      %v1183 = vpop.permute.xlu0 %1182
      %1185 = vset.pattern.permute.xlu0 0
      %1186 = vperm.xlu0 %1185, %v1140
      %v1187 = vpop.permute.xlu0 %1186
      %1189 = vset.pattern.permute.xlu0 0
      %1190 = vperm.xlu0 %1189, %v1144
      %v1191 = vpop.permute.xlu0 %1190
      %1193 = vset.pattern.permute.xlu0 0
      %1194 = vperm.xlu0 %1193, %v1148
      %v1195 = vpop.permute.xlu0 %1194
      %1197 = vset.pattern.permute.xlu0 0
      %1198 = vperm.xlu0 %1197, %v1152
      %v1199 = vpop.permute.xlu0 %1198
      %1201 = vset.pattern.permute.xlu0 0
      %1202 = vperm.xlu0 %1201, %v1156
      %v1203 = vpop.permute.xlu0 %1202
      %1205 = vset.pattern.permute.xlu0 0
      %1206 = vperm.xlu0 %1205, %v1160
      %v1207 = vpop.permute.xlu0 %1206
      %1209 = vset.pattern.permute.xlu0 0
      %1210 = vperm.xlu0 %1209, %v1164
      %v1211 = vpop.permute.xlu0 %1210
      %1213 = vset.pattern.permute.xlu0 0
      %1214 = vperm.xlu0 %1213, %v1168
      %v1215 = vpop.permute.xlu0 %1214
      %1217 = vset.pattern.permute.xlu0 0
      %1218 = vperm.xlu0 %1217, %v1172
      %v1219 = vpop.permute.xlu0 %1218
      %v1221 = vmul.f32 %v1076, %v1175
      %v1222 = vmul.f32 %v1077, %v1175
      %v1223 = vmul.f32 %v1078, %v1179
      %v1224 = vmul.f32 %v1079, %v1179
      %v1225 = vmul.f32 %v1080, %v1183
      %v1226 = vmul.f32 %v1081, %v1183
      %v1227 = vmul.f32 %v1082, %v1187
      %v1228 = vmul.f32 %v1083, %v1187
      %v1229 = vmul.f32 %v1084, %v1191
      %v1230 = vmul.f32 %v1085, %v1191
      %v1231 = vmul.f32 %v1086, %v1195
      %v1232 = vmul.f32 %v1087, %v1195
      %v1233 = vmul.f32 %v1088, %v1199
      %v1234 = vmul.f32 %v1089, %v1199
      %v1235 = vmul.f32 %v1090, %v1203
      %v1236 = vmul.f32 %v1091, %v1203
      %v1237 = vmul.f32 %v1092, %v1207
      %v1238 = vmul.f32 %v1093, %v1207
      %v1239 = vmul.f32 %v1094, %v1211
      %v1240 = vmul.f32 %v1095, %v1211
      %v1241 = vmul.f32 %v1096, %v1215
      %v1242 = vmul.f32 %v1097, %v1215
      %v1243 = vmul.f32 %v1098, %v1219
      %v1244 = vmul.f32 %v1099, %v1219
      %v1245 = vadd.f32 %v1052, %v1221
      %v1246 = vadd.f32 %v1053, %v1222
      %v1247 = vadd.f32 %v1054, %v1223
      %v1248 = vadd.f32 %v1055, %v1224
      %v1249 = vadd.f32 %v1056, %v1225
      %v1250 = vadd.f32 %v1057, %v1226
      %v1251 = vadd.f32 %v1058, %v1227
      %v1252 = vadd.f32 %v1059, %v1228
      %v1253 = vadd.f32 %v1060, %v1229
      %v1254 = vadd.f32 %v1061, %v1230
      %v1255 = vadd.f32 %v1062, %v1231
      %v1256 = vadd.f32 %v1063, %v1232
      %v1257 = vadd.f32 %v1064, %v1233
      %v1258 = vadd.f32 %v1065, %v1234
      %v1259 = vadd.f32 %v1066, %v1235
      %v1260 = vadd.f32 %v1067, %v1236
      %v1261 = vadd.f32 %v1068, %v1237
      %v1262 = vadd.f32 %v1069, %v1238
      %v1263 = vadd.f32 %v1070, %v1239
      %v1264 = vadd.f32 %v1071, %v1240
      %v1265 = vadd.f32 %v1072, %v1241
      %v1266 = vadd.f32 %v1073, %v1242
      %v1267 = vadd.f32 %v1074, %v1243
      %v1268 = vadd.f32 %v1075, %v1244
      %s1269 = scalar_lea.vmem %s1, 48
      %v1270 = vld [vmem:[%s1269] sm:$0x1]
      %v1271 = vld [vmem:[%s1269 + $0x1] sm:$0x1]
      %v1272 = vld [vmem:[%s1269 + $0x2] sm:$0x1]
      %v1273 = vld [vmem:[%s1269 + $0x3] sm:$0x1]
      %v1274 = vld [vmem:[%s1269 + $0x4] sm:$0x1]
      %v1275 = vld [vmem:[%s1269 + $0x5] sm:$0x1]
      %v1276 = vld [vmem:[%s1269 + $0x6] sm:$0x1]
      %v1277 = vld [vmem:[%s1269 + $0x7] sm:$0x1]
      %v1278 = vld [vmem:[%s1269 + $0x8] sm:$0x1]
      %v1279 = vld [vmem:[%s1269 + $0x9] sm:$0x1]
      %v1280 = vld [vmem:[%s1269 + $0xa] sm:$0x1]
      %v1281 = vld [vmem:[%s1269 + $0xb] sm:$0x1]
      %v1294 = vlaneseq
      %v1295 = vshrl.u32 %v1294, 7
      %v1296 = vsub.s32 0, %v1295
      %v1297 = vrot.slane %v1270, %v1296
      %v1298 = vlaneseq
      %v1299 = vshrl.u32 %v1298, 7
      %v1300 = vsub.s32 0, %v1299
      %v1301 = vrot.slane %v1271, %v1300
      %v1302 = vlaneseq
      %v1303 = vshrl.u32 %v1302, 7
      %v1304 = vsub.s32 0, %v1303
      %v1305 = vrot.slane %v1272, %v1304
      %v1306 = vlaneseq
      %v1307 = vshrl.u32 %v1306, 7
      %v1308 = vsub.s32 0, %v1307
      %v1309 = vrot.slane %v1273, %v1308
      %v1310 = vlaneseq
      %v1311 = vshrl.u32 %v1310, 7
      %v1312 = vsub.s32 0, %v1311
      %v1313 = vrot.slane %v1274, %v1312
      %v1314 = vlaneseq
      %v1315 = vshrl.u32 %v1314, 7
      %v1316 = vsub.s32 0, %v1315
      %v1317 = vrot.slane %v1275, %v1316
      %v1318 = vlaneseq
      %v1319 = vshrl.u32 %v1318, 7
      %v1320 = vsub.s32 0, %v1319
      %v1321 = vrot.slane %v1276, %v1320
      %v1322 = vlaneseq
      %v1323 = vshrl.u32 %v1322, 7
      %v1324 = vsub.s32 0, %v1323
      %v1325 = vrot.slane %v1277, %v1324
      %v1326 = vlaneseq
      %v1327 = vshrl.u32 %v1326, 7
      %v1328 = vsub.s32 0, %v1327
      %v1329 = vrot.slane %v1278, %v1328
      %v1330 = vlaneseq
      %v1331 = vshrl.u32 %v1330, 7
      %v1332 = vsub.s32 0, %v1331
      %v1333 = vrot.slane %v1279, %v1332
      %v1334 = vlaneseq
      %v1335 = vshrl.u32 %v1334, 7
      %v1336 = vsub.s32 0, %v1335
      %v1337 = vrot.slane %v1280, %v1336
      %v1338 = vlaneseq
      %v1339 = vshrl.u32 %v1338, 7
      %v1340 = vsub.s32 0, %v1339
      %v1341 = vrot.slane %v1281, %v1340
      %1342 = vset.pattern.permute.xlu0 0
      %1343 = vperm.xlu0 %1342, %v1297
      %v1344 = vpop.permute.xlu0 %1343
      %1346 = vset.pattern.permute.xlu0 0
      %1347 = vperm.xlu0 %1346, %v1301
      %v1348 = vpop.permute.xlu0 %1347
      %1350 = vset.pattern.permute.xlu0 0
      %1351 = vperm.xlu0 %1350, %v1305
      %v1352 = vpop.permute.xlu0 %1351
      %1354 = vset.pattern.permute.xlu0 0
      %1355 = vperm.xlu0 %1354, %v1309
      %v1356 = vpop.permute.xlu0 %1355
      %1358 = vset.pattern.permute.xlu0 0
      %1359 = vperm.xlu0 %1358, %v1313
      %v1360 = vpop.permute.xlu0 %1359
      %1362 = vset.pattern.permute.xlu0 0
      %1363 = vperm.xlu0 %1362, %v1317
      %v1364 = vpop.permute.xlu0 %1363
      %1366 = vset.pattern.permute.xlu0 0
      %1367 = vperm.xlu0 %1366, %v1321
      %v1368 = vpop.permute.xlu0 %1367
      %1370 = vset.pattern.permute.xlu0 0
      %1371 = vperm.xlu0 %1370, %v1325
      %v1372 = vpop.permute.xlu0 %1371
      %1374 = vset.pattern.permute.xlu0 0
      %1375 = vperm.xlu0 %1374, %v1329
      %v1376 = vpop.permute.xlu0 %1375
      %1378 = vset.pattern.permute.xlu0 0
      %1379 = vperm.xlu0 %1378, %v1333
      %v1380 = vpop.permute.xlu0 %1379
      %1382 = vset.pattern.permute.xlu0 0
      %1383 = vperm.xlu0 %1382, %v1337
      %v1384 = vpop.permute.xlu0 %1383
      %1386 = vset.pattern.permute.xlu0 0
      %1387 = vperm.xlu0 %1386, %v1341
      %v1388 = vpop.permute.xlu0 %1387
      %v1390 = vmul.f32 %v1076, %v1344
      %v1391 = vmul.f32 %v1077, %v1344
      %v1392 = vmul.f32 %v1078, %v1348
      %v1393 = vmul.f32 %v1079, %v1348
      %v1394 = vmul.f32 %v1080, %v1352
      %v1395 = vmul.f32 %v1081, %v1352
      %v1396 = vmul.f32 %v1082, %v1356
      %v1397 = vmul.f32 %v1083, %v1356
      %v1398 = vmul.f32 %v1084, %v1360
      %v1399 = vmul.f32 %v1085, %v1360
      %v1400 = vmul.f32 %v1086, %v1364
      %v1401 = vmul.f32 %v1087, %v1364
      %v1402 = vmul.f32 %v1088, %v1368
      %v1403 = vmul.f32 %v1089, %v1368
      %v1404 = vmul.f32 %v1090, %v1372
      %v1405 = vmul.f32 %v1091, %v1372
      %v1406 = vmul.f32 %v1092, %v1376
      %v1407 = vmul.f32 %v1093, %v1376
      %v1408 = vmul.f32 %v1094, %v1380
      %v1409 = vmul.f32 %v1095, %v1380
      %v1410 = vmul.f32 %v1096, %v1384
      %v1411 = vmul.f32 %v1097, %v1384
      %v1412 = vmul.f32 %v1098, %v1388
      %v1413 = vmul.f32 %v1099, %v1388
      %1438 = vrot.lane.b32.xlu0 %v1390, 127
      %v1439 = vpop.permute.xlu0 %1438
      %1440 = vrot.lane.b32.xlu0 %v1391, 127
      %v1441 = vpop.permute.xlu0 %1440
      %1442 = vrot.lane.b32.xlu0 %v1392, 127
      %v1443 = vpop.permute.xlu0 %1442
      %1444 = vrot.lane.b32.xlu0 %v1393, 127
      %v1445 = vpop.permute.xlu0 %1444
      %1446 = vrot.lane.b32.xlu0 %v1394, 127
      %v1447 = vpop.permute.xlu0 %1446
      %1448 = vrot.lane.b32.xlu0 %v1395, 127
      %v1449 = vpop.permute.xlu0 %1448
      %1450 = vrot.lane.b32.xlu0 %v1396, 127
      %v1451 = vpop.permute.xlu0 %1450
      %1452 = vrot.lane.b32.xlu0 %v1397, 127
      %v1453 = vpop.permute.xlu0 %1452
      %1454 = vrot.lane.b32.xlu0 %v1398, 127
      %v1455 = vpop.permute.xlu0 %1454
      %1456 = vrot.lane.b32.xlu0 %v1399, 127
      %v1457 = vpop.permute.xlu0 %1456
      %1458 = vrot.lane.b32.xlu0 %v1400, 127
      %v1459 = vpop.permute.xlu0 %1458
      %1460 = vrot.lane.b32.xlu0 %v1401, 127
      %v1461 = vpop.permute.xlu0 %1460
      %1462 = vrot.lane.b32.xlu0 %v1402, 127
      %v1463 = vpop.permute.xlu0 %1462
      %1464 = vrot.lane.b32.xlu0 %v1403, 127
      %v1465 = vpop.permute.xlu0 %1464
      %1466 = vrot.lane.b32.xlu0 %v1404, 127
      %v1467 = vpop.permute.xlu0 %1466
      %1468 = vrot.lane.b32.xlu0 %v1405, 127
      %v1469 = vpop.permute.xlu0 %1468
      %1470 = vrot.lane.b32.xlu0 %v1406, 127
      %v1471 = vpop.permute.xlu0 %1470
      %1472 = vrot.lane.b32.xlu0 %v1407, 127
      %v1473 = vpop.permute.xlu0 %1472
      %1474 = vrot.lane.b32.xlu0 %v1408, 127
      %v1475 = vpop.permute.xlu0 %1474
      %1476 = vrot.lane.b32.xlu0 %v1409, 127
      %v1477 = vpop.permute.xlu0 %1476
      %1478 = vrot.lane.b32.xlu0 %v1410, 127
      %v1479 = vpop.permute.xlu0 %1478
      %1480 = vrot.lane.b32.xlu0 %v1411, 127
      %v1481 = vpop.permute.xlu0 %1480
      %1482 = vrot.lane.b32.xlu0 %v1412, 127
      %v1483 = vpop.permute.xlu0 %1482
      %1484 = vrot.lane.b32.xlu0 %v1413, 127
      %v1485 = vpop.permute.xlu0 %1484
      %v1510 = vadd.f32 %v1245, %v1439
      %v1511 = vadd.f32 %v1246, %v1441
      %v1512 = vadd.f32 %v1247, %v1443
      %v1513 = vadd.f32 %v1248, %v1445
      %v1514 = vadd.f32 %v1249, %v1447
      %v1515 = vadd.f32 %v1250, %v1449
      %v1516 = vadd.f32 %v1251, %v1451
      %v1517 = vadd.f32 %v1252, %v1453
      %v1518 = vadd.f32 %v1253, %v1455
      %v1519 = vadd.f32 %v1254, %v1457
      %v1520 = vadd.f32 %v1255, %v1459
      %v1521 = vadd.f32 %v1256, %v1461
      %v1522 = vadd.f32 %v1257, %v1463
      %v1523 = vadd.f32 %v1258, %v1465
      %v1524 = vadd.f32 %v1259, %v1467
      %v1525 = vadd.f32 %v1260, %v1469
      %v1526 = vadd.f32 %v1261, %v1471
      %v1527 = vadd.f32 %v1262, %v1473
      %v1528 = vadd.f32 %v1263, %v1475
      %v1529 = vadd.f32 %v1264, %v1477
      %v1530 = vadd.f32 %v1265, %v1479
      %v1531 = vadd.f32 %v1266, %v1481
      %v1532 = vadd.f32 %v1267, %v1483
      %v1533 = vadd.f32 %v1268, %v1485
      %s1534 = scalar_lea.vmem %s1, 60
      %v1535 = vld [vmem:[%s1534] sm:$0x1]
      %v1536 = vld [vmem:[%s1534 + $0x1] sm:$0x1]
      %v1537 = vld [vmem:[%s1534 + $0x2] sm:$0x1]
      %v1538 = vld [vmem:[%s1534 + $0x3] sm:$0x1]
      %v1539 = vld [vmem:[%s1534 + $0x4] sm:$0x1]
      %v1540 = vld [vmem:[%s1534 + $0x5] sm:$0x1]
      %v1541 = vld [vmem:[%s1534 + $0x6] sm:$0x1]
      %v1542 = vld [vmem:[%s1534 + $0x7] sm:$0x1]
      %v1543 = vld [vmem:[%s1534 + $0x8] sm:$0x1]
      %v1544 = vld [vmem:[%s1534 + $0x9] sm:$0x1]
      %v1545 = vld [vmem:[%s1534 + $0xa] sm:$0x1]
      %v1546 = vld [vmem:[%s1534 + $0xb] sm:$0x1]
      %v1559 = vlaneseq
      %v1560 = vshrl.u32 %v1559, 7
      %v1561 = vsub.s32 0, %v1560
      %v1562 = vrot.slane %v1535, %v1561
      %v1563 = vlaneseq
      %v1564 = vshrl.u32 %v1563, 7
      %v1565 = vsub.s32 0, %v1564
      %v1566 = vrot.slane %v1536, %v1565
      %v1567 = vlaneseq
      %v1568 = vshrl.u32 %v1567, 7
      %v1569 = vsub.s32 0, %v1568
      %v1570 = vrot.slane %v1537, %v1569
      %v1571 = vlaneseq
      %v1572 = vshrl.u32 %v1571, 7
      %v1573 = vsub.s32 0, %v1572
      %v1574 = vrot.slane %v1538, %v1573
      %v1575 = vlaneseq
      %v1576 = vshrl.u32 %v1575, 7
      %v1577 = vsub.s32 0, %v1576
      %v1578 = vrot.slane %v1539, %v1577
      %v1579 = vlaneseq
      %v1580 = vshrl.u32 %v1579, 7
      %v1581 = vsub.s32 0, %v1580
      %v1582 = vrot.slane %v1540, %v1581
      %v1583 = vlaneseq
      %v1584 = vshrl.u32 %v1583, 7
      %v1585 = vsub.s32 0, %v1584
      %v1586 = vrot.slane %v1541, %v1585
      %v1587 = vlaneseq
      %v1588 = vshrl.u32 %v1587, 7
      %v1589 = vsub.s32 0, %v1588
      %v1590 = vrot.slane %v1542, %v1589
      %v1591 = vlaneseq
      %v1592 = vshrl.u32 %v1591, 7
      %v1593 = vsub.s32 0, %v1592
      %v1594 = vrot.slane %v1543, %v1593
      %v1595 = vlaneseq
      %v1596 = vshrl.u32 %v1595, 7
      %v1597 = vsub.s32 0, %v1596
      %v1598 = vrot.slane %v1544, %v1597
      %v1599 = vlaneseq
      %v1600 = vshrl.u32 %v1599, 7
      %v1601 = vsub.s32 0, %v1600
      %v1602 = vrot.slane %v1545, %v1601
      %v1603 = vlaneseq
      %v1604 = vshrl.u32 %v1603, 7
      %v1605 = vsub.s32 0, %v1604
      %v1606 = vrot.slane %v1546, %v1605
      %1607 = vset.pattern.permute.xlu0 0
      %1608 = vperm.xlu0 %1607, %v1562
      %v1609 = vpop.permute.xlu0 %1608
      %1611 = vset.pattern.permute.xlu0 0
      %1612 = vperm.xlu0 %1611, %v1566
      %v1613 = vpop.permute.xlu0 %1612
      %1615 = vset.pattern.permute.xlu0 0
      %1616 = vperm.xlu0 %1615, %v1570
      %v1617 = vpop.permute.xlu0 %1616
      %1619 = vset.pattern.permute.xlu0 0
      %1620 = vperm.xlu0 %1619, %v1574
      %v1621 = vpop.permute.xlu0 %1620
      %1623 = vset.pattern.permute.xlu0 0
      %1624 = vperm.xlu0 %1623, %v1578
      %v1625 = vpop.permute.xlu0 %1624
      %1627 = vset.pattern.permute.xlu0 0
      %1628 = vperm.xlu0 %1627, %v1582
      %v1629 = vpop.permute.xlu0 %1628
      %1631 = vset.pattern.permute.xlu0 0
      %1632 = vperm.xlu0 %1631, %v1586
      %v1633 = vpop.permute.xlu0 %1632
      %1635 = vset.pattern.permute.xlu0 0
      %1636 = vperm.xlu0 %1635, %v1590
      %v1637 = vpop.permute.xlu0 %1636
      %1639 = vset.pattern.permute.xlu0 0
      %1640 = vperm.xlu0 %1639, %v1594
      %v1641 = vpop.permute.xlu0 %1640
      %1643 = vset.pattern.permute.xlu0 0
      %1644 = vperm.xlu0 %1643, %v1598
      %v1645 = vpop.permute.xlu0 %1644
      %1647 = vset.pattern.permute.xlu0 0
      %1648 = vperm.xlu0 %1647, %v1602
      %v1649 = vpop.permute.xlu0 %1648
      %1651 = vset.pattern.permute.xlu0 0
      %1652 = vperm.xlu0 %1651, %v1606
      %v1653 = vpop.permute.xlu0 %1652
      %v1655 = vmul.f32 %v1076, %v1609
      %v1656 = vmul.f32 %v1077, %v1609
      %v1657 = vmul.f32 %v1078, %v1613
      %v1658 = vmul.f32 %v1079, %v1613
      %v1659 = vmul.f32 %v1080, %v1617
      %v1660 = vmul.f32 %v1081, %v1617
      %v1661 = vmul.f32 %v1082, %v1621
      %v1662 = vmul.f32 %v1083, %v1621
      %v1663 = vmul.f32 %v1084, %v1625
      %v1664 = vmul.f32 %v1085, %v1625
      %v1665 = vmul.f32 %v1086, %v1629
      %v1666 = vmul.f32 %v1087, %v1629
      %v1667 = vmul.f32 %v1088, %v1633
      %v1668 = vmul.f32 %v1089, %v1633
      %v1669 = vmul.f32 %v1090, %v1637
      %v1670 = vmul.f32 %v1091, %v1637
      %v1671 = vmul.f32 %v1092, %v1641
      %v1672 = vmul.f32 %v1093, %v1641
      %v1673 = vmul.f32 %v1094, %v1645
      %v1674 = vmul.f32 %v1095, %v1645
      %v1675 = vmul.f32 %v1096, %v1649
      %v1676 = vmul.f32 %v1097, %v1649
      %v1677 = vmul.f32 %v1098, %v1653
      %v1678 = vmul.f32 %v1099, %v1653
      %1703 = vrot.lane.b32.xlu0 %v1655, 126
      %v1704 = vpop.permute.xlu0 %1703
      %1705 = vrot.lane.b32.xlu0 %v1656, 126
      %v1706 = vpop.permute.xlu0 %1705
      %1707 = vrot.lane.b32.xlu0 %v1657, 126
      %v1708 = vpop.permute.xlu0 %1707
      %1709 = vrot.lane.b32.xlu0 %v1658, 126
      %v1710 = vpop.permute.xlu0 %1709
      %1711 = vrot.lane.b32.xlu0 %v1659, 126
      %v1712 = vpop.permute.xlu0 %1711
      %1713 = vrot.lane.b32.xlu0 %v1660, 126
      %v1714 = vpop.permute.xlu0 %1713
      %1715 = vrot.lane.b32.xlu0 %v1661, 126
      %v1716 = vpop.permute.xlu0 %1715
      %1717 = vrot.lane.b32.xlu0 %v1662, 126
      %v1718 = vpop.permute.xlu0 %1717
      %1719 = vrot.lane.b32.xlu0 %v1663, 126
      %v1720 = vpop.permute.xlu0 %1719
      %1721 = vrot.lane.b32.xlu0 %v1664, 126
      %v1722 = vpop.permute.xlu0 %1721
      %1723 = vrot.lane.b32.xlu0 %v1665, 126
      %v1724 = vpop.permute.xlu0 %1723
      %1725 = vrot.lane.b32.xlu0 %v1666, 126
      %v1726 = vpop.permute.xlu0 %1725
      %1727 = vrot.lane.b32.xlu0 %v1667, 126
      %v1728 = vpop.permute.xlu0 %1727
      %1729 = vrot.lane.b32.xlu0 %v1668, 126
      %v1730 = vpop.permute.xlu0 %1729
      %1731 = vrot.lane.b32.xlu0 %v1669, 126
      %v1732 = vpop.permute.xlu0 %1731
      %1733 = vrot.lane.b32.xlu0 %v1670, 126
      %v1734 = vpop.permute.xlu0 %1733
      %1735 = vrot.lane.b32.xlu0 %v1671, 126
      %v1736 = vpop.permute.xlu0 %1735
      %1737 = vrot.lane.b32.xlu0 %v1672, 126
      %v1738 = vpop.permute.xlu0 %1737
      %1739 = vrot.lane.b32.xlu0 %v1673, 126
      %v1740 = vpop.permute.xlu0 %1739
      %1741 = vrot.lane.b32.xlu0 %v1674, 126
      %v1742 = vpop.permute.xlu0 %1741
      %1743 = vrot.lane.b32.xlu0 %v1675, 126
      %v1744 = vpop.permute.xlu0 %1743
      %1745 = vrot.lane.b32.xlu0 %v1676, 126
      %v1746 = vpop.permute.xlu0 %1745
      %1747 = vrot.lane.b32.xlu0 %v1677, 126
      %v1748 = vpop.permute.xlu0 %1747
      %1749 = vrot.lane.b32.xlu0 %v1678, 126
      %v1750 = vpop.permute.xlu0 %1749
      %v1775 = vadd.f32 %v1510, %v1704
      %v1776 = vadd.f32 %v1511, %v1706
      %v1777 = vadd.f32 %v1512, %v1708
      %v1778 = vadd.f32 %v1513, %v1710
      %v1779 = vadd.f32 %v1514, %v1712
      %v1780 = vadd.f32 %v1515, %v1714
      %v1781 = vadd.f32 %v1516, %v1716
      %v1782 = vadd.f32 %v1517, %v1718
      %v1783 = vadd.f32 %v1518, %v1720
      %v1784 = vadd.f32 %v1519, %v1722
      %v1785 = vadd.f32 %v1520, %v1724
      %v1786 = vadd.f32 %v1521, %v1726
      %v1787 = vadd.f32 %v1522, %v1728
      %v1788 = vadd.f32 %v1523, %v1730
      %v1789 = vadd.f32 %v1524, %v1732
      %v1790 = vadd.f32 %v1525, %v1734
      %v1791 = vadd.f32 %v1526, %v1736
      %v1792 = vadd.f32 %v1527, %v1738
      %v1793 = vadd.f32 %v1528, %v1740
      %v1794 = vadd.f32 %v1529, %v1742
      %v1795 = vadd.f32 %v1530, %v1744
      %v1796 = vadd.f32 %v1531, %v1746
      %v1797 = vadd.f32 %v1532, %v1748
      %v1798 = vadd.f32 %v1533, %v1750
      %v1799 = vld [vmem:[#allocation2 + $0x2] sm:$0xff]
      %v1800 = vld [vmem:[#allocation2 + $0xa] sm:$0xff]
      %v1801 = vld [vmem:[#allocation2 + $0x1a] sm:$0xff]
      %v1802 = vld [vmem:[#allocation2 + $0x22] sm:$0xff]
      %v1803 = vld [vmem:[#allocation2 + $0x32] sm:$0xff]
      %v1804 = vld [vmem:[#allocation2 + $0x3a] sm:$0xff]
      %v1805 = vld [vmem:[#allocation2 + $0x4a] sm:$0xff]
      %v1806 = vld [vmem:[#allocation2 + $0x52] sm:$0xff]
      %v1807 = vld [vmem:[#allocation2 + $0x62] sm:$0xff]
      %v1808 = vld [vmem:[#allocation2 + $0x6a] sm:$0xff]
      %v1809 = vld [vmem:[#allocation2 + $0x7a] sm:$0xff]
      %v1810 = vld [vmem:[#allocation2 + $0x82] sm:$0xff]
      %v1811 = vld [vmem:[#allocation2 + $0x92] sm:$0xff]
      %v1812 = vld [vmem:[#allocation2 + $0x9a] sm:$0xff]
      %v1813 = vld [vmem:[#allocation2 + $0xaa] sm:$0xff]
      %v1814 = vld [vmem:[#allocation2 + $0xb2] sm:$0xff]
      %v1815 = vld [vmem:[#allocation2 + $0xc2] sm:$0xff]
      %v1816 = vld [vmem:[#allocation2 + $0xca] sm:$0xff]
      %v1817 = vld [vmem:[#allocation2 + $0xda] sm:$0xff]
      %v1818 = vld [vmem:[#allocation2 + $0xe2] sm:$0xff]
      %v1819 = vld [vmem:[#allocation2 + $0xf2] sm:$0xff]
      %v1820 = vld [vmem:[#allocation2 + $0xfa] sm:$0xff]
      %v1821 = vld [vmem:[#allocation2 + $0x10a] sm:$0xff]
      %v1822 = vld [vmem:[#allocation2 + $0x112] sm:$0xff]
      %s1823 = scalar_lea.vmem %s1, 72
      %v1824 = vld [vmem:[%s1823] sm:$0x1]
      %v1825 = vld [vmem:[%s1823 + $0x1] sm:$0x1]
      %v1826 = vld [vmem:[%s1823 + $0x2] sm:$0x1]
      %v1827 = vld [vmem:[%s1823 + $0x3] sm:$0x1]
      %v1828 = vld [vmem:[%s1823 + $0x4] sm:$0x1]
      %v1829 = vld [vmem:[%s1823 + $0x5] sm:$0x1]
      %v1830 = vld [vmem:[%s1823 + $0x6] sm:$0x1]
      %v1831 = vld [vmem:[%s1823 + $0x7] sm:$0x1]
      %v1832 = vld [vmem:[%s1823 + $0x8] sm:$0x1]
      %v1833 = vld [vmem:[%s1823 + $0x9] sm:$0x1]
      %v1834 = vld [vmem:[%s1823 + $0xa] sm:$0x1]
      %v1835 = vld [vmem:[%s1823 + $0xb] sm:$0x1]
      %v1848 = vlaneseq
      %v1849 = vshrl.u32 %v1848, 7
      %v1850 = vsub.s32 0, %v1849
      %v1851 = vrot.slane %v1824, %v1850
      %v1852 = vlaneseq
      %v1853 = vshrl.u32 %v1852, 7
      %v1854 = vsub.s32 0, %v1853
      %v1855 = vrot.slane %v1825, %v1854
      %v1856 = vlaneseq
      %v1857 = vshrl.u32 %v1856, 7
      %v1858 = vsub.s32 0, %v1857
      %v1859 = vrot.slane %v1826, %v1858
      %v1860 = vlaneseq
      %v1861 = vshrl.u32 %v1860, 7
      %v1862 = vsub.s32 0, %v1861
      %v1863 = vrot.slane %v1827, %v1862
      %v1864 = vlaneseq
      %v1865 = vshrl.u32 %v1864, 7
      %v1866 = vsub.s32 0, %v1865
      %v1867 = vrot.slane %v1828, %v1866
      %v1868 = vlaneseq
      %v1869 = vshrl.u32 %v1868, 7
      %v1870 = vsub.s32 0, %v1869
      %v1871 = vrot.slane %v1829, %v1870
      %v1872 = vlaneseq
      %v1873 = vshrl.u32 %v1872, 7
      %v1874 = vsub.s32 0, %v1873
      %v1875 = vrot.slane %v1830, %v1874
      %v1876 = vlaneseq
      %v1877 = vshrl.u32 %v1876, 7
      %v1878 = vsub.s32 0, %v1877
      %v1879 = vrot.slane %v1831, %v1878
      %v1880 = vlaneseq
      %v1881 = vshrl.u32 %v1880, 7
      %v1882 = vsub.s32 0, %v1881
      %v1883 = vrot.slane %v1832, %v1882
      %v1884 = vlaneseq
      %v1885 = vshrl.u32 %v1884, 7
      %v1886 = vsub.s32 0, %v1885
      %v1887 = vrot.slane %v1833, %v1886
      %v1888 = vlaneseq
      %v1889 = vshrl.u32 %v1888, 7
      %v1890 = vsub.s32 0, %v1889
      %v1891 = vrot.slane %v1834, %v1890
      %v1892 = vlaneseq
      %v1893 = vshrl.u32 %v1892, 7
      %v1894 = vsub.s32 0, %v1893
      %v1895 = vrot.slane %v1835, %v1894
      %1896 = vset.pattern.permute.xlu0 0
      %1897 = vperm.xlu0 %1896, %v1851
      %v1898 = vpop.permute.xlu0 %1897
      %1900 = vset.pattern.permute.xlu0 0
      %1901 = vperm.xlu0 %1900, %v1855
      %v1902 = vpop.permute.xlu0 %1901
      %1904 = vset.pattern.permute.xlu0 0
      %1905 = vperm.xlu0 %1904, %v1859
      %v1906 = vpop.permute.xlu0 %1905
      %1908 = vset.pattern.permute.xlu0 0
      %1909 = vperm.xlu0 %1908, %v1863
      %v1910 = vpop.permute.xlu0 %1909
      %1912 = vset.pattern.permute.xlu0 0
      %1913 = vperm.xlu0 %1912, %v1867
      %v1914 = vpop.permute.xlu0 %1913
      %1916 = vset.pattern.permute.xlu0 0
      %1917 = vperm.xlu0 %1916, %v1871
      %v1918 = vpop.permute.xlu0 %1917
      %1920 = vset.pattern.permute.xlu0 0
      %1921 = vperm.xlu0 %1920, %v1875
      %v1922 = vpop.permute.xlu0 %1921
      %1924 = vset.pattern.permute.xlu0 0
      %1925 = vperm.xlu0 %1924, %v1879
      %v1926 = vpop.permute.xlu0 %1925
      %1928 = vset.pattern.permute.xlu0 0
      %1929 = vperm.xlu0 %1928, %v1883
      %v1930 = vpop.permute.xlu0 %1929
      %1932 = vset.pattern.permute.xlu0 0
      %1933 = vperm.xlu0 %1932, %v1887
      %v1934 = vpop.permute.xlu0 %1933
      %1936 = vset.pattern.permute.xlu0 0
      %1937 = vperm.xlu0 %1936, %v1891
      %v1938 = vpop.permute.xlu0 %1937
      %1940 = vset.pattern.permute.xlu0 0
      %1941 = vperm.xlu0 %1940, %v1895
      %v1942 = vpop.permute.xlu0 %1941
      %v1944 = vmul.f32 %v1799, %v1898
      %v1945 = vmul.f32 %v1800, %v1898
      %v1946 = vmul.f32 %v1801, %v1902
      %v1947 = vmul.f32 %v1802, %v1902
      %v1948 = vmul.f32 %v1803, %v1906
      %v1949 = vmul.f32 %v1804, %v1906
      %v1950 = vmul.f32 %v1805, %v1910
      %v1951 = vmul.f32 %v1806, %v1910
      %v1952 = vmul.f32 %v1807, %v1914
      %v1953 = vmul.f32 %v1808, %v1914
      %v1954 = vmul.f32 %v1809, %v1918
      %v1955 = vmul.f32 %v1810, %v1918
      %v1956 = vmul.f32 %v1811, %v1922
      %v1957 = vmul.f32 %v1812, %v1922
      %v1958 = vmul.f32 %v1813, %v1926
      %v1959 = vmul.f32 %v1814, %v1926
      %v1960 = vmul.f32 %v1815, %v1930
      %v1961 = vmul.f32 %v1816, %v1930
      %v1962 = vmul.f32 %v1817, %v1934
      %v1963 = vmul.f32 %v1818, %v1934
      %v1964 = vmul.f32 %v1819, %v1938
      %v1965 = vmul.f32 %v1820, %v1938
      %v1966 = vmul.f32 %v1821, %v1942
      %v1967 = vmul.f32 %v1822, %v1942
      %v1968 = vadd.f32 %v1775, %v1944
      %v1969 = vadd.f32 %v1776, %v1945
      %v1970 = vadd.f32 %v1777, %v1946
      %v1971 = vadd.f32 %v1778, %v1947
      %v1972 = vadd.f32 %v1779, %v1948
      %v1973 = vadd.f32 %v1780, %v1949
      %v1974 = vadd.f32 %v1781, %v1950
      %v1975 = vadd.f32 %v1782, %v1951
      %v1976 = vadd.f32 %v1783, %v1952
      %v1977 = vadd.f32 %v1784, %v1953
      %v1978 = vadd.f32 %v1785, %v1954
      %v1979 = vadd.f32 %v1786, %v1955
      %v1980 = vadd.f32 %v1787, %v1956
      %v1981 = vadd.f32 %v1788, %v1957
      %v1982 = vadd.f32 %v1789, %v1958
      %v1983 = vadd.f32 %v1790, %v1959
      %v1984 = vadd.f32 %v1791, %v1960
      %v1985 = vadd.f32 %v1792, %v1961
      %v1986 = vadd.f32 %v1793, %v1962
      %v1987 = vadd.f32 %v1794, %v1963
      %v1988 = vadd.f32 %v1795, %v1964
      %v1989 = vadd.f32 %v1796, %v1965
      %v1990 = vadd.f32 %v1797, %v1966
      %v1991 = vadd.f32 %v1798, %v1967
      %s1992 = scalar_lea.vmem %s1, 84
      %v1993 = vld [vmem:[%s1992] sm:$0x1]
      %v1994 = vld [vmem:[%s1992 + $0x1] sm:$0x1]
      %v1995 = vld [vmem:[%s1992 + $0x2] sm:$0x1]
      %v1996 = vld [vmem:[%s1992 + $0x3] sm:$0x1]
      %v1997 = vld [vmem:[%s1992 + $0x4] sm:$0x1]
      %v1998 = vld [vmem:[%s1992 + $0x5] sm:$0x1]
      %v1999 = vld [vmem:[%s1992 + $0x6] sm:$0x1]
      %v2000 = vld [vmem:[%s1992 + $0x7] sm:$0x1]
      %v2001 = vld [vmem:[%s1992 + $0x8] sm:$0x1]
      %v2002 = vld [vmem:[%s1992 + $0x9] sm:$0x1]
      %v2003 = vld [vmem:[%s1992 + $0xa] sm:$0x1]
      %v2004 = vld [vmem:[%s1992 + $0xb] sm:$0x1]
      %v2017 = vlaneseq
      %v2018 = vshrl.u32 %v2017, 7
      %v2019 = vsub.s32 0, %v2018
      %v2020 = vrot.slane %v1993, %v2019
      %v2021 = vlaneseq
      %v2022 = vshrl.u32 %v2021, 7
      %v2023 = vsub.s32 0, %v2022
      %v2024 = vrot.slane %v1994, %v2023
      %v2025 = vlaneseq
      %v2026 = vshrl.u32 %v2025, 7
      %v2027 = vsub.s32 0, %v2026
      %v2028 = vrot.slane %v1995, %v2027
      %v2029 = vlaneseq
      %v2030 = vshrl.u32 %v2029, 7
      %v2031 = vsub.s32 0, %v2030
      %v2032 = vrot.slane %v1996, %v2031
      %v2033 = vlaneseq
      %v2034 = vshrl.u32 %v2033, 7
      %v2035 = vsub.s32 0, %v2034
      %v2036 = vrot.slane %v1997, %v2035
      %v2037 = vlaneseq
      %v2038 = vshrl.u32 %v2037, 7
      %v2039 = vsub.s32 0, %v2038
      %v2040 = vrot.slane %v1998, %v2039
      %v2041 = vlaneseq
      %v2042 = vshrl.u32 %v2041, 7
      %v2043 = vsub.s32 0, %v2042
      %v2044 = vrot.slane %v1999, %v2043
      %v2045 = vlaneseq
      %v2046 = vshrl.u32 %v2045, 7
      %v2047 = vsub.s32 0, %v2046
      %v2048 = vrot.slane %v2000, %v2047
      %v2049 = vlaneseq
      %v2050 = vshrl.u32 %v2049, 7
      %v2051 = vsub.s32 0, %v2050
      %v2052 = vrot.slane %v2001, %v2051
      %v2053 = vlaneseq
      %v2054 = vshrl.u32 %v2053, 7
      %v2055 = vsub.s32 0, %v2054
      %v2056 = vrot.slane %v2002, %v2055
      %v2057 = vlaneseq
      %v2058 = vshrl.u32 %v2057, 7
      %v2059 = vsub.s32 0, %v2058
      %v2060 = vrot.slane %v2003, %v2059
      %v2061 = vlaneseq
      %v2062 = vshrl.u32 %v2061, 7
      %v2063 = vsub.s32 0, %v2062
      %v2064 = vrot.slane %v2004, %v2063
      %2065 = vset.pattern.permute.xlu0 0
      %2066 = vperm.xlu0 %2065, %v2020
      %v2067 = vpop.permute.xlu0 %2066
      %2069 = vset.pattern.permute.xlu0 0
      %2070 = vperm.xlu0 %2069, %v2024
      %v2071 = vpop.permute.xlu0 %2070
      %2073 = vset.pattern.permute.xlu0 0
      %2074 = vperm.xlu0 %2073, %v2028
      %v2075 = vpop.permute.xlu0 %2074
      %2077 = vset.pattern.permute.xlu0 0
      %2078 = vperm.xlu0 %2077, %v2032
      %v2079 = vpop.permute.xlu0 %2078
      %2081 = vset.pattern.permute.xlu0 0
      %2082 = vperm.xlu0 %2081, %v2036
      %v2083 = vpop.permute.xlu0 %2082
      %2085 = vset.pattern.permute.xlu0 0
      %2086 = vperm.xlu0 %2085, %v2040
      %v2087 = vpop.permute.xlu0 %2086
      %2089 = vset.pattern.permute.xlu0 0
      %2090 = vperm.xlu0 %2089, %v2044
      %v2091 = vpop.permute.xlu0 %2090
      %2093 = vset.pattern.permute.xlu0 0
      %2094 = vperm.xlu0 %2093, %v2048
      %v2095 = vpop.permute.xlu0 %2094
      %2097 = vset.pattern.permute.xlu0 0
      %2098 = vperm.xlu0 %2097, %v2052
      %v2099 = vpop.permute.xlu0 %2098
      %2101 = vset.pattern.permute.xlu0 0
      %2102 = vperm.xlu0 %2101, %v2056
      %v2103 = vpop.permute.xlu0 %2102
      %2105 = vset.pattern.permute.xlu0 0
      %2106 = vperm.xlu0 %2105, %v2060
      %v2107 = vpop.permute.xlu0 %2106
      %2109 = vset.pattern.permute.xlu0 0
      %2110 = vperm.xlu0 %2109, %v2064
      %v2111 = vpop.permute.xlu0 %2110
      %v2113 = vmul.f32 %v1799, %v2067
      %v2114 = vmul.f32 %v1800, %v2067
      %v2115 = vmul.f32 %v1801, %v2071
      %v2116 = vmul.f32 %v1802, %v2071
      %v2117 = vmul.f32 %v1803, %v2075
      %v2118 = vmul.f32 %v1804, %v2075
      %v2119 = vmul.f32 %v1805, %v2079
      %v2120 = vmul.f32 %v1806, %v2079
      %v2121 = vmul.f32 %v1807, %v2083
      %v2122 = vmul.f32 %v1808, %v2083
      %v2123 = vmul.f32 %v1809, %v2087
      %v2124 = vmul.f32 %v1810, %v2087
      %v2125 = vmul.f32 %v1811, %v2091
      %v2126 = vmul.f32 %v1812, %v2091
      %v2127 = vmul.f32 %v1813, %v2095
      %v2128 = vmul.f32 %v1814, %v2095
      %v2129 = vmul.f32 %v1815, %v2099
      %v2130 = vmul.f32 %v1816, %v2099
      %v2131 = vmul.f32 %v1817, %v2103
      %v2132 = vmul.f32 %v1818, %v2103
      %v2133 = vmul.f32 %v1819, %v2107
      %v2134 = vmul.f32 %v1820, %v2107
      %v2135 = vmul.f32 %v1821, %v2111
      %v2136 = vmul.f32 %v1822, %v2111
      %2161 = vrot.lane.b32.xlu0 %v2113, 127
      %v2162 = vpop.permute.xlu0 %2161
      %2163 = vrot.lane.b32.xlu0 %v2114, 127
      %v2164 = vpop.permute.xlu0 %2163
      %2165 = vrot.lane.b32.xlu0 %v2115, 127
      %v2166 = vpop.permute.xlu0 %2165
      %2167 = vrot.lane.b32.xlu0 %v2116, 127
      %v2168 = vpop.permute.xlu0 %2167
      %2169 = vrot.lane.b32.xlu0 %v2117, 127
      %v2170 = vpop.permute.xlu0 %2169
      %2171 = vrot.lane.b32.xlu0 %v2118, 127
      %v2172 = vpop.permute.xlu0 %2171
      %2173 = vrot.lane.b32.xlu0 %v2119, 127
      %v2174 = vpop.permute.xlu0 %2173
      %2175 = vrot.lane.b32.xlu0 %v2120, 127
      %v2176 = vpop.permute.xlu0 %2175
      %2177 = vrot.lane.b32.xlu0 %v2121, 127
      %v2178 = vpop.permute.xlu0 %2177
      %2179 = vrot.lane.b32.xlu0 %v2122, 127
      %v2180 = vpop.permute.xlu0 %2179
      %2181 = vrot.lane.b32.xlu0 %v2123, 127
      %v2182 = vpop.permute.xlu0 %2181
      %2183 = vrot.lane.b32.xlu0 %v2124, 127
      %v2184 = vpop.permute.xlu0 %2183
      %2185 = vrot.lane.b32.xlu0 %v2125, 127
      %v2186 = vpop.permute.xlu0 %2185
      %2187 = vrot.lane.b32.xlu0 %v2126, 127
      %v2188 = vpop.permute.xlu0 %2187
      %2189 = vrot.lane.b32.xlu0 %v2127, 127
      %v2190 = vpop.permute.xlu0 %2189
      %2191 = vrot.lane.b32.xlu0 %v2128, 127
      %v2192 = vpop.permute.xlu0 %2191
      %2193 = vrot.lane.b32.xlu0 %v2129, 127
      %v2194 = vpop.permute.xlu0 %2193
      %2195 = vrot.lane.b32.xlu0 %v2130, 127
      %v2196 = vpop.permute.xlu0 %2195
      %2197 = vrot.lane.b32.xlu0 %v2131, 127
      %v2198 = vpop.permute.xlu0 %2197
      %2199 = vrot.lane.b32.xlu0 %v2132, 127
      %v2200 = vpop.permute.xlu0 %2199
      %2201 = vrot.lane.b32.xlu0 %v2133, 127
      %v2202 = vpop.permute.xlu0 %2201
      %2203 = vrot.lane.b32.xlu0 %v2134, 127
      %v2204 = vpop.permute.xlu0 %2203
      %2205 = vrot.lane.b32.xlu0 %v2135, 127
      %v2206 = vpop.permute.xlu0 %2205
      %2207 = vrot.lane.b32.xlu0 %v2136, 127
      %v2208 = vpop.permute.xlu0 %2207
      %v2233 = vadd.f32 %v1968, %v2162
      %v2234 = vadd.f32 %v1969, %v2164
      %v2235 = vadd.f32 %v1970, %v2166
      %v2236 = vadd.f32 %v1971, %v2168
      %v2237 = vadd.f32 %v1972, %v2170
      %v2238 = vadd.f32 %v1973, %v2172
      %v2239 = vadd.f32 %v1974, %v2174
      %v2240 = vadd.f32 %v1975, %v2176
      %v2241 = vadd.f32 %v1976, %v2178
      %v2242 = vadd.f32 %v1977, %v2180
      %v2243 = vadd.f32 %v1978, %v2182
      %v2244 = vadd.f32 %v1979, %v2184
      %v2245 = vadd.f32 %v1980, %v2186
      %v2246 = vadd.f32 %v1981, %v2188
      %v2247 = vadd.f32 %v1982, %v2190
      %v2248 = vadd.f32 %v1983, %v2192
      %v2249 = vadd.f32 %v1984, %v2194
      %v2250 = vadd.f32 %v1985, %v2196
      %v2251 = vadd.f32 %v1986, %v2198
      %v2252 = vadd.f32 %v1987, %v2200
      %v2253 = vadd.f32 %v1988, %v2202
      %v2254 = vadd.f32 %v1989, %v2204
      %v2255 = vadd.f32 %v1990, %v2206
      %v2256 = vadd.f32 %v1991, %v2208
      %s2257 = scalar_lea.vmem %s1, 96
      %v2258 = vld [vmem:[%s2257] sm:$0x1]
      %v2259 = vld [vmem:[%s2257 + $0x1] sm:$0x1]
      %v2260 = vld [vmem:[%s2257 + $0x2] sm:$0x1]
      %v2261 = vld [vmem:[%s2257 + $0x3] sm:$0x1]
      %v2262 = vld [vmem:[%s2257 + $0x4] sm:$0x1]
      %v2263 = vld [vmem:[%s2257 + $0x5] sm:$0x1]
      %v2264 = vld [vmem:[%s2257 + $0x6] sm:$0x1]
      %v2265 = vld [vmem:[%s2257 + $0x7] sm:$0x1]
      %v2266 = vld [vmem:[%s2257 + $0x8] sm:$0x1]
      %v2267 = vld [vmem:[%s2257 + $0x9] sm:$0x1]
      %v2268 = vld [vmem:[%s2257 + $0xa] sm:$0x1]
      %v2269 = vld [vmem:[%s2257 + $0xb] sm:$0x1]
      %v2282 = vlaneseq
      %v2283 = vshrl.u32 %v2282, 7
      %v2284 = vsub.s32 0, %v2283
      %v2285 = vrot.slane %v2258, %v2284
      %v2286 = vlaneseq
      %v2287 = vshrl.u32 %v2286, 7
      %v2288 = vsub.s32 0, %v2287
      %v2289 = vrot.slane %v2259, %v2288
      %v2290 = vlaneseq
      %v2291 = vshrl.u32 %v2290, 7
      %v2292 = vsub.s32 0, %v2291
      %v2293 = vrot.slane %v2260, %v2292
      %v2294 = vlaneseq
      %v2295 = vshrl.u32 %v2294, 7
      %v2296 = vsub.s32 0, %v2295
      %v2297 = vrot.slane %v2261, %v2296
      %v2298 = vlaneseq
      %v2299 = vshrl.u32 %v2298, 7
      %v2300 = vsub.s32 0, %v2299
      %v2301 = vrot.slane %v2262, %v2300
      %v2302 = vlaneseq
      %v2303 = vshrl.u32 %v2302, 7
      %v2304 = vsub.s32 0, %v2303
      %v2305 = vrot.slane %v2263, %v2304
      %v2306 = vlaneseq
      %v2307 = vshrl.u32 %v2306, 7
      %v2308 = vsub.s32 0, %v2307
      %v2309 = vrot.slane %v2264, %v2308
      %v2310 = vlaneseq
      %v2311 = vshrl.u32 %v2310, 7
      %v2312 = vsub.s32 0, %v2311
      %v2313 = vrot.slane %v2265, %v2312
      %v2314 = vlaneseq
      %v2315 = vshrl.u32 %v2314, 7
      %v2316 = vsub.s32 0, %v2315
      %v2317 = vrot.slane %v2266, %v2316
      %v2318 = vlaneseq
      %v2319 = vshrl.u32 %v2318, 7
      %v2320 = vsub.s32 0, %v2319
      %v2321 = vrot.slane %v2267, %v2320
      %v2322 = vlaneseq
      %v2323 = vshrl.u32 %v2322, 7
      %v2324 = vsub.s32 0, %v2323
      %v2325 = vrot.slane %v2268, %v2324
      %v2326 = vlaneseq
      %v2327 = vshrl.u32 %v2326, 7
      %v2328 = vsub.s32 0, %v2327
      %v2329 = vrot.slane %v2269, %v2328
      %2330 = vset.pattern.permute.xlu0 0
      %2331 = vperm.xlu0 %2330, %v2285
      %v2332 = vpop.permute.xlu0 %2331
      %2334 = vset.pattern.permute.xlu0 0
      %2335 = vperm.xlu0 %2334, %v2289
      %v2336 = vpop.permute.xlu0 %2335
      %2338 = vset.pattern.permute.xlu0 0
      %2339 = vperm.xlu0 %2338, %v2293
      %v2340 = vpop.permute.xlu0 %2339
      %2342 = vset.pattern.permute.xlu0 0
      %2343 = vperm.xlu0 %2342, %v2297
      %v2344 = vpop.permute.xlu0 %2343
      %2346 = vset.pattern.permute.xlu0 0
      %2347 = vperm.xlu0 %2346, %v2301
      %v2348 = vpop.permute.xlu0 %2347
      %2350 = vset.pattern.permute.xlu0 0
      %2351 = vperm.xlu0 %2350, %v2305
      %v2352 = vpop.permute.xlu0 %2351
      %2354 = vset.pattern.permute.xlu0 0
      %2355 = vperm.xlu0 %2354, %v2309
      %v2356 = vpop.permute.xlu0 %2355
      %2358 = vset.pattern.permute.xlu0 0
      %2359 = vperm.xlu0 %2358, %v2313
      %v2360 = vpop.permute.xlu0 %2359
      %2362 = vset.pattern.permute.xlu0 0
      %2363 = vperm.xlu0 %2362, %v2317
      %v2364 = vpop.permute.xlu0 %2363
      %2366 = vset.pattern.permute.xlu0 0
      %2367 = vperm.xlu0 %2366, %v2321
      %v2368 = vpop.permute.xlu0 %2367
      %2370 = vset.pattern.permute.xlu0 0
      %2371 = vperm.xlu0 %2370, %v2325
      %v2372 = vpop.permute.xlu0 %2371
      %2374 = vset.pattern.permute.xlu0 0
      %2375 = vperm.xlu0 %2374, %v2329
      %v2376 = vpop.permute.xlu0 %2375
      %v2378 = vmul.f32 %v1799, %v2332
      %v2379 = vmul.f32 %v1800, %v2332
      %v2380 = vmul.f32 %v1801, %v2336
      %v2381 = vmul.f32 %v1802, %v2336
      %v2382 = vmul.f32 %v1803, %v2340
      %v2383 = vmul.f32 %v1804, %v2340
      %v2384 = vmul.f32 %v1805, %v2344
      %v2385 = vmul.f32 %v1806, %v2344
      %v2386 = vmul.f32 %v1807, %v2348
      %v2387 = vmul.f32 %v1808, %v2348
      %v2388 = vmul.f32 %v1809, %v2352
      %v2389 = vmul.f32 %v1810, %v2352
      %v2390 = vmul.f32 %v1811, %v2356
      %v2391 = vmul.f32 %v1812, %v2356
      %v2392 = vmul.f32 %v1813, %v2360
      %v2393 = vmul.f32 %v1814, %v2360
      %v2394 = vmul.f32 %v1815, %v2364
      %v2395 = vmul.f32 %v1816, %v2364
      %v2396 = vmul.f32 %v1817, %v2368
      %v2397 = vmul.f32 %v1818, %v2368
      %v2398 = vmul.f32 %v1819, %v2372
      %v2399 = vmul.f32 %v1820, %v2372
      %v2400 = vmul.f32 %v1821, %v2376
      %v2401 = vmul.f32 %v1822, %v2376
      %2426 = vrot.lane.b32.xlu0 %v2378, 126
      %v2427 = vpop.permute.xlu0 %2426
      %2428 = vrot.lane.b32.xlu0 %v2379, 126
      %v2429 = vpop.permute.xlu0 %2428
      %2430 = vrot.lane.b32.xlu0 %v2380, 126
      %v2431 = vpop.permute.xlu0 %2430
      %2432 = vrot.lane.b32.xlu0 %v2381, 126
      %v2433 = vpop.permute.xlu0 %2432
      %2434 = vrot.lane.b32.xlu0 %v2382, 126
      %v2435 = vpop.permute.xlu0 %2434
      %2436 = vrot.lane.b32.xlu0 %v2383, 126
      %v2437 = vpop.permute.xlu0 %2436
      %2438 = vrot.lane.b32.xlu0 %v2384, 126
      %v2439 = vpop.permute.xlu0 %2438
      %2440 = vrot.lane.b32.xlu0 %v2385, 126
      %v2441 = vpop.permute.xlu0 %2440
      %2442 = vrot.lane.b32.xlu0 %v2386, 126
      %v2443 = vpop.permute.xlu0 %2442
      %2444 = vrot.lane.b32.xlu0 %v2387, 126
      %v2445 = vpop.permute.xlu0 %2444
      %2446 = vrot.lane.b32.xlu0 %v2388, 126
      %v2447 = vpop.permute.xlu0 %2446
      %2448 = vrot.lane.b32.xlu0 %v2389, 126
      %v2449 = vpop.permute.xlu0 %2448
      %2450 = vrot.lane.b32.xlu0 %v2390, 126
      %v2451 = vpop.permute.xlu0 %2450
      %2452 = vrot.lane.b32.xlu0 %v2391, 126
      %v2453 = vpop.permute.xlu0 %2452
      %2454 = vrot.lane.b32.xlu0 %v2392, 126
      %v2455 = vpop.permute.xlu0 %2454
      %2456 = vrot.lane.b32.xlu0 %v2393, 126
      %v2457 = vpop.permute.xlu0 %2456
      %2458 = vrot.lane.b32.xlu0 %v2394, 126
      %v2459 = vpop.permute.xlu0 %2458
      %2460 = vrot.lane.b32.xlu0 %v2395, 126
      %v2461 = vpop.permute.xlu0 %2460
      %2462 = vrot.lane.b32.xlu0 %v2396, 126
      %v2463 = vpop.permute.xlu0 %2462
      %2464 = vrot.lane.b32.xlu0 %v2397, 126
      %v2465 = vpop.permute.xlu0 %2464
      %2466 = vrot.lane.b32.xlu0 %v2398, 126
      %v2467 = vpop.permute.xlu0 %2466
      %2468 = vrot.lane.b32.xlu0 %v2399, 126
      %v2469 = vpop.permute.xlu0 %2468
      %2470 = vrot.lane.b32.xlu0 %v2400, 126
      %v2471 = vpop.permute.xlu0 %2470
      %2472 = vrot.lane.b32.xlu0 %v2401, 126
      %v2473 = vpop.permute.xlu0 %2472
      %v2498 = vadd.f32 %v2233, %v2427
      %v2499 = vadd.f32 %v2234, %v2429
      %v2500 = vadd.f32 %v2235, %v2431
      %v2501 = vadd.f32 %v2236, %v2433
      %v2502 = vadd.f32 %v2237, %v2435
      %v2503 = vadd.f32 %v2238, %v2437
      %v2504 = vadd.f32 %v2239, %v2439
      %v2505 = vadd.f32 %v2240, %v2441
      %v2506 = vadd.f32 %v2241, %v2443
      %v2507 = vadd.f32 %v2242, %v2445
      %v2508 = vadd.f32 %v2243, %v2447
      %v2509 = vadd.f32 %v2244, %v2449
      %v2510 = vadd.f32 %v2245, %v2451
      %v2511 = vadd.f32 %v2246, %v2453
      %v2512 = vadd.f32 %v2247, %v2455
      %v2513 = vadd.f32 %v2248, %v2457
      %v2514 = vadd.f32 %v2249, %v2459
      %v2515 = vadd.f32 %v2250, %v2461
      %v2516 = vadd.f32 %v2251, %v2463
      %v2517 = vadd.f32 %v2252, %v2465
      %v2518 = vadd.f32 %v2253, %v2467
      %v2519 = vadd.f32 %v2254, %v2469
      %v2520 = vadd.f32 %v2255, %v2471
      %v2521 = vadd.f32 %v2256, %v2473
      %v2522 = vld [vmem:[%s2] sm:$0x1]
      %v2523 = vld [vmem:[%s2 + $0x1] sm:$0x1]
      %v2524 = vld [vmem:[%s2 + $0x2] sm:$0x1]
      %v2525 = vld [vmem:[%s2 + $0x3] sm:$0x1]
      %v2526 = vld [vmem:[%s2 + $0x4] sm:$0x1]
      %v2527 = vld [vmem:[%s2 + $0x5] sm:$0x1]
      %v2528 = vld [vmem:[%s2 + $0x6] sm:$0x1]
      %v2529 = vld [vmem:[%s2 + $0x7] sm:$0x1]
      %v2530 = vld [vmem:[%s2 + $0x8] sm:$0x1]
      %v2531 = vld [vmem:[%s2 + $0x9] sm:$0x1]
      %v2532 = vld [vmem:[%s2 + $0xa] sm:$0x1]
      %v2533 = vld [vmem:[%s2 + $0xb] sm:$0x1]
      %v2546 = vlaneseq
      %v2547 = vshrl.u32 %v2546, 7
      %v2548 = vsub.s32 0, %v2547
      %v2549 = vrot.slane %v2522, %v2548
      %v2550 = vlaneseq
      %v2551 = vshrl.u32 %v2550, 7
      %v2552 = vsub.s32 0, %v2551
      %v2553 = vrot.slane %v2523, %v2552
      %v2554 = vlaneseq
      %v2555 = vshrl.u32 %v2554, 7
      %v2556 = vsub.s32 0, %v2555
      %v2557 = vrot.slane %v2524, %v2556
      %v2558 = vlaneseq
      %v2559 = vshrl.u32 %v2558, 7
      %v2560 = vsub.s32 0, %v2559
      %v2561 = vrot.slane %v2525, %v2560
      %v2562 = vlaneseq
      %v2563 = vshrl.u32 %v2562, 7
      %v2564 = vsub.s32 0, %v2563
      %v2565 = vrot.slane %v2526, %v2564
      %v2566 = vlaneseq
      %v2567 = vshrl.u32 %v2566, 7
      %v2568 = vsub.s32 0, %v2567
      %v2569 = vrot.slane %v2527, %v2568
      %v2570 = vlaneseq
      %v2571 = vshrl.u32 %v2570, 7
      %v2572 = vsub.s32 0, %v2571
      %v2573 = vrot.slane %v2528, %v2572
      %v2574 = vlaneseq
      %v2575 = vshrl.u32 %v2574, 7
      %v2576 = vsub.s32 0, %v2575
      %v2577 = vrot.slane %v2529, %v2576
      %v2578 = vlaneseq
      %v2579 = vshrl.u32 %v2578, 7
      %v2580 = vsub.s32 0, %v2579
      %v2581 = vrot.slane %v2530, %v2580
      %v2582 = vlaneseq
      %v2583 = vshrl.u32 %v2582, 7
      %v2584 = vsub.s32 0, %v2583
      %v2585 = vrot.slane %v2531, %v2584
      %v2586 = vlaneseq
      %v2587 = vshrl.u32 %v2586, 7
      %v2588 = vsub.s32 0, %v2587
      %v2589 = vrot.slane %v2532, %v2588
      %v2590 = vlaneseq
      %v2591 = vshrl.u32 %v2590, 7
      %v2592 = vsub.s32 0, %v2591
      %v2593 = vrot.slane %v2533, %v2592
      %2594 = vset.pattern.permute.xlu0 0
      %2595 = vperm.xlu0 %2594, %v2549
      %v2596 = vpop.permute.xlu0 %2595
      %2598 = vset.pattern.permute.xlu0 0
      %2599 = vperm.xlu0 %2598, %v2553
      %v2600 = vpop.permute.xlu0 %2599
      %2602 = vset.pattern.permute.xlu0 0
      %2603 = vperm.xlu0 %2602, %v2557
      %v2604 = vpop.permute.xlu0 %2603
      %2606 = vset.pattern.permute.xlu0 0
      %2607 = vperm.xlu0 %2606, %v2561
      %v2608 = vpop.permute.xlu0 %2607
      %2610 = vset.pattern.permute.xlu0 0
      %2611 = vperm.xlu0 %2610, %v2565
      %v2612 = vpop.permute.xlu0 %2611
      %2614 = vset.pattern.permute.xlu0 0
      %2615 = vperm.xlu0 %2614, %v2569
      %v2616 = vpop.permute.xlu0 %2615
      %2618 = vset.pattern.permute.xlu0 0
      %2619 = vperm.xlu0 %2618, %v2573
      %v2620 = vpop.permute.xlu0 %2619
      %2622 = vset.pattern.permute.xlu0 0
      %2623 = vperm.xlu0 %2622, %v2577
      %v2624 = vpop.permute.xlu0 %2623
      %2626 = vset.pattern.permute.xlu0 0
      %2627 = vperm.xlu0 %2626, %v2581
      %v2628 = vpop.permute.xlu0 %2627
      %2630 = vset.pattern.permute.xlu0 0
      %2631 = vperm.xlu0 %2630, %v2585
      %v2632 = vpop.permute.xlu0 %2631
      %2634 = vset.pattern.permute.xlu0 0
      %2635 = vperm.xlu0 %2634, %v2589
      %v2636 = vpop.permute.xlu0 %2635
      %2638 = vset.pattern.permute.xlu0 0
      %2639 = vperm.xlu0 %2638, %v2593
      %v2640 = vpop.permute.xlu0 %2639
      %v2642 = vadd.f32 %v2498, %v2596
      %v2643 = vadd.f32 %v2499, %v2596
      %v2644 = vadd.f32 %v2500, %v2600
      %v2645 = vadd.f32 %v2501, %v2600
      %v2646 = vadd.f32 %v2502, %v2604
      %v2647 = vadd.f32 %v2503, %v2604
      %v2648 = vadd.f32 %v2504, %v2608
      %v2649 = vadd.f32 %v2505, %v2608
      %v2650 = vadd.f32 %v2506, %v2612
      %v2651 = vadd.f32 %v2507, %v2612
      %v2652 = vadd.f32 %v2508, %v2616
      %v2653 = vadd.f32 %v2509, %v2616
      %v2654 = vadd.f32 %v2510, %v2620
      %v2655 = vadd.f32 %v2511, %v2620
      %v2656 = vadd.f32 %v2512, %v2624
      %v2657 = vadd.f32 %v2513, %v2624
      %v2658 = vadd.f32 %v2514, %v2628
      %v2659 = vadd.f32 %v2515, %v2628
      %v2660 = vadd.f32 %v2516, %v2632
      %v2661 = vadd.f32 %v2517, %v2632
      %v2662 = vadd.f32 %v2518, %v2636
      %v2663 = vadd.f32 %v2519, %v2636
      %v2664 = vadd.f32 %v2520, %v2640
      %v2665 = vadd.f32 %v2521, %v2640
      %vm2666 = vcmask 130048
      %2667 = vst.msk [vmem:[%s170] sm:$0xff] %vm2666, %v2642
      %2668 = vst.msk [vmem:[%s170 + $0x8] sm:$0xff] %vm2666, %v2643
      %2669 = vst.msk [vmem:[%s170 + $0x10] sm:$0xff] %vm2666, %v2644
      %2670 = vst.msk [vmem:[%s170 + $0x18] sm:$0xff] %vm2666, %v2645
      %2671 = vst.msk [vmem:[%s170 + $0x20] sm:$0xff] %vm2666, %v2646
      %2672 = vst.msk [vmem:[%s170 + $0x28] sm:$0xff] %vm2666, %v2647
      %2673 = vst.msk [vmem:[%s170 + $0x30] sm:$0xff] %vm2666, %v2648
      %2674 = vst.msk [vmem:[%s170 + $0x38] sm:$0xff] %vm2666, %v2649
      %2675 = vst.msk [vmem:[%s170 + $0x40] sm:$0xff] %vm2666, %v2650
      %2676 = vst.msk [vmem:[%s170 + $0x48] sm:$0xff] %vm2666, %v2651
      %2677 = vst.msk [vmem:[%s170 + $0x50] sm:$0xff] %vm2666, %v2652
      %2678 = vst.msk [vmem:[%s170 + $0x58] sm:$0xff] %vm2666, %v2653
      %2679 = vst.msk [vmem:[%s170 + $0x60] sm:$0xff] %vm2666, %v2654
      %2680 = vst.msk [vmem:[%s170 + $0x68] sm:$0xff] %vm2666, %v2655
      %2681 = vst.msk [vmem:[%s170 + $0x70] sm:$0xff] %vm2666, %v2656
      %2682 = vst.msk [vmem:[%s170 + $0x78] sm:$0xff] %vm2666, %v2657
      %2683 = vst.msk [vmem:[%s170 + $0x80] sm:$0xff] %vm2666, %v2658
      %2684 = vst.msk [vmem:[%s170 + $0x88] sm:$0xff] %vm2666, %v2659
      %2685 = vst.msk [vmem:[%s170 + $0x90] sm:$0xff] %vm2666, %v2660
      %2686 = vst.msk [vmem:[%s170 + $0x98] sm:$0xff] %vm2666, %v2661
      %2687 = vst.msk [vmem:[%s170 + $0xa0] sm:$0xff] %vm2666, %v2662
      %2688 = vst.msk [vmem:[%s170 + $0xa8] sm:$0xff] %vm2666, %v2663
      %2689 = vst.msk [vmem:[%s170 + $0xb0] sm:$0xff] %vm2666, %v2664
      %2690 = vst.msk [vmem:[%s170 + $0xb8] sm:$0xff] %vm2666, %v2665
      %p2691 = scmp.lt.s32.totalorder %s14, 1
      %s2692 = scalar_select %p2691, %s14, 1
      %s2693 = smul.addr %s2692, 24
      %s2694 = smul.addr %s2693, 8
      %s2695 = scalar_lea.vmem %s3, %s2694
      // Predicated region
      $region33: #{attention_forward.4} parent=31 // pred_check
        %p2696 = pneg %p100
      $region34: #{attention_forward.4} parent=31 // pred_check_branch
        %2698 = sbr.rel (%p2696) target = $region36
      $region35: #{attention_forward.4} parent=31 // pred_region
        _
      $region36: #{attention_forward.4} parent=31 // pred_fallthru
        _
    $region32: #{attention_forward.4} parent=5 // pred_fallthru
      _
    %p2699 = scmp.le.s32.totalorder 2, %s9
    // Predicated region
    $region37: #{attention_forward.4} parent=5 // pred_check
      %p2700 = pneg %p2699
    $region38: #{attention_forward.4} parent=5 // pred_check_branch
      %2702 = sbr.rel (%p2700) target = $region40
    $region39: #{attention_forward.4} parent=5 // pred_region
      %s2703 = ssub.s32 %s9, 2
      // Predicated region
      $region41: #{attention_forward.4} parent=39 // pred_check
        %p2704 = pneg %p106
      $region42: #{attention_forward.4} parent=39 // pred_check_branch
        %2706 = sbr.rel (%p2704) target = $region44
      $region43: #{attention_forward.4} parent=39 // pred_region
        %p2707 = scmp.lt.s32.totalorder %s15, 1
        %s2708 = scalar_select %p2707, %s15, 1
        %s2709 = smul.addr %s2708, 24
        %s2710 = smul.addr %s2709, 8
        %s2711 = scalar_lea.vmem %s3, %s2710
      $region44: #{attention_forward.4} parent=39 // pred_fallthru
        _
    $region40: #{attention_forward.4} parent=5 // pred_fallthru
      _
  $region6: #{attention_forward.4} parent=0 // loop_footer
    %s13 = sadd.s32 1, %s9
  $region7: #{attention_forward.4} parent=0 // loop_footer_branch
    %8 = sbr.rel target = $region3
  $region8: #{attention_forward.4} parent=0 // loop_exit
    _

</llo_original>
